<compile_context>
chip_gen: v7x
topology: tpu7x:2x2x1
jax: 0.10.0
libtpu: 0.0.40
codegen_flags: <defaults>
</compile_context>

<pallas_src>
import functools
import math

import jax
import jax.numpy as jnp
from jax.experimental import pallas as pl
from jax.experimental.pallas import tpu as pltpu


# ----------------------------- numerics helpers -----------------------------
def _layer_norm(x, g, b, eps=1e-5):
    mean = jnp.mean(x, axis=-1, keepdims=True)
    var = jnp.mean((x - mean) ** 2, axis=-1, keepdims=True)
    return (x - mean) * jax.lax.rsqrt(var + eps) * g + b


def _gelu_exact(x):
    # F.gelu default (approximate='none'): exact erf formulation.
    return 0.5 * x * (1.0 + jax.lax.erf(x * (1.0 / math.sqrt(2.0))))


# ----------------------------- tiling / VMEM helpers -----------------------------
def _choose_tile(S, max_t=512):
    """Sequence tile: prefer multiples of 256 (v6e/v7x MXU width), then 128 (v5e),
    then 16 / 8; small sequences use the full extent."""
    if S <= max_t:
        return S
    for step in (256, 128, 16, 8):
        t = (max_t // step) * step
        while t >= step:
            if S % t == 0:
                return t
            t -= step
    # TODO(synk): pad ragged S instead of falling back to one huge tile.
    return S


def _vmem_ceiling_bytes():
    cap = 128 << 20  # v5e / v6e physical VMEM
    try:
        info = pltpu.get_tpu_info()
        cap = int(getattr(info, "vmem_capacity_bytes", cap))
    except Exception:
        pass
    return int(cap * 0.85)


def _vmem_limit(est_bytes):
    return int(min(max(int(est_bytes), 16 << 20), _vmem_ceiling_bytes()))


# ----------------------------- kernel 1: LN1 + fused QKV projection -----------------------------
def qkv_project_kernel(x_ref, ln1g_ref, ln1b_ref, wqkv_ref, bqkv_ref,
                       q_ref, k_ref, v_ref, *, n_head):
    f32, bf16 = jnp.float32, jnp.bfloat16
    x = x_ref[0].astype(f32)                                   # (ts, D)
    ts, D = x.shape
    hd = D // n_head

    xn = _layer_norm(x, ln1g_ref[...], ln1b_ref[...])
    # bf16 MXU operands, f32 accumulation; wq/bq carry the 1/sqrt(hd) scale.
    qkv = jnp.dot(xn.astype(bf16), wqkv_ref[...],
                  preferred_element_type=f32) + bqkv_ref[...]  # (ts, 3D)

    def heads(t):                                              # (ts, D) -> (H, ts, hd)
        return jnp.transpose(t.reshape(ts, n_head, hd), (1, 0, 2))

    q3 = heads(qkv[:, :D]).astype(bf16)
    k3 = heads(qkv[:, D:2 * D]).astype(bf16)
    v3 = heads(qkv[:, 2 * D:]).astype(bf16)

    q_ref[0] = q3                                  # (H, ts, hd)
    k_ref[0] = jnp.transpose(k3, (0, 2, 1))        # (H, hd, ts) -- K pre-transposed
    v_ref[0] = v3                                  # (H, ts, hd)


def qkv_project(x, ln1_g, ln1_b, wqkv, bqkv, n_head):
    B, S, D = x.shape
    H, hd = n_head, D // n_head
    ts = _choose_tile(S)
    n_st = S // ts

    est = (2 * 2 * int(wqkv.size)          # bf16 weights, double-buffered
           + 2 * 4 * ts * D                # x block (f32, double-buffered)
           + 2 * 4 * ts * 3 * D            # qkv f32 + LN temporaries
           + 2 * 2 * 3 * ts * D)           # bf16 outputs, double-buffered
    cost = pl.CostEstimate(
        flops=2 * B * S * D * 3 * D,
        transcendentals=2 * B * S,                                  # LN rsqrt
        bytes_accessed=4 * B * S * D + 2 * 3 * B * S * D
                       + 2 * int(wqkv.size) + 4 * int(bqkv.size) + 8 * D)

    def const_spec(shape):
        return pl.BlockSpec(shape, lambda b, i: (0,) * len(shape))

    return pl.pallas_call(
        functools.partial(qkv_project_kernel, n_head=n_head),
        out_shape=(jax.ShapeDtypeStruct((B, H, S, hd), jnp.bfloat16),
                   jax.ShapeDtypeStruct((B, H, hd, S), jnp.bfloat16),
                   jax.ShapeDtypeStruct((B, H, S, hd), jnp.bfloat16)),
        grid=(B, n_st),
        in_specs=[pl.BlockSpec((1, ts, D), lambda b, i: (b, i, 0)),
                  const_spec(ln1_g.shape), const_spec(ln1_b.shape),
                  const_spec(wqkv.shape), const_spec(bqkv.shape)],
        out_specs=(pl.BlockSpec((1, H, ts, hd), lambda b, i: (b, 0, i, 0)),
                   pl.BlockSpec((1, H, hd, ts), lambda b, i: (b, 0, 0, i)),
                   pl.BlockSpec((1, H, ts, hd), lambda b, i: (b, 0, i, 0))),
        compiler_params=pltpu.CompilerParams(
            dimension_semantics=("parallel", "parallel"),
            vmem_limit_bytes=_vmem_limit(est)),
        cost_estimate=cost,
    )(x, ln1_g, ln1_b, wqkv, bqkv)


# ----------------------------- kernel 2: attention + out-proj + LN2 + MLP -----------------------------
def attn_mlp_kernel(x_ref, q_ref, k_ref, v_ref,
                    wo_ref, bo_ref, ln2g_ref, ln2b_ref,
                    w1_ref, b1_ref, w2_ref, b2_ref, o_ref):
    f32, bf16 = jnp.float32, jnp.bfloat16
    xq = x_ref[0].astype(f32)          # (tq, D)  residual rows
    q3 = q_ref[0]                      # (H, tq, hd) bf16, pre-scaled
    k3 = k_ref[0]                      # (H, hd, S)  bf16, pre-transposed
    v3 = v_ref[0]                      # (H, S, hd)  bf16
    tq, D = xq.shape

    # Dense attention over the full sequence (fits the validated shapes).
    # TODO(synk): K-tiled online-softmax loop for long S / v7x (see header note).
    s = jnp.einsum("hqd,hdk->hqk", q3, k3, preferred_element_type=f32)   # (H, tq, S)
    s = s - jnp.max(s, axis=-1, keepdims=True)
    p = jnp.exp(s)
    l = jnp.sum(p, axis=-1, keepdims=True)                               # (H, tq, 1)
    o3 = jnp.einsum("hqk,hkd->hqd", p.astype(bf16), v3,
                    preferred_element_type=f32)                          # (H, tq, hd)
    # Softmax normalization folded into the small (H, tq, hd) output.
    o3 = o3 * pl.reciprocal(l, approx=True)

    attn = jnp.transpose(o3, (1, 0, 2)).reshape(tq, D)                   # merge heads
    attn = jnp.dot(attn.astype(bf16), wo_ref[...],
                   preferred_element_type=f32) + bo_ref[...]
    x1 = xq + attn

    x1n = _layer_norm(x1, ln2g_ref[...], ln2b_ref[...])
    h = jnp.dot(x1n.astype(bf16), w1_ref[...],
                preferred_element_type=f32) + b1_ref[...]
    h = _gelu_exact(h)
    h = jnp.dot(h.astype(bf16), w2_ref[...],
                preferred_element_type=f32) + b2_ref[...]
    o_ref[0] = (x1 + h).astype(o_ref.dtype)


def attn_mlp(x, q_hm, k_hm, v_hm, kp, n_head):
    B, S, D = x.shape
    H, hd = n_head, D // n_head
    (wo, bo, ln2_g, ln2_b, w1, b1, w2, b2) = kp
    tq = _choose_tile(S)
    n_qt = S // tq

    weight_bytes = sum(int(p.size) * p.dtype.itemsize
                       for p in (wo, bo, ln2_g, ln2_b, w1, b1, w2, b2))
    est = (2 * weight_bytes                                   # double-buffered weights
           + 2 * (4 * tq * D + 2 * tq * D + 2 * 2 * S * D)    # x, q, K, V blocks
           + 4 * H * tq * S + 2 * H * tq * S                  # f32 scores + bf16 probs
           + 4 * (6 * tq * D + 2 * tq * 4 * D))               # residuals, LN, MLP hidden

    flops = B * n_qt * (4 * tq * S * D + 18 * tq * D * D)
    transcend = B * n_qt * (H * tq * S + 4 * tq * D)
    bytes_acc = 2 * 4 * B * S * D + 3 * 2 * B * S * D + weight_bytes
    cost = pl.CostEstimate(flops=flops, transcendentals=transcend,
                           bytes_accessed=bytes_acc)

    def const_spec(shape):
        return pl.BlockSpec(shape, lambda b, i: (0,) * len(shape))

    return pl.pallas_call(
        attn_mlp_kernel,
        out_shape=jax.ShapeDtypeStruct((B, S, D), x.dtype),
        grid=(B, n_qt),
        in_specs=[pl.BlockSpec((1, tq, D), lambda b, i: (b, i, 0)),       # residual tile
                  pl.BlockSpec((1, H, tq, hd), lambda b, i: (b, 0, i, 0)),  # Q tile
                  pl.BlockSpec((1, H, hd, S), lambda b, i: (b, 0, 0, 0)),   # K (full, const over qi)
                  pl.BlockSpec((1, H, S, hd), lambda b, i: (b, 0, 0, 0)),   # V (full, const over qi)
                  const_spec(wo.shape), const_spec(bo.shape),
                  const_spec(ln2_g.shape), const_spec(ln2_b.shape),
                  const_spec(w1.shape), const_spec(b1.shape),
                  const_spec(w2.shape), const_spec(b2.shape)],
        out_specs=pl.BlockSpec((1, tq, D), lambda b, i: (b, i, 0)),
        compiler_params=pltpu.CompilerParams(
            dimension_semantics=("parallel", "parallel"),
            vmem_limit_bytes=_vmem_limit(est)),
        cost_estimate=cost,
    )(x, q_hm, k_hm, v_hm, wo, bo, ln2_g, ln2_b, w1, b1, w2, b2)


# ----------------------------- per-block / full forward -----------------------------
def residual_attention_block(x, kparams, n_head):
    (ln1_g, ln1_b, wqkv, bqkv,
     wo, bo, ln2_g, ln2_b, w1, b1, w2, b2) = kparams
    # Stage 1: full-sequence LN1 + fused QKV projection (computed once, not per q tile).
    q_hm, k_hm, v_hm = qkv_project(x, ln1_g, ln1_b, wqkv, bqkv, n_head)
    # Stage 2: per-query-tile attention + output projection + LN2 + MLP + residuals.
    return attn_mlp(x, q_hm, k_hm, v_hm,
                    (wo, bo, ln2_g, ln2_b, w1, b1, w2, b2), n_head)


@functools.partial(jax.jit, static_argnums=(2,))
def transformer_forward(x, layer_params, n_head):
    for p in layer_params:
        x = residual_attention_block(x, p, n_head)
    return x


# ---------------- parameter init (deterministic, synthetic, PyTorch-style) ----------------
def init_layer_params(key, d_model):
    D = d_model
    ks = jax.random.split(key, 16)
    rnd = lambda k, shape, s=0.02: (s * jax.random.normal(k, shape)).astype(jnp.float32)

    ln1_g = jnp.ones((1, D), jnp.float32) + rnd(ks[0], (1, D), 0.1)
    ln1_b = rnd(ks[1], (1, D), 0.1)
    # PyTorch MHA in_proj_weight is (3D, D); split and pre-transposed to (D, D).
    wq = rnd(ks[2], (D, D));  bq = rnd(ks[3], (1, D))
    wk = rnd(ks[4], (D, D));  bk = rnd(ks[5], (1, D))
    wv = rnd(ks[6], (D, D));  bv = rnd(ks[7], (1, D))
    wo = rnd(ks[8], (D, D));  bo = rnd(ks[9], (1, D))
    ln2_g = jnp.ones((1, D), jnp.float32) + rnd(ks[10], (1, D), 0.1)
    ln2_b = rnd(ks[11], (1, D), 0.1)
    w1 = rnd(ks[12], (D, 4 * D));  b1 = rnd(ks[13], (1, 4 * D))
    w2 = rnd(ks[14], (4 * D, D)); b2 = rnd(ks[15], (1, D))

    return (ln1_g, ln1_b, wq, bq, wk, bk, wv, bv, wo, bo,
            ln2_g, ln2_b, w1, b1, w2, b2)


def prepare_layer_params(p, n_head):
    """One-time offline repack: fused (D,3D) QKV weight with the 1/sqrt(hd) query
    scale folded into wq/bq; MXU weights pre-cast to bf16; LN / biases stay f32."""
    (ln1_g, ln1_b, wq, bq, wk, bk, wv, bv, wo, bo,
     ln2_g, ln2_b, w1, b1, w2, b2) = p
    bf16 = jnp.bfloat16
    D = wq.shape[0]
    scale = 1.0 / math.sqrt(D // n_head)
    wqkv = jnp.concatenate([wq * scale, wk, wv], axis=1).astype(bf16)   # (D, 3D)
    bqkv = jnp.concatenate([bq * scale, bk, bv], axis=1)                # (1, 3D) f32
    return (ln1_g, ln1_b, wqkv, bqkv,
            wo.astype(bf16), bo,
            ln2_g, ln2_b,
            w1.astype(bf16), b1,
            w2.astype(bf16), b2)


# ---------------- pure-JAX f32 reference (matches the PyTorch module) ----------------
def reference_forward(x, layer_params, n_head):
    for (ln1_g, ln1_b, wq, bq, wk, bk, wv, bv, wo, bo,
         ln2_g, ln2_b, w1, b1, w2, b2) in layer_params:
        B, S, D = x.shape
        hd = D // n_head
        xn = _layer_norm(x, ln1_g, ln1_b)
        q = xn @ wq + bq
        k = xn @ wk + bk
        v = xn @ wv + bv
        q = q.reshape(B, S, n_head, hd).transpose(0, 2, 1, 3) / math.sqrt(hd)
        k = k.reshape(B, S, n_head, hd).transpose(0, 2, 1, 3)
        v = v.reshape(B, S, n_head, hd).transpose(0, 2, 1, 3)
        s = jnp.einsum("bhqd,bhkd->bhqk", q, k)
        p = jax.nn.softmax(s, axis=-1)
        a = jnp.einsum("bhqk,bhkd->bhqd", p, v).transpose(0, 2, 1, 3).reshape(B, S, D)
        x = x + (a @ wo + bo)
        xn = _layer_norm(x, ln2_g, ln2_b)
        h = _gelu_exact(xn @ w1 + b1)
        x = x + (h @ w2 + b2)
    return x


if __name__ == "__main__":
    layers, width, heads = 2, 32, 4
    B, S = 2, 8

    key = jax.random.PRNGKey(0)
    kx, kp = jax.random.split(key)
    x = jax.random.normal(kx, (B, S, width), dtype=jnp.float32)

    layer_keys = jax.random.split(kp, layers)
    torch_style = [init_layer_params(k, width) for k in layer_keys]
    kernel_params = [prepare_layer_params(p, heads) for p in torch_style]

    out = transformer_forward(x, kernel_params, heads)
    out = jax.block_until_ready(out)

    ref = reference_forward(x, torch_style, heads)
    assert out.shape == (B, S, width)
    max_err = float(jnp.max(jnp.abs(out - ref)))
    # bf16 MXU operands + approx reciprocal -> relaxed tolerance vs. f32 reference.
    assert jnp.allclose(out, ref, rtol=1e-2, atol=1e-2), f"mismatch vs reference (max err {max_err})"

    print("KERNEL_OK")
</pallas_src>

<mosaic_0001>
module attributes {stable_mosaic.version = 11 : i64} {
  func.func @qkv_project_kernel(%arg0: i32, %arg1: i32, %arg2: memref<1x8x32xf32, #tpu.memory_space<vmem>>, %arg3: memref<1x32xf32, #tpu.memory_space<vmem>>, %arg4: memref<1x32xf32, #tpu.memory_space<vmem>>, %arg5: memref<32x96xbf16, #tpu.memory_space<vmem>>, %arg6: memref<1x96xf32, #tpu.memory_space<vmem>>, %arg7: memref<1x4x8x8xbf16, #tpu.memory_space<vmem>>, %arg8: memref<1x4x8x8xbf16, #tpu.memory_space<vmem>>, %arg9: memref<1x4x8x8xbf16, #tpu.memory_space<vmem>>) attributes {dimension_semantics = [#tpu.dimension_semantics<parallel>, #tpu.dimension_semantics<parallel>], iteration_bounds = array<i64: 2, 1>, scalar_prefetch = 0 : i64, scratch_operands = 0 : i64, tpu.core_type = #tpu.core_type<tc>, window_params = [{transform_indices = @transform_0, window_bounds = array<i64: 1, 8, 32>}, {pipeline_mode = #tpu.pipeline_mode<synchronous>, transform_indices = @transform_1, window_bounds = array<i64: 1, 32>}, {pipeline_mode = #tpu.pipeline_mode<synchronous>, transform_indices = @transform_2, window_bounds = array<i64: 1, 32>}, {pipeline_mode = #tpu.pipeline_mode<synchronous>, transform_indices = @transform_3, window_bounds = array<i64: 32, 96>}, {pipeline_mode = #tpu.pipeline_mode<synchronous>, transform_indices = @transform_4, window_bounds = array<i64: 1, 96>}, {transform_indices = @transform_5, window_bounds = array<i64: 1, 4, 8, 8>}, {transform_indices = @transform_6, window_bounds = array<i64: 1, 4, 8, 8>}, {transform_indices = @transform_7, window_bounds = array<i64: 1, 4, 8, 8>}]} {
    %c0 = arith.constant 0 : index
    %c0_0 = arith.constant 0 : index
    %c0_1 = arith.constant 0 : index
    %0 = vector.load %arg2[%c0, %c0_0, %c0_1] : memref<1x8x32xf32, #tpu.memory_space<vmem>>, vector<1x8x32xf32>
    %1 = vector.shape_cast %0 : vector<1x8x32xf32> to vector<8x32xf32>
    %c0_2 = arith.constant 0 : index
    %c0_3 = arith.constant 0 : index
    %2 = vector.load %arg3[%c0_2, %c0_3] : memref<1x32xf32, #tpu.memory_space<vmem>>, vector<1x32xf32>
    %c0_4 = arith.constant 0 : index
    %c0_5 = arith.constant 0 : index
    %3 = vector.load %arg4[%c0_4, %c0_5] : memref<1x32xf32, #tpu.memory_space<vmem>>, vector<1x32xf32>
    %cst = arith.constant dense<0.000000e+00> : vector<8xf32>
    %4 = vector.multi_reduction <add>, %1, %cst [1] : vector<8x32xf32> to vector<8xf32>
    %5 = vector.shape_cast %4 : vector<8xf32> to vector<8x1xf32>
    %cst_6 = arith.constant 3.200000e+01 : f32
    %6 = vector.broadcast %cst_6 : f32 to vector<8x1xf32>
    %7 = arith.divf %5, %6 : vector<8x1xf32>
    %8 = vector.broadcast %7 : vector<8x1xf32> to vector<8x32xf32>
    %9 = arith.subf %1, %8 : vector<8x32xf32>
    %10 = arith.mulf %9, %9 : vector<8x32xf32>
    %cst_7 = arith.constant dense<0.000000e+00> : vector<8xf32>
    %11 = vector.multi_reduction <add>, %10, %cst_7 [1] : vector<8x32xf32> to vector<8xf32>
    %12 = vector.shape_cast %11 : vector<8xf32> to vector<8x1xf32>
    %cst_8 = arith.constant 3.200000e+01 : f32
    %13 = vector.broadcast %cst_8 : f32 to vector<8x1xf32>
    %14 = arith.divf %12, %13 : vector<8x1xf32>
    %15 = vector.broadcast %7 : vector<8x1xf32> to vector<8x32xf32>
    %16 = arith.subf %1, %15 : vector<8x32xf32>
    %cst_9 = arith.constant 9.99999974E-6 : f32
    %17 = vector.broadcast %cst_9 : f32 to vector<8x1xf32>
    %18 = arith.addf %14, %17 : vector<8x1xf32>
    %19 = math.rsqrt %18 : vector<8x1xf32>
    %20 = vector.broadcast %19 : vector<8x1xf32> to vector<8x32xf32>
    %21 = arith.mulf %16, %20 : vector<8x32xf32>
    %22 = vector.broadcast %2 : vector<1x32xf32> to vector<8x32xf32>
    %23 = arith.mulf %21, %22 : vector<8x32xf32>
    %24 = vector.broadcast %3 : vector<1x32xf32> to vector<8x32xf32>
    %25 = arith.addf %23, %24 : vector<8x32xf32>
    %26 = arith.truncf %25 : vector<8x32xf32> to vector<8x32xbf16>
    %c0_10 = arith.constant 0 : index
    %c0_11 = arith.constant 0 : index
    %27 = vector.load %arg5[%c0_10, %c0_11] : memref<32x96xbf16, #tpu.memory_space<vmem>>, vector<32x96xbf16>
    %cst_12 = arith.constant dense<0.000000e+00> : vector<8x96xf32>
    %28 = tpu.matmul %26, %27, %cst_12 {dimension_numbers = #tpu.dot_dimension_numbers<[1], [0], [0], [1], [0, 0, 1, 1], [], []>} : vector<8x32xbf16>, vector<32x96xbf16>, vector<8x96xf32> -> vector<8x96xf32>
    %c0_13 = arith.constant 0 : index
    %c0_14 = arith.constant 0 : index
    %29 = vector.load %arg6[%c0_13, %c0_14] : memref<1x96xf32, #tpu.memory_space<vmem>>, vector<1x96xf32>
    %30 = vector.broadcast %29 : vector<1x96xf32> to vector<8x96xf32>
    %31 = arith.addf %28, %30 : vector<8x96xf32>
    %32 = vector.extract_strided_slice %31 {offsets = [0, 0], sizes = [8, 32], strides = [1, 1]} : vector<8x96xf32> to vector<8x32xf32>
    %33 = vector.shape_cast %32 : vector<8x32xf32> to vector<8x4x8xf32>
    %34 = tpu.transpose %33, [1, 0, 2] : vector<8x4x8xf32> -> vector<4x8x8xf32>
    %35 = arith.truncf %34 : vector<4x8x8xf32> to vector<4x8x8xbf16>
    %36 = vector.extract_strided_slice %31 {offsets = [0, 32], sizes = [8, 32], strides = [1, 1]} : vector<8x96xf32> to vector<8x32xf32>
    %37 = vector.shape_cast %36 : vector<8x32xf32> to vector<8x4x8xf32>
    %38 = tpu.transpose %37, [1, 0, 2] : vector<8x4x8xf32> -> vector<4x8x8xf32>
    %39 = arith.truncf %38 : vector<4x8x8xf32> to vector<4x8x8xbf16>
    %40 = vector.extract_strided_slice %31 {offsets = [0, 64], sizes = [8, 32], strides = [1, 1]} : vector<8x96xf32> to vector<8x32xf32>
    %41 = vector.shape_cast %40 : vector<8x32xf32> to vector<8x4x8xf32>
    %42 = tpu.transpose %41, [1, 0, 2] : vector<8x4x8xf32> -> vector<4x8x8xf32>
    %43 = arith.truncf %42 : vector<4x8x8xf32> to vector<4x8x8xbf16>
    %c0_15 = arith.constant 0 : index
    %c0_16 = arith.constant 0 : index
    %c0_17 = arith.constant 0 : index
    %c0_18 = arith.constant 0 : index
    %44 = vector.load %arg7[%c0_15, %c0_16, %c0_17, %c0_18] : memref<1x4x8x8xbf16, #tpu.memory_space<vmem>>, vector<1x4x8x8xbf16>
    %45 = vector.shape_cast %44 : vector<1x4x8x8xbf16> to vector<4x8x8xbf16>
    %46 = vector.shape_cast %35 : vector<4x8x8xbf16> to vector<1x4x8x8xbf16>
    tpu.vector_store %arg7[%c0_15, %c0_16, %c0_17, %c0_18], %46 {strides = array<i32>} : memref<1x4x8x8xbf16, #tpu.memory_space<vmem>>, vector<1x4x8x8xbf16>,
    %47 = tpu.transpose %39, [0, 2, 1] : vector<4x8x8xbf16> -> vector<4x8x8xbf16>
    %c0_19 = arith.constant 0 : index
    %c0_20 = arith.constant 0 : index
    %c0_21 = arith.constant 0 : index
    %c0_22 = arith.constant 0 : index
    %48 = vector.load %arg8[%c0_19, %c0_20, %c0_21, %c0_22] : memref<1x4x8x8xbf16, #tpu.memory_space<vmem>>, vector<1x4x8x8xbf16>
    %49 = vector.shape_cast %48 : vector<1x4x8x8xbf16> to vector<4x8x8xbf16>
    %50 = vector.shape_cast %47 : vector<4x8x8xbf16> to vector<1x4x8x8xbf16>
    tpu.vector_store %arg8[%c0_19, %c0_20, %c0_21, %c0_22], %50 {strides = array<i32>} : memref<1x4x8x8xbf16, #tpu.memory_space<vmem>>, vector<1x4x8x8xbf16>,
    %c0_23 = arith.constant 0 : index
    %c0_24 = arith.constant 0 : index
    %c0_25 = arith.constant 0 : index
    %c0_26 = arith.constant 0 : index
    %51 = vector.load %arg9[%c0_23, %c0_24, %c0_25, %c0_26] : memref<1x4x8x8xbf16, #tpu.memory_space<vmem>>, vector<1x4x8x8xbf16>
    %52 = vector.shape_cast %51 : vector<1x4x8x8xbf16> to vector<4x8x8xbf16>
    %53 = vector.shape_cast %43 : vector<4x8x8xbf16> to vector<1x4x8x8xbf16>
    tpu.vector_store %arg9[%c0_23, %c0_24, %c0_25, %c0_26], %53 {strides = array<i32>} : memref<1x4x8x8xbf16, #tpu.memory_space<vmem>>, vector<1x4x8x8xbf16>,
    return
  }
  func.func @transform_0(%arg0: i32, %arg1: i32) -> (i32, i32, i32) {
    %c0_i32 = arith.constant 0 : i32
    %c0_i32_0 = arith.constant 0 : i32
    return %arg0, %arg1, %c0_i32 : i32, i32, i32
  }
  func.func @transform_1(%arg0: i32, %arg1: i32) -> (i32, i32) {
    %c0_i32 = arith.constant 0 : i32
    %c0_i32_0 = arith.constant 0 : i32
    %c0_i32_1 = arith.constant 0 : i32
    return %c0_i32, %c0_i32_0 : i32, i32
  }
  func.func @transform_2(%arg0: i32, %arg1: i32) -> (i32, i32) {
    %c0_i32 = arith.constant 0 : i32
    %c0_i32_0 = arith.constant 0 : i32
    %c0_i32_1 = arith.constant 0 : i32
    return %c0_i32, %c0_i32_0 : i32, i32
  }
  func.func @transform_3(%arg0: i32, %arg1: i32) -> (i32, i32) {
    %c0_i32 = arith.constant 0 : i32
    %c0_i32_0 = arith.constant 0 : i32
    %c0_i32_1 = arith.constant 0 : i32
    return %c0_i32, %c0_i32_0 : i32, i32
  }
  func.func @transform_4(%arg0: i32, %arg1: i32) -> (i32, i32) {
    %c0_i32 = arith.constant 0 : i32
    %c0_i32_0 = arith.constant 0 : i32
    %c0_i32_1 = arith.constant 0 : i32
    return %c0_i32, %c0_i32_0 : i32, i32
  }
  func.func @transform_5(%arg0: i32, %arg1: i32) -> (i32, i32, i32, i32) {
    %c0_i32 = arith.constant 0 : i32
    %c0_i32_0 = arith.constant 0 : i32
    %c0_i32_1 = arith.constant 0 : i32
    return %arg0, %c0_i32, %arg1, %c0_i32_0 : i32, i32, i32, i32
  }
  func.func @transform_6(%arg0: i32, %arg1: i32) -> (i32, i32, i32, i32) {
    %c0_i32 = arith.constant 0 : i32
    %c0_i32_0 = arith.constant 0 : i32
    %c0_i32_1 = arith.constant 0 : i32
    return %arg0, %c0_i32, %c0_i32_0, %arg1 : i32, i32, i32, i32
  }
  func.func @transform_7(%arg0: i32, %arg1: i32) -> (i32, i32, i32, i32) {
    %c0_i32 = arith.constant 0 : i32
    %c0_i32_0 = arith.constant 0 : i32
    %c0_i32_1 = arith.constant 0 : i32
    return %arg0, %c0_i32, %arg1, %c0_i32_0 : i32, i32, i32, i32
  }
}

module attributes {stable_mosaic.version = 11 : i64} {
  func.func @attn_mlp_kernel(%arg0: i32, %arg1: i32, %arg2: memref<1x8x32xf32, #tpu.memory_space<vmem>>, %arg3: memref<1x4x8x8xbf16, #tpu.memory_space<vmem>>, %arg4: memref<1x4x8x8xbf16, #tpu.memory_space<vmem>>, %arg5: memref<1x4x8x8xbf16, #tpu.memory_space<vmem>>, %arg6: memref<32x32xbf16, #tpu.memory_space<vmem>>, %arg7: memref<1x32xf32, #tpu.memory_space<vmem>>, %arg8: memref<1x32xf32, #tpu.memory_space<vmem>>, %arg9: memref<1x32xf32, #tpu.memory_space<vmem>>, %arg10: memref<32x128xbf16, #tpu.memory_space<vmem>>, %arg11: memref<1x128xf32, #tpu.memory_space<vmem>>, %arg12: memref<128x32xbf16, #tpu.memory_space<vmem>>, %arg13: memref<1x32xf32, #tpu.memory_space<vmem>>, %arg14: memref<1x8x32xf32, #tpu.memory_space<vmem>>) attributes {dimension_semantics = [#tpu.dimension_semantics<parallel>, #tpu.dimension_semantics<parallel>], iteration_bounds = array<i64: 2, 1>, scalar_prefetch = 0 : i64, scratch_operands = 0 : i64, tpu.core_type = #tpu.core_type<tc>, window_params = [{transform_indices = @transform_0, window_bounds = array<i64: 1, 8, 32>}, {transform_indices = @transform_1, window_bounds = array<i64: 1, 4, 8, 8>}, {transform_indices = @transform_2, window_bounds = array<i64: 1, 4, 8, 8>}, {transform_indices = @transform_3, window_bounds = array<i64: 1, 4, 8, 8>}, {pipeline_mode = #tpu.pipeline_mode<synchronous>, transform_indices = @transform_4, window_bounds = array<i64: 32, 32>}, {pipeline_mode = #tpu.pipeline_mode<synchronous>, transform_indices = @transform_5, window_bounds = array<i64: 1, 32>}, {pipeline_mode = #tpu.pipeline_mode<synchronous>, transform_indices = @transform_6, window_bounds = array<i64: 1, 32>}, {pipeline_mode = #tpu.pipeline_mode<synchronous>, transform_indices = @transform_7, window_bounds = array<i64: 1, 32>}, {pipeline_mode = #tpu.pipeline_mode<synchronous>, transform_indices = @transform_8, window_bounds = array<i64: 32, 128>}, {pipeline_mode = #tpu.pipeline_mode<synchronous>, transform_indices = @transform_9, window_bounds = array<i64: 1, 128>}, {pipeline_mode = #tpu.pipeline_mode<synchronous>, transform_indices = @transform_10, window_bounds = array<i64: 128, 32>}, {pipeline_mode = #tpu.pipeline_mode<synchronous>, transform_indices = @transform_11, window_bounds = array<i64: 1, 32>}, {transform_indices = @transform_12, window_bounds = array<i64: 1, 8, 32>}]} {
    %c0 = arith.constant 0 : index
    %c0_0 = arith.constant 0 : index
    %c0_1 = arith.constant 0 : index
    %0 = vector.load %arg2[%c0, %c0_0, %c0_1] : memref<1x8x32xf32, #tpu.memory_space<vmem>>, vector<1x8x32xf32>
    %1 = vector.shape_cast %0 : vector<1x8x32xf32> to vector<8x32xf32>
    %c0_2 = arith.constant 0 : index
    %c0_3 = arith.constant 0 : index
    %c0_4 = arith.constant 0 : index
    %c0_5 = arith.constant 0 : index
    %2 = vector.load %arg3[%c0_2, %c0_3, %c0_4, %c0_5] : memref<1x4x8x8xbf16, #tpu.memory_space<vmem>>, vector<1x4x8x8xbf16>
    %3 = vector.shape_cast %2 : vector<1x4x8x8xbf16> to vector<4x8x8xbf16>
    %c0_6 = arith.constant 0 : index
    %c0_7 = arith.constant 0 : index
    %c0_8 = arith.constant 0 : index
    %c0_9 = arith.constant 0 : index
    %4 = vector.load %arg4[%c0_6, %c0_7, %c0_8, %c0_9] : memref<1x4x8x8xbf16, #tpu.memory_space<vmem>>, vector<1x4x8x8xbf16>
    %5 = vector.shape_cast %4 : vector<1x4x8x8xbf16> to vector<4x8x8xbf16>
    %c0_10 = arith.constant 0 : index
    %c0_11 = arith.constant 0 : index
    %c0_12 = arith.constant 0 : index
    %c0_13 = arith.constant 0 : index
    %6 = vector.load %arg5[%c0_10, %c0_11, %c0_12, %c0_13] : memref<1x4x8x8xbf16, #tpu.memory_space<vmem>>, vector<1x4x8x8xbf16>
    %7 = vector.shape_cast %6 : vector<1x4x8x8xbf16> to vector<4x8x8xbf16>
    "tpu.trace_start"() <{level = 10 : i32, message = "hqd,hdk->hqk"}> : () -> ()
    %cst = arith.constant dense<0.000000e+00> : vector<4x8x8xf32>
    %8 = tpu.matmul %3, %5, %cst {dimension_numbers = #tpu.dot_dimension_numbers<[2], [1], [1], [2], [0, 0, 0, 1, 1, 2], [0], [0]>} : vector<4x8x8xbf16>, vector<4x8x8xbf16>, vector<4x8x8xf32> -> vector<4x8x8xf32>
    "tpu.trace_stop"() : () -> ()
    %cst_14 = arith.constant dense<0xFF800000> : vector<4x8xf32>
    %9 = vector.multi_reduction <maximumf>, %8, %cst_14 [2] : vector<4x8x8xf32> to vector<4x8xf32>
    %10 = vector.shape_cast %9 : vector<4x8xf32> to vector<4x8x1xf32>
    %11 = vector.broadcast %10 : vector<4x8x1xf32> to vector<4x8x8xf32>
    %12 = arith.subf %8, %11 : vector<4x8x8xf32>
    %13 = math.exp %12 : vector<4x8x8xf32>
    %cst_15 = arith.constant dense<0.000000e+00> : vector<4x8xf32>
    %14 = vector.multi_reduction <add>, %13, %cst_15 [2] : vector<4x8x8xf32> to vector<4x8xf32>
    %15 = vector.shape_cast %14 : vector<4x8xf32> to vector<4x8x1xf32>
    %16 = arith.truncf %13 : vector<4x8x8xf32> to vector<4x8x8xbf16>
    "tpu.trace_start"() <{level = 10 : i32, message = "hqk,hkd->hqd"}> : () -> ()
    %cst_16 = arith.constant dense<0.000000e+00> : vector<4x8x8xf32>
    %17 = tpu.matmul %16, %7, %cst_16 {dimension_numbers = #tpu.dot_dimension_numbers<[2], [1], [1], [2], [0, 0, 0, 1, 1, 2], [0], [0]>} : vector<4x8x8xbf16>, vector<4x8x8xbf16>, vector<4x8x8xf32> -> vector<4x8x8xf32>
    "tpu.trace_stop"() : () -> ()
    %18 = tpu.reciprocal %15 {approx = true} : vector<4x8x1xf32> -> vector<4x8x1xf32>
    %19 = vector.broadcast %18 : vector<4x8x1xf32> to vector<4x8x8xf32>
    %20 = arith.mulf %17, %19 : vector<4x8x8xf32>
    %21 = tpu.transpose %20, [1, 0, 2] : vector<4x8x8xf32> -> vector<8x4x8xf32>
    %22 = vector.shape_cast %21 : vector<8x4x8xf32> to vector<8x32xf32>
    %23 = arith.truncf %22 : vector<8x32xf32> to vector<8x32xbf16>
    %c0_17 = arith.constant 0 : index
    %c0_18 = arith.constant 0 : index
    %24 = vector.load %arg6[%c0_17, %c0_18] : memref<32x32xbf16, #tpu.memory_space<vmem>>, vector<32x32xbf16>
    %cst_19 = arith.constant dense<0.000000e+00> : vector<8x32xf32>
    %25 = tpu.matmul %23, %24, %cst_19 {dimension_numbers = #tpu.dot_dimension_numbers<[1], [0], [0], [1], [0, 0, 1, 1], [], []>} : vector<8x32xbf16>, vector<32x32xbf16>, vector<8x32xf32> -> vector<8x32xf32>
    %c0_20 = arith.constant 0 : index
    %c0_21 = arith.constant 0 : index
    %26 = vector.load %arg7[%c0_20, %c0_21] : memref<1x32xf32, #tpu.memory_space<vmem>>, vector<1x32xf32>
    %27 = vector.broadcast %26 : vector<1x32xf32> to vector<8x32xf32>
    %28 = arith.addf %25, %27 : vector<8x32xf32>
    %29 = arith.addf %1, %28 : vector<8x32xf32>
    %c0_22 = arith.constant 0 : index
    %c0_23 = arith.constant 0 : index
    %30 = vector.load %arg8[%c0_22, %c0_23] : memref<1x32xf32, #tpu.memory_space<vmem>>, vector<1x32xf32>
    %c0_24 = arith.constant 0 : index
    %c0_25 = arith.constant 0 : index
    %31 = vector.load %arg9[%c0_24, %c0_25] : memref<1x32xf32, #tpu.memory_space<vmem>>, vector<1x32xf32>
    %cst_26 = arith.constant dense<0.000000e+00> : vector<8xf32>
    %32 = vector.multi_reduction <add>, %29, %cst_26 [1] : vector<8x32xf32> to vector<8xf32>
    %33 = vector.shape_cast %32 : vector<8xf32> to vector<8x1xf32>
    %cst_27 = arith.constant 3.200000e+01 : f32
    %34 = vector.broadcast %cst_27 : f32 to vector<8x1xf32>
    %35 = arith.divf %33, %34 : vector<8x1xf32>
    %36 = vector.broadcast %35 : vector<8x1xf32> to vector<8x32xf32>
    %37 = arith.subf %29, %36 : vector<8x32xf32>
    %38 = arith.mulf %37, %37 : vector<8x32xf32>
    %cst_28 = arith.constant dense<0.000000e+00> : vector<8xf32>
    %39 = vector.multi_reduction <add>, %38, %cst_28 [1] : vector<8x32xf32> to vector<8xf32>
    %40 = vector.shape_cast %39 : vector<8xf32> to vector<8x1xf32>
    %cst_29 = arith.constant 3.200000e+01 : f32
    %41 = vector.broadcast %cst_29 : f32 to vector<8x1xf32>
    %42 = arith.divf %40, %41 : vector<8x1xf32>
    %43 = vector.broadcast %35 : vector<8x1xf32> to vector<8x32xf32>
    %44 = arith.subf %29, %43 : vector<8x32xf32>
    %cst_30 = arith.constant 9.99999974E-6 : f32
    %45 = vector.broadcast %cst_30 : f32 to vector<8x1xf32>
    %46 = arith.addf %42, %45 : vector<8x1xf32>
    %47 = math.rsqrt %46 : vector<8x1xf32>
    %48 = vector.broadcast %47 : vector<8x1xf32> to vector<8x32xf32>
    %49 = arith.mulf %44, %48 : vector<8x32xf32>
    %50 = vector.broadcast %30 : vector<1x32xf32> to vector<8x32xf32>
    %51 = arith.mulf %49, %50 : vector<8x32xf32>
    %52 = vector.broadcast %31 : vector<1x32xf32> to vector<8x32xf32>
    %53 = arith.addf %51, %52 : vector<8x32xf32>
    %54 = arith.truncf %53 : vector<8x32xf32> to vector<8x32xbf16>
    %c0_31 = arith.constant 0 : index
    %c0_32 = arith.constant 0 : index
    %55 = vector.load %arg10[%c0_31, %c0_32] : memref<32x128xbf16, #tpu.memory_space<vmem>>, vector<32x128xbf16>
    %cst_33 = arith.constant dense<0.000000e+00> : vector<8x128xf32>
    %56 = tpu.matmul %54, %55, %cst_33 {dimension_numbers = #tpu.dot_dimension_numbers<[1], [0], [0], [1], [0, 0, 1, 1], [], []>} : vector<8x32xbf16>, vector<32x128xbf16>, vector<8x128xf32> -> vector<8x128xf32>
    %c0_34 = arith.constant 0 : index
    %c0_35 = arith.constant 0 : index
    %57 = vector.load %arg11[%c0_34, %c0_35] : memref<1x128xf32, #tpu.memory_space<vmem>>, vector<1x128xf32>
    %58 = vector.broadcast %57 : vector<1x128xf32> to vector<8x128xf32>
    %59 = arith.addf %56, %58 : vector<8x128xf32>
    %cst_36 = arith.constant 5.000000e-01 : f32
    %60 = vector.broadcast %cst_36 : f32 to vector<8x128xf32>
    %61 = arith.mulf %60, %59 : vector<8x128xf32>
    %cst_37 = arith.constant 0.707106769 : f32
    %62 = vector.broadcast %cst_37 : f32 to vector<8x128xf32>
    %63 = arith.mulf %59, %62 : vector<8x128xf32>
    %64 = math.erf %63 : vector<8x128xf32>
    %cst_38 = arith.constant 1.000000e+00 : f32
    %65 = vector.broadcast %cst_38 : f32 to vector<8x128xf32>
    %66 = arith.addf %65, %64 : vector<8x128xf32>
    %67 = arith.mulf %61, %66 : vector<8x128xf32>
    %68 = arith.truncf %67 : vector<8x128xf32> to vector<8x128xbf16>
    %c0_39 = arith.constant 0 : index
    %c0_40 = arith.constant 0 : index
    %69 = vector.load %arg12[%c0_39, %c0_40] : memref<128x32xbf16, #tpu.memory_space<vmem>>, vector<128x32xbf16>
    %cst_41 = arith.constant dense<0.000000e+00> : vector<8x32xf32>
    %70 = tpu.matmul %68, %69, %cst_41 {dimension_numbers = #tpu.dot_dimension_numbers<[1], [0], [0], [1], [0, 0, 1, 1], [], []>} : vector<8x128xbf16>, vector<128x32xbf16>, vector<8x32xf32> -> vector<8x32xf32>
    %c0_42 = arith.constant 0 : index
    %c0_43 = arith.constant 0 : index
    %71 = vector.load %arg13[%c0_42, %c0_43] : memref<1x32xf32, #tpu.memory_space<vmem>>, vector<1x32xf32>
    %72 = vector.broadcast %71 : vector<1x32xf32> to vector<8x32xf32>
    %73 = arith.addf %70, %72 : vector<8x32xf32>
    %74 = arith.addf %29, %73 : vector<8x32xf32>
    %c0_44 = arith.constant 0 : index
    %c0_45 = arith.constant 0 : index
    %c0_46 = arith.constant 0 : index
    %75 = vector.load %arg14[%c0_44, %c0_45, %c0_46] : memref<1x8x32xf32, #tpu.memory_space<vmem>>, vector<1x8x32xf32>
    %76 = vector.shape_cast %75 : vector<1x8x32xf32> to vector<8x32xf32>
    %77 = vector.shape_cast %74 : vector<8x32xf32> to vector<1x8x32xf32>
    tpu.vector_store %arg14[%c0_44, %c0_45, %c0_46], %77 {strides = array<i32>} : memref<1x8x32xf32, #tpu.memory_space<vmem>>, vector<1x8x32xf32>,
    return
  }
  func.func @transform_0(%arg0: i32, %arg1: i32) -> (i32, i32, i32) {
    %c0_i32 = arith.constant 0 : i32
    %c0_i32_0 = arith.constant 0 : i32
    return %arg0, %arg1, %c0_i32 : i32, i32, i32
  }
  func.func @transform_1(%arg0: i32, %arg1: i32) -> (i32, i32, i32, i32) {
    %c0_i32 = arith.constant 0 : i32
    %c0_i32_0 = arith.constant 0 : i32
    %c0_i32_1 = arith.constant 0 : i32
    return %arg0, %c0_i32, %arg1, %c0_i32_0 : i32, i32, i32, i32
  }
  func.func @transform_2(%arg0: i32, %arg1: i32) -> (i32, i32, i32, i32) {
    %c0_i32 = arith.constant 0 : i32
    %c0_i32_0 = arith.constant 0 : i32
    %c0_i32_1 = arith.constant 0 : i32
    %c0_i32_2 = arith.constant 0 : i32
    return %arg0, %c0_i32, %c0_i32_0, %c0_i32_1 : i32, i32, i32, i32
  }
  func.func @transform_3(%arg0: i32, %arg1: i32) -> (i32, i32, i32, i32) {
    %c0_i32 = arith.constant 0 : i32
    %c0_i32_0 = arith.constant 0 : i32
    %c0_i32_1 = arith.constant 0 : i32
    %c0_i32_2 = arith.constant 0 : i32
    return %arg0, %c0_i32, %c0_i32_0, %c0_i32_1 : i32, i32, i32, i32
  }
  func.func @transform_4(%arg0: i32, %arg1: i32) -> (i32, i32) {
    %c0_i32 = arith.constant 0 : i32
    %c0_i32_0 = arith.constant 0 : i32
    %c0_i32_1 = arith.constant 0 : i32
    return %c0_i32, %c0_i32_0 : i32, i32
  }
  func.func @transform_5(%arg0: i32, %arg1: i32) -> (i32, i32) {
    %c0_i32 = arith.constant 0 : i32
    %c0_i32_0 = arith.constant 0 : i32
    %c0_i32_1 = arith.constant 0 : i32
    return %c0_i32, %c0_i32_0 : i32, i32
  }
  func.func @transform_6(%arg0: i32, %arg1: i32) -> (i32, i32) {
    %c0_i32 = arith.constant 0 : i32
    %c0_i32_0 = arith.constant 0 : i32
    %c0_i32_1 = arith.constant 0 : i32
    return %c0_i32, %c0_i32_0 : i32, i32
  }
  func.func @transform_7(%arg0: i32, %arg1: i32) -> (i32, i32) {
    %c0_i32 = arith.constant 0 : i32
    %c0_i32_0 = arith.constant 0 : i32
    %c0_i32_1 = arith.constant 0 : i32
    return %c0_i32, %c0_i32_0 : i32, i32
  }
  func.func @transform_8(%arg0: i32, %arg1: i32) -> (i32, i32) {
    %c0_i32 = arith.constant 0 : i32
    %c0_i32_0 = arith.constant 0 : i32
    %c0_i32_1 = arith.constant 0 : i32
    return %c0_i32, %c0_i32_0 : i32, i32
  }
  func.func @transform_9(%arg0: i32, %arg1: i32) -> (i32, i32) {
    %c0_i32 = arith.constant 0 : i32
    %c0_i32_0 = arith.constant 0 : i32
    %c0_i32_1 = arith.constant 0 : i32
    return %c0_i32, %c0_i32_0 : i32, i32
  }
  func.func @transform_10(%arg0: i32, %arg1: i32) -> (i32, i32) {
    %c0_i32 = arith.constant 0 : i32
    %c0_i32_0 = arith.constant 0 : i32
    %c0_i32_1 = arith.constant 0 : i32
    return %c0_i32, %c0_i32_0 : i32, i32
  }
  func.func @transform_11(%arg0: i32, %arg1: i32) -> (i32, i32) {
    %c0_i32 = arith.constant 0 : i32
    %c0_i32_0 = arith.constant 0 : i32
    %c0_i32_1 = arith.constant 0 : i32
    return %c0_i32, %c0_i32_0 : i32, i32
  }
  func.func @transform_12(%arg0: i32, %arg1: i32) -> (i32, i32, i32) {
    %c0_i32 = arith.constant 0 : i32
    %c0_i32_0 = arith.constant 0 : i32
    return %arg0, %arg1, %c0_i32 : i32, i32, i32
  }
}

module attributes {stable_mosaic.version = 11 : i64} {
  func.func @attn_mlp_kernel(%arg0: i32, %arg1: i32, %arg2: memref<1x8x32xf32, #tpu.memory_space<vmem>>, %arg3: memref<1x4x8x8xbf16, #tpu.memory_space<vmem>>, %arg4: memref<1x4x8x8xbf16, #tpu.memory_space<vmem>>, %arg5: memref<1x4x8x8xbf16, #tpu.memory_space<vmem>>, %arg6: memref<32x32xbf16, #tpu.memory_space<vmem>>, %arg7: memref<1x32xf32, #tpu.memory_space<vmem>>, %arg8: memref<1x32xf32, #tpu.memory_space<vmem>>, %arg9: memref<1x32xf32, #tpu.memory_space<vmem>>, %arg10: memref<32x128xbf16, #tpu.memory_space<vmem>>, %arg11: memref<1x128xf32, #tpu.memory_space<vmem>>, %arg12: memref<128x32xbf16, #tpu.memory_space<vmem>>, %arg13: memref<1x32xf32, #tpu.memory_space<vmem>>, %arg14: memref<1x8x32xf32, #tpu.memory_space<vmem>>) attributes {dimension_semantics = [#tpu.dimension_semantics<parallel>, #tpu.dimension_semantics<parallel>], iteration_bounds = array<i64: 2, 1>, scalar_prefetch = 0 : i64, scratch_operands = 0 : i64, tpu.core_type = #tpu.core_type<tc>, window_params = [{transform_indices = @transform_0, window_bounds = array<i64: 1, 8, 32>}, {transform_indices = @transform_1, window_bounds = array<i64: 1, 4, 8, 8>}, {transform_indices = @transform_2, window_bounds = array<i64: 1, 4, 8, 8>}, {transform_indices = @transform_3, window_bounds = array<i64: 1, 4, 8, 8>}, {pipeline_mode = #tpu.pipeline_mode<synchronous>, transform_indices = @transform_4, window_bounds = array<i64: 32, 32>}, {pipeline_mode = #tpu.pipeline_mode<synchronous>, transform_indices = @transform_5, window_bounds = array<i64: 1, 32>}, {pipeline_mode = #tpu.pipeline_mode<synchronous>, transform_indices = @transform_6, window_bounds = array<i64: 1, 32>}, {pipeline_mode = #tpu.pipeline_mode<synchronous>, transform_indices = @transform_7, window_bounds = array<i64: 1, 32>}, {pipeline_mode = #tpu.pipeline_mode<synchronous>, transform_indices = @transform_8, window_bounds = array<i64: 32, 128>}, {pipeline_mode = #tpu.pipeline_mode<synchronous>, transform_indices = @transform_9, window_bounds = array<i64: 1, 128>}, {pipeline_mode = #tpu.pipeline_mode<synchronous>, transform_indices = @transform_10, window_bounds = array<i64: 128, 32>}, {pipeline_mode = #tpu.pipeline_mode<synchronous>, transform_indices = @transform_11, window_bounds = array<i64: 1, 32>}, {transform_indices = @transform_12, window_bounds = array<i64: 1, 8, 32>}]} {
    %c0 = arith.constant 0 : index
    %c0_0 = arith.constant 0 : index
    %c0_1 = arith.constant 0 : index
    %0 = vector.load %arg2[%c0, %c0_0, %c0_1] : memref<1x8x32xf32, #tpu.memory_space<vmem>>, vector<1x8x32xf32>
    %1 = vector.shape_cast %0 : vector<1x8x32xf32> to vector<8x32xf32>
    %c0_2 = arith.constant 0 : index
    %c0_3 = arith.constant 0 : index
    %c0_4 = arith.constant 0 : index
    %c0_5 = arith.constant 0 : index
    %2 = vector.load %arg3[%c0_2, %c0_3, %c0_4, %c0_5] : memref<1x4x8x8xbf16, #tpu.memory_space<vmem>>, vector<1x4x8x8xbf16>
    %3 = vector.shape_cast %2 : vector<1x4x8x8xbf16> to vector<4x8x8xbf16>
    %c0_6 = arith.constant 0 : index
    %c0_7 = arith.constant 0 : index
    %c0_8 = arith.constant 0 : index
    %c0_9 = arith.constant 0 : index
    %4 = vector.load %arg4[%c0_6, %c0_7, %c0_8, %c0_9] : memref<1x4x8x8xbf16, #tpu.memory_space<vmem>>, vector<1x4x8x8xbf16>
    %5 = vector.shape_cast %4 : vector<1x4x8x8xbf16> to vector<4x8x8xbf16>
    %c0_10 = arith.constant 0 : index
    %c0_11 = arith.constant 0 : index
    %c0_12 = arith.constant 0 : index
    %c0_13 = arith.constant 0 : index
    %6 = vector.load %arg5[%c0_10, %c0_11, %c0_12, %c0_13] : memref<1x4x8x8xbf16, #tpu.memory_space<vmem>>, vector<1x4x8x8xbf16>
    %7 = vector.shape_cast %6 : vector<1x4x8x8xbf16> to vector<4x8x8xbf16>
    "tpu.trace_start"() <{level = 10 : i32, message = "hqd,hdk->hqk"}> : () -> ()
    %cst = arith.constant dense<0.000000e+00> : vector<4x8x8xf32>
    %8 = tpu.matmul %3, %5, %cst {dimension_numbers = #tpu.dot_dimension_numbers<[2], [1], [1], [2], [0, 0, 0, 1, 1, 2], [0], [0]>} : vector<4x8x8xbf16>, vector<4x8x8xbf16>, vector<4x8x8xf32> -> vector<4x8x8xf32>
    "tpu.trace_stop"() : () -> ()
    %cst_14 = arith.constant dense<0xFF800000> : vector<4x8xf32>
    %9 = vector.multi_reduction <maximumf>, %8, %cst_14 [2] : vector<4x8x8xf32> to vector<4x8xf32>
    %10 = vector.shape_cast %9 : vector<4x8xf32> to vector<4x8x1xf32>
    %11 = vector.broadcast %10 : vector<4x8x1xf32> to vector<4x8x8xf32>
    %12 = arith.subf %8, %11 : vector<4x8x8xf32>
    %13 = math.exp %12 : vector<4x8x8xf32>
    %cst_15 = arith.constant dense<0.000000e+00> : vector<4x8xf32>
    %14 = vector.multi_reduction <add>, %13, %cst_15 [2] : vector<4x8x8xf32> to vector<4x8xf32>
    %15 = vector.shape_cast %14 : vector<4x8xf32> to vector<4x8x1xf32>
    %16 = arith.truncf %13 : vector<4x8x8xf32> to vector<4x8x8xbf16>
    "tpu.trace_start"() <{level = 10 : i32, message = "hqk,hkd->hqd"}> : () -> ()
    %cst_16 = arith.constant dense<0.000000e+00> : vector<4x8x8xf32>
    %17 = tpu.matmul %16, %7, %cst_16 {dimension_numbers = #tpu.dot_dimension_numbers<[2], [1], [1], [2], [0, 0, 0, 1, 1, 2], [0], [0]>} : vector<4x8x8xbf16>, vector<4x8x8xbf16>, vector<4x8x8xf32> -> vector<4x8x8xf32>
    "tpu.trace_stop"() : () -> ()
    %18 = tpu.reciprocal %15 {approx = true} : vector<4x8x1xf32> -> vector<4x8x1xf32>
    %19 = vector.broadcast %18 : vector<4x8x1xf32> to vector<4x8x8xf32>
    %20 = arith.mulf %17, %19 : vector<4x8x8xf32>
    %21 = tpu.transpose %20, [1, 0, 2] : vector<4x8x8xf32> -> vector<8x4x8xf32>
    %22 = vector.shape_cast %21 : vector<8x4x8xf32> to vector<8x32xf32>
    %23 = arith.truncf %22 : vector<8x32xf32> to vector<8x32xbf16>
    %c0_17 = arith.constant 0 : index
    %c0_18 = arith.constant 0 : index
    %24 = vector.load %arg6[%c0_17, %c0_18] : memref<32x32xbf16, #tpu.memory_space<vmem>>, vector<32x32xbf16>
    %cst_19 = arith.constant dense<0.000000e+00> : vector<8x32xf32>
    %25 = tpu.matmul %23, %24, %cst_19 {dimension_numbers = #tpu.dot_dimension_numbers<[1], [0], [0], [1], [0, 0, 1, 1], [], []>} : vector<8x32xbf16>, vector<32x32xbf16>, vector<8x32xf32> -> vector<8x32xf32>
    %c0_20 = arith.constant 0 : index
    %c0_21 = arith.constant 0 : index
    %26 = vector.load %arg7[%c0_20, %c0_21] : memref<1x32xf32, #tpu.memory_space<vmem>>, vector<1x32xf32>
    %27 = vector.broadcast %26 : vector<1x32xf32> to vector<8x32xf32>
    %28 = arith.addf %25, %27 : vector<8x32xf32>
    %29 = arith.addf %1, %28 : vector<8x32xf32>
    %c0_22 = arith.constant 0 : index
    %c0_23 = arith.constant 0 : index
    %30 = vector.load %arg8[%c0_22, %c0_23] : memref<1x32xf32, #tpu.memory_space<vmem>>, vector<1x32xf32>
    %c0_24 = arith.constant 0 : index
    %c0_25 = arith.constant 0 : index
    %31 = vector.load %arg9[%c0_24, %c0_25] : memref<1x32xf32, #tpu.memory_space<vmem>>, vector<1x32xf32>
    %cst_26 = arith.constant dense<0.000000e+00> : vector<8xf32>
    %32 = vector.multi_reduction <add>, %29, %cst_26 [1] : vector<8x32xf32> to vector<8xf32>
    %33 = vector.shape_cast %32 : vector<8xf32> to vector<8x1xf32>
    %cst_27 = arith.constant 3.200000e+01 : f32
    %34 = vector.broadcast %cst_27 : f32 to vector<8x1xf32>
    %35 = arith.divf %33, %34 : vector<8x1xf32>
    %36 = vector.broadcast %35 : vector<8x1xf32> to vector<8x32xf32>
    %37 = arith.subf %29, %36 : vector<8x32xf32>
    %38 = arith.mulf %37, %37 : vector<8x32xf32>
    %cst_28 = arith.constant dense<0.000000e+00> : vector<8xf32>
    %39 = vector.multi_reduction <add>, %38, %cst_28 [1] : vector<8x32xf32> to vector<8xf32>
    %40 = vector.shape_cast %39 : vector<8xf32> to vector<8x1xf32>
    %cst_29 = arith.constant 3.200000e+01 : f32
    %41 = vector.broadcast %cst_29 : f32 to vector<8x1xf32>
    %42 = arith.divf %40, %41 : vector<8x1xf32>
    %43 = vector.broadcast %35 : vector<8x1xf32> to vector<8x32xf32>
    %44 = arith.subf %29, %43 : vector<8x32xf32>
    %cst_30 = arith.constant 9.99999974E-6 : f32
    %45 = vector.broadcast %cst_30 : f32 to vector<8x1xf32>
    %46 = arith.addf %42, %45 : vector<8x1xf32>
    %47 = math.rsqrt %46 : vector<8x1xf32>
    %48 = vector.broadcast %47 : vector<8x1xf32> to vector<8x32xf32>
    %49 = arith.mulf %44, %48 : vector<8x32xf32>
    %50 = vector.broadcast %30 : vector<1x32xf32> to vector<8x32xf32>
    %51 = arith.mulf %49, %50 : vector<8x32xf32>
    %52 = vector.broadcast %31 : vector<1x32xf32> to vector<8x32xf32>
    %53 = arith.addf %51, %52 : vector<8x32xf32>
    %54 = arith.truncf %53 : vector<8x32xf32> to vector<8x32xbf16>
    %c0_31 = arith.constant 0 : index
    %c0_32 = arith.constant 0 : index
    %55 = vector.load %arg10[%c0_31, %c0_32] : memref<32x128xbf16, #tpu.memory_space<vmem>>, vector<32x128xbf16>
    %cst_33 = arith.constant dense<0.000000e+00> : vector<8x128xf32>
    %56 = tpu.matmul %54, %55, %cst_33 {dimension_numbers = #tpu.dot_dimension_numbers<[1], [0], [0], [1], [0, 0, 1, 1], [], []>} : vector<8x32xbf16>, vector<32x128xbf16>, vector<8x128xf32> -> vector<8x128xf32>
    %c0_34 = arith.constant 0 : index
    %c0_35 = arith.constant 0 : index
    %57 = vector.load %arg11[%c0_34, %c0_35] : memref<1x128xf32, #tpu.memory_space<vmem>>, vector<1x128xf32>
    %58 = vector.broadcast %57 : vector<1x128xf32> to vector<8x128xf32>
    %59 = arith.addf %56, %58 : vector<8x128xf32>
    %cst_36 = arith.constant 5.000000e-01 : f32
    %60 = vector.broadcast %cst_36 : f32 to vector<8x128xf32>
    %61 = arith.mulf %60, %59 : vector<8x128xf32>
    %cst_37 = arith.constant 0.707106769 : f32
    %62 = vector.broadcast %cst_37 : f32 to vector<8x128xf32>
    %63 = arith.mulf %59, %62 : vector<8x128xf32>
    %64 = math.erf %63 : vector<8x128xf32>
    %cst_38 = arith.constant 1.000000e+00 : f32
    %65 = vector.broadcast %cst_38 : f32 to vector<8x128xf32>
    %66 = arith.addf %65, %64 : vector<8x128xf32>
    %67 = arith.mulf %61, %66 : vector<8x128xf32>
    %68 = arith.truncf %67 : vector<8x128xf32> to vector<8x128xbf16>
    %c0_39 = arith.constant 0 : index
    %c0_40 = arith.constant 0 : index
    %69 = vector.load %arg12[%c0_39, %c0_40] : memref<128x32xbf16, #tpu.memory_space<vmem>>, vector<128x32xbf16>
    %cst_41 = arith.constant dense<0.000000e+00> : vector<8x32xf32>
    %70 = tpu.matmul %68, %69, %cst_41 {dimension_numbers = #tpu.dot_dimension_numbers<[1], [0], [0], [1], [0, 0, 1, 1], [], []>} : vector<8x128xbf16>, vector<128x32xbf16>, vector<8x32xf32> -> vector<8x32xf32>
    %c0_42 = arith.constant 0 : index
    %c0_43 = arith.constant 0 : index
    %71 = vector.load %arg13[%c0_42, %c0_43] : memref<1x32xf32, #tpu.memory_space<vmem>>, vector<1x32xf32>
    %72 = vector.broadcast %71 : vector<1x32xf32> to vector<8x32xf32>
    %73 = arith.addf %70, %72 : vector<8x32xf32>
    %74 = arith.addf %29, %73 : vector<8x32xf32>
    %c0_44 = arith.constant 0 : index
    %c0_45 = arith.constant 0 : index
    %c0_46 = arith.constant 0 : index
    %75 = vector.load %arg14[%c0_44, %c0_45, %c0_46] : memref<1x8x32xf32, #tpu.memory_space<vmem>>, vector<1x8x32xf32>
    %76 = vector.shape_cast %75 : vector<1x8x32xf32> to vector<8x32xf32>
    %77 = vector.shape_cast %74 : vector<8x32xf32> to vector<1x8x32xf32>
    tpu.vector_store %arg14[%c0_44, %c0_45, %c0_46], %77 {strides = array<i32>} : memref<1x8x32xf32, #tpu.memory_space<vmem>>, vector<1x8x32xf32>,
    return
  }
  func.func @transform_0(%arg0: i32, %arg1: i32) -> (i32, i32, i32) {
    %c0_i32 = arith.constant 0 : i32
    %c0_i32_0 = arith.constant 0 : i32
    return %arg0, %arg1, %c0_i32 : i32, i32, i32
  }
  func.func @transform_1(%arg0: i32, %arg1: i32) -> (i32, i32, i32, i32) {
    %c0_i32 = arith.constant 0 : i32
    %c0_i32_0 = arith.constant 0 : i32
    %c0_i32_1 = arith.constant 0 : i32
    return %arg0, %c0_i32, %arg1, %c0_i32_0 : i32, i32, i32, i32
  }
  func.func @transform_2(%arg0: i32, %arg1: i32) -> (i32, i32, i32, i32) {
    %c0_i32 = arith.constant 0 : i32
    %c0_i32_0 = arith.constant 0 : i32
    %c0_i32_1 = arith.constant 0 : i32
    %c0_i32_2 = arith.constant 0 : i32
    return %arg0, %c0_i32, %c0_i32_0, %c0_i32_1 : i32, i32, i32, i32
  }
  func.func @transform_3(%arg0: i32, %arg1: i32) -> (i32, i32, i32, i32) {
    %c0_i32 = arith.constant 0 : i32
    %c0_i32_0 = arith.constant 0 : i32
    %c0_i32_1 = arith.constant 0 : i32
    %c0_i32_2 = arith.constant 0 : i32
    return %arg0, %c0_i32, %c0_i32_0, %c0_i32_1 : i32, i32, i32, i32
  }
  func.func @transform_4(%arg0: i32, %arg1: i32) -> (i32, i32) {
    %c0_i32 = arith.constant 0 : i32
    %c0_i32_0 = arith.constant 0 : i32
    %c0_i32_1 = arith.constant 0 : i32
    return %c0_i32, %c0_i32_0 : i32, i32
  }
  func.func @transform_5(%arg0: i32, %arg1: i32) -> (i32, i32) {
    %c0_i32 = arith.constant 0 : i32
    %c0_i32_0 = arith.constant 0 : i32
    %c0_i32_1 = arith.constant 0 : i32
    return %c0_i32, %c0_i32_0 : i32, i32
  }
  func.func @transform_6(%arg0: i32, %arg1: i32) -> (i32, i32) {
    %c0_i32 = arith.constant 0 : i32
    %c0_i32_0 = arith.constant 0 : i32
    %c0_i32_1 = arith.constant 0 : i32
    return %c0_i32, %c0_i32_0 : i32, i32
  }
  func.func @transform_7(%arg0: i32, %arg1: i32) -> (i32, i32) {
    %c0_i32 = arith.constant 0 : i32
    %c0_i32_0 = arith.constant 0 : i32
    %c0_i32_1 = arith.constant 0 : i32
    return %c0_i32, %c0_i32_0 : i32, i32
  }
  func.func @transform_8(%arg0: i32, %arg1: i32) -> (i32, i32) {
    %c0_i32 = arith.constant 0 : i32
    %c0_i32_0 = arith.constant 0 : i32
    %c0_i32_1 = arith.constant 0 : i32
    return %c0_i32, %c0_i32_0 : i32, i32
  }
  func.func @transform_9(%arg0: i32, %arg1: i32) -> (i32, i32) {
    %c0_i32 = arith.constant 0 : i32
    %c0_i32_0 = arith.constant 0 : i32
    %c0_i32_1 = arith.constant 0 : i32
    return %c0_i32, %c0_i32_0 : i32, i32
  }
  func.func @transform_10(%arg0: i32, %arg1: i32) -> (i32, i32) {
    %c0_i32 = arith.constant 0 : i32
    %c0_i32_0 = arith.constant 0 : i32
    %c0_i32_1 = arith.constant 0 : i32
    return %c0_i32, %c0_i32_0 : i32, i32
  }
  func.func @transform_11(%arg0: i32, %arg1: i32) -> (i32, i32) {
    %c0_i32 = arith.constant 0 : i32
    %c0_i32_0 = arith.constant 0 : i32
    %c0_i32_1 = arith.constant 0 : i32
    return %c0_i32, %c0_i32_0 : i32, i32
  }
  func.func @transform_12(%arg0: i32, %arg1: i32) -> (i32, i32, i32) {
    %c0_i32 = arith.constant 0 : i32
    %c0_i32_0 = arith.constant 0 : i32
    return %arg0, %arg1, %c0_i32 : i32, i32, i32
  }
}

</mosaic_0001>

<llo_original>
// kernel: transformer_forward.4
$region0: #{transformer_forward.4}
  #allocation0 [shape = 'u32[]', space=smem, size = 0x4, offset = 0x4, fixed_abs, tag = 'smem constant byte address 0x4 - core index']
  #allocation1 [shape = 'u32[144,128]{1,0:T(1,128)}', space=vmem, size = 0x12000, scoped, tag = 'internal scratch']
  %s0 = inlined_call_operand.vmem [shape: f32[2,8,32], index: 0, kind: input, shape index: {}]
  %s1 = inlined_call_operand.vmem [shape: f32[1,32], index: 1, kind: input, shape index: {}]
  %s2 = inlined_call_operand.vmem [shape: f32[1,32], index: 2, kind: input, shape index: {}]
  %s3 = inlined_call_operand.vmem [shape: bf16[32,96], index: 3, kind: input, shape index: {}]
  %s4 = inlined_call_operand.vmem [shape: f32[1,96], index: 4, kind: input, shape index: {}]
  %s5 = inlined_call_operand.vmem [shape: bf16[2,4,8,8], index: 5, kind: output, shape index: {0}]
  %s6 = inlined_call_operand.vmem [shape: bf16[2,4,8,8], index: 6, kind: output, shape index: {1}]
  %s7 = inlined_call_operand.vmem [shape: bf16[2,4,8,8], index: 7, kind: output, shape index: {2}]
  %8 = xla_tuple %s5, %s6, %s7
  %s9 = sld [smem:[#allocation0]]
  $region69: #{transformer_forward.4} parent=0
    _
  %s11 = ssub.s32 1, %s9
  %s12 = scalar_select 0, %s11, %s9
  loop: start=0, step=1, limit=4
  $region2: #{transformer_forward.4} parent=0 // loop_pre_header
    _
  $region3: #{transformer_forward.4} parent=0 // loop_header
    %s14 = sphi 0, %s18
    %p15 = scmp.ge.s32.totalorder %s14, 4
    %s21 = sphi 0, %s33
    %s22 = sphi 0, %s29
    %s23 = sphi 0, %s21
    %s24 = sphi 0, %s22
    %s25 = sphi 0, %s23
    %s26 = sphi 0, %s24
    %s38 = sphi 0, %s40
    %s41 = sphi 0, %s38
    %s42 = sphi 0, %s41
    %s58 = sphi 0, %s42
    %s62 = sphi 0, %s62
    %s64 = sphi 0, %s62
    %s65 = sphi 0, %s64
    %s79 = sphi 0, %s65
    %s83 = sphi 0, %s83
    %s85 = sphi 0, %s83
    %s86 = sphi 0, %s85
    %s100 = sphi 0, %s86
    %s104 = sphi 0, %s104
    %s106 = sphi 0, %s104
    %s107 = sphi 0, %s106
    %s121 = sphi 0, %s107
    %s125 = sphi 0, %s125
    %s127 = sphi 0, %s125
    %s128 = sphi 0, %s127
    %s142 = sphi 0, %s128
    %s150 = sphi 0, %s152
    %s153 = sphi 0, %s150
    %s154 = sphi 0, %s153
    %s170 = sphi 0, %s154
    %s178 = sphi 0, %s180
    %s181 = sphi 0, %s178
    %s182 = sphi 0, %s181
    %s198 = sphi 0, %s182
    %s206 = sphi 0, %s208
    %s209 = sphi 0, %s206
    %s210 = sphi 0, %s209
    %s226 = sphi 0, %s210
  $region4: #{transformer_forward.4} parent=0 // loop_header_branch
    %17 = sbr.rel (%p15) target = $region8
  $region5: #{transformer_forward.4} parent=0 // loop_body
    %s19 = ssub.s32 %s14, 1
    %s20 = ssub.s32 %s14, 2
    %s27 = sadd.s32 1, %s22
    %p28 = scmp.ge.s32.totalorder %s27, 1
    %s29 = scalar_select %p28, 0, %s27
    %s30 = sadd.s32 1, %s21
    %s31 = scalar_select %p28, %s30, %s21
    %p32 = scmp.ge.s32.totalorder %s31, 2
    %s33 = scalar_select %p32, 0, %s31
    %s34 = ssub.s32 %s21, %s33
    %s35 = ssub.s32 %s22, %s29
    %s36 = sor.u32 %s34, %s35
    %p37 = scmp.eq.s32.totalorder %s36, 0
    %s39 = sadd.s32 %s38, 1
    %s40 = scalar_select %p37, %s38, %s39
    %p43 = pneg %p37
    %p44 = scmp.eq.s32.totalorder %s14, 1
    %p45 = por %p43, %p44
    %p46 = scmp.ne.s32.totalorder %s38, %s41
    %p47 = scmp.eq.s32.totalorder %s14, 0
    %p48 = por %p46, %p47
    %p49 = scmp.ne.s32.totalorder %s38, %s41
    %p50 = scmp.eq.s32.totalorder %s19, 1
    %p51 = por %p49, %p50
    %p52 = scmp.ne.s32.totalorder %s41, %s42
    %p53 = scmp.eq.s32.totalorder %s19, 0
    %p54 = por %p52, %p53
    %p55 = scmp.ne.s32.totalorder %s41, %s42
    %p56 = scmp.eq.s32.totalorder %s20, 1
    %p57 = por %p55, %p56
    %p59 = scmp.ne.s32.totalorder %s42, %s58
    %p60 = scmp.eq.s32.totalorder %s20, 0
    %p61 = por %p59, %p60
    %s63 = sadd.s32 %s62, 1
    %p66 = scmp.eq.s32.totalorder %s14, 1
    %p67 = scmp.ne.s32.totalorder %s62, %s64
    %p68 = scmp.eq.s32.totalorder %s14, 0
    %p69 = por %p67, %p68
    %p70 = scmp.ne.s32.totalorder %s62, %s64
    %p71 = scmp.eq.s32.totalorder %s19, 1
    %p72 = por %p70, %p71
    %p73 = scmp.ne.s32.totalorder %s64, %s65
    %p74 = scmp.eq.s32.totalorder %s19, 0
    %p75 = por %p73, %p74
    %p76 = scmp.ne.s32.totalorder %s64, %s65
    %p77 = scmp.eq.s32.totalorder %s20, 1
    %p78 = por %p76, %p77
    %p80 = scmp.ne.s32.totalorder %s65, %s79
    %p81 = scmp.eq.s32.totalorder %s20, 0
    %p82 = por %p80, %p81
    %s84 = sadd.s32 %s83, 1
    %p87 = scmp.eq.s32.totalorder %s14, 1
    %p88 = scmp.ne.s32.totalorder %s83, %s85
    %p89 = scmp.eq.s32.totalorder %s14, 0
    %p90 = por %p88, %p89
    %p91 = scmp.ne.s32.totalorder %s83, %s85
    %p92 = scmp.eq.s32.totalorder %s19, 1
    %p93 = por %p91, %p92
    %p94 = scmp.ne.s32.totalorder %s85, %s86
    %p95 = scmp.eq.s32.totalorder %s19, 0
    %p96 = por %p94, %p95
    %p97 = scmp.ne.s32.totalorder %s85, %s86
    %p98 = scmp.eq.s32.totalorder %s20, 1
    %p99 = por %p97, %p98
    %p101 = scmp.ne.s32.totalorder %s86, %s100
    %p102 = scmp.eq.s32.totalorder %s20, 0
    %p103 = por %p101, %p102
    %s105 = sadd.s32 %s104, 1
    %p108 = scmp.eq.s32.totalorder %s14, 1
    %p109 = scmp.ne.s32.totalorder %s104, %s106
    %p110 = scmp.eq.s32.totalorder %s14, 0
    %p111 = por %p109, %p110
    %p112 = scmp.ne.s32.totalorder %s104, %s106
    %p113 = scmp.eq.s32.totalorder %s19, 1
    %p114 = por %p112, %p113
    %p115 = scmp.ne.s32.totalorder %s106, %s107
    %p116 = scmp.eq.s32.totalorder %s19, 0
    %p117 = por %p115, %p116
    %p118 = scmp.ne.s32.totalorder %s106, %s107
    %p119 = scmp.eq.s32.totalorder %s20, 1
    %p120 = por %p118, %p119
    %p122 = scmp.ne.s32.totalorder %s107, %s121
    %p123 = scmp.eq.s32.totalorder %s20, 0
    %p124 = por %p122, %p123
    %s126 = sadd.s32 %s125, 1
    %p129 = scmp.eq.s32.totalorder %s14, 1
    %p130 = scmp.ne.s32.totalorder %s125, %s127
    %p131 = scmp.eq.s32.totalorder %s14, 0
    %p132 = por %p130, %p131
    %p133 = scmp.ne.s32.totalorder %s125, %s127
    %p134 = scmp.eq.s32.totalorder %s19, 1
    %p135 = por %p133, %p134
    %p136 = scmp.ne.s32.totalorder %s127, %s128
    %p137 = scmp.eq.s32.totalorder %s19, 0
    %p138 = por %p136, %p137
    %p139 = scmp.ne.s32.totalorder %s127, %s128
    %p140 = scmp.eq.s32.totalorder %s20, 1
    %p141 = por %p139, %p140
    %p143 = scmp.ne.s32.totalorder %s128, %s142
    %p144 = scmp.eq.s32.totalorder %s20, 0
    %p145 = por %p143, %p144
    %s146 = ssub.s32 %s21, %s33
    %s147 = ssub.s32 %s22, %s29
    %s148 = sor.u32 %s146, %s147
    %p149 = scmp.eq.s32.totalorder %s148, 0
    %s151 = sadd.s32 %s150, 1
    %s152 = scalar_select %p149, %s150, %s151
    %p155 = pneg %p149
    %p156 = scmp.eq.s32.totalorder %s14, 1
    %p157 = por %p155, %p156
    %p158 = scmp.ne.s32.totalorder %s150, %s153
    %p159 = scmp.eq.s32.totalorder %s14, 0
    %p160 = por %p158, %p159
    %p161 = scmp.ne.s32.totalorder %s150, %s153
    %p162 = scmp.eq.s32.totalorder %s19, 1
    %p163 = por %p161, %p162
    %p164 = scmp.ne.s32.totalorder %s153, %s154
    %p165 = scmp.eq.s32.totalorder %s19, 0
    %p166 = por %p164, %p165
    %p167 = scmp.ne.s32.totalorder %s153, %s154
    %p168 = scmp.eq.s32.totalorder %s20, 1
    %p169 = por %p167, %p168
    %p171 = scmp.ne.s32.totalorder %s154, %s170
    %p172 = scmp.eq.s32.totalorder %s20, 0
    %p173 = por %p171, %p172
    %s174 = ssub.s32 %s21, %s33
    %s175 = ssub.s32 %s22, %s29
    %s176 = sor.u32 %s174, %s175
    %p177 = scmp.eq.s32.totalorder %s176, 0
    %s179 = sadd.s32 %s178, 1
    %s180 = scalar_select %p177, %s178, %s179
    %p183 = pneg %p177
    %p184 = scmp.eq.s32.totalorder %s14, 1
    %p185 = por %p183, %p184
    %p186 = scmp.ne.s32.totalorder %s178, %s181
    %p187 = scmp.eq.s32.totalorder %s14, 0
    %p188 = por %p186, %p187
    %p189 = scmp.ne.s32.totalorder %s178, %s181
    %p190 = scmp.eq.s32.totalorder %s19, 1
    %p191 = por %p189, %p190
    %p192 = scmp.ne.s32.totalorder %s181, %s182
    %p193 = scmp.eq.s32.totalorder %s19, 0
    %p194 = por %p192, %p193
    %p195 = scmp.ne.s32.totalorder %s181, %s182
    %p196 = scmp.eq.s32.totalorder %s20, 1
    %p197 = por %p195, %p196
    %p199 = scmp.ne.s32.totalorder %s182, %s198
    %p200 = scmp.eq.s32.totalorder %s20, 0
    %p201 = por %p199, %p200
    %s202 = ssub.s32 %s21, %s33
    %s203 = ssub.s32 %s22, %s29
    %s204 = sor.u32 %s202, %s203
    %p205 = scmp.eq.s32.totalorder %s204, 0
    %s207 = sadd.s32 %s206, 1
    %s208 = scalar_select %p205, %s206, %s207
    %p211 = pneg %p205
    %p212 = scmp.eq.s32.totalorder %s14, 1
    %p213 = por %p211, %p212
    %p214 = scmp.ne.s32.totalorder %s206, %s209
    %p215 = scmp.eq.s32.totalorder %s14, 0
    %p216 = por %p214, %p215
    %p217 = scmp.ne.s32.totalorder %s206, %s209
    %p218 = scmp.eq.s32.totalorder %s19, 1
    %p219 = por %p217, %p218
    %p220 = scmp.ne.s32.totalorder %s209, %s210
    %p221 = scmp.eq.s32.totalorder %s19, 0
    %p222 = por %p220, %p221
    %p223 = scmp.ne.s32.totalorder %s209, %s210
    %p224 = scmp.eq.s32.totalorder %s20, 1
    %p225 = por %p223, %p224
    %p227 = scmp.ne.s32.totalorder %s210, %s226
    %p228 = scmp.eq.s32.totalorder %s20, 0
    %p229 = por %p227, %p228
    %p230 = scmp.le.s32.totalorder 1, %s14
    %p231 = scmp.lt.s32.totalorder %s14, 3
    %p232 = pnand %p230, %p231
    %p233 = pneg %p232
    // Predicated region
    $region9: #{transformer_forward.4} parent=5 // pred_check
      _
    $region10: #{transformer_forward.4} parent=5 // pred_check_branch
      %235 = sbr.rel (%p232) target = $region12
    $region11: #{transformer_forward.4} parent=5 // pred_region
      %s236 = ssub.s32 %s14, 1
      // Predicated region
      $region13: #{transformer_forward.4} parent=11 // pred_check
        %p237 = pneg %p75
      $region14: #{transformer_forward.4} parent=11 // pred_check_branch
        %239 = sbr.rel (%p237) target = $region16
      $region15: #{transformer_forward.4} parent=11 // pred_region
        _
      $region16: #{transformer_forward.4} parent=11 // pred_fallthru
        _
      // Predicated region
      $region17: #{transformer_forward.4} parent=11 // pred_check
        %p240 = pneg %p96
      $region18: #{transformer_forward.4} parent=11 // pred_check_branch
        %242 = sbr.rel (%p240) target = $region20
      $region19: #{transformer_forward.4} parent=11 // pred_region
        _
      $region20: #{transformer_forward.4} parent=11 // pred_fallthru
        _
      // Predicated region
      $region21: #{transformer_forward.4} parent=11 // pred_check
        %p243 = pneg %p117
      $region22: #{transformer_forward.4} parent=11 // pred_check_branch
        %245 = sbr.rel (%p243) target = $region24
      $region23: #{transformer_forward.4} parent=11 // pred_region
        _
      $region24: #{transformer_forward.4} parent=11 // pred_fallthru
        _
      // Predicated region
      $region25: #{transformer_forward.4} parent=11 // pred_check
        %p246 = pneg %p138
      $region26: #{transformer_forward.4} parent=11 // pred_check_branch
        %248 = sbr.rel (%p246) target = $region28
      $region27: #{transformer_forward.4} parent=11 // pred_region
        _
      $region28: #{transformer_forward.4} parent=11 // pred_fallthru
        _
    $region12: #{transformer_forward.4} parent=5 // pred_fallthru
      _
    %p249 = scmp.lt.s32.totalorder %s14, 2
    // Predicated region
    $region29: #{transformer_forward.4} parent=5 // pred_check
      %p250 = pneg %p249
    $region30: #{transformer_forward.4} parent=5 // pred_check_branch
      %252 = sbr.rel (%p250) target = $region32
    $region31: #{transformer_forward.4} parent=5 // pred_region
      // Predicated region
      $region33: #{transformer_forward.4} parent=31 // pred_check
        %p253 = pneg %p48
      $region34: #{transformer_forward.4} parent=31 // pred_check_branch
        %255 = sbr.rel (%p253) target = $region36
      $region35: #{transformer_forward.4} parent=31 // pred_region
        %p256 = scmp.lt.s32.totalorder %s21, 1
        %s257 = scalar_select %p256, %s21, 1
        %p258 = scmp.lt.s32.totalorder %s22, 0
        %s259 = scalar_select %p258, %s22, 0
        %s260 = sadd.s32 %s259, %s257
        %s261 = smul.addr %s260, 8
        %s262 = scalar_lea.vmem %s0, %s261
      $region36: #{transformer_forward.4} parent=31 // pred_fallthru
        _
    $region32: #{transformer_forward.4} parent=5 // pred_fallthru
      _
    %p263 = scmp.le.s32.totalorder 1, %s14
    %p264 = scmp.lt.s32.totalorder %s14, 3
    %p265 = pnand %p263, %p264
    %p266 = pneg %p265
    // Predicated region
    $region37: #{transformer_forward.4} parent=5 // pred_check
      _
    $region38: #{transformer_forward.4} parent=5 // pred_check_branch
      %268 = sbr.rel (%p265) target = $region40
    $region39: #{transformer_forward.4} parent=5 // pred_region
      %s269 = ssub.s32 %s14, 1
      %p270 = scmp.lt.s32.totalorder %s23, 1
      %s271 = scalar_select %p270, %s23, 1
      %p272 = scmp.lt.s32.totalorder %s24, 0
      %s273 = scalar_select %p272, %s24, 0
      %s274 = sadd.s32 %s273, %s271
      %s275 = smul.addr %s274, 8
      %s276 = scalar_lea.vmem %s0, %s275
      %p277 = pneg %p54
      %p278 = pneg %p51
      %p279 = pneg %p75
      %p280 = pneg %p72
      %p281 = pneg %p96
      %p282 = pneg %p93
      %p283 = pneg %p117
      %p284 = pneg %p114
      %p285 = pneg %p138
      %p286 = pneg %p135
      %p287 = pneg %p166
      %p288 = pneg %p163
      %p289 = scmp.lt.s32.totalorder %s23, 1
      %s290 = scalar_select %p289, %s23, 1
      %p291 = scmp.lt.s32.totalorder %s24, 0
      %s292 = scalar_select %p291, %s24, 0
      %s293 = smul.addr %s290, 4
      %s294 = sadd.s32 %s292, %s293
      %s295 = smul.addr %s294, 4
      %s296 = scalar_lea.vmem %s5, %s295
      %p297 = pneg %p194
      %p298 = pneg %p191
      %p299 = scmp.lt.s32.totalorder %s23, 1
      %s300 = scalar_select %p299, %s23, 1
      %p301 = scmp.lt.s32.totalorder %s24, 0
      %s302 = scalar_select %p301, %s24, 0
      %s303 = smul.addr %s300, 4
      %s304 = sadd.s32 %s302, %s303
      %s305 = smul.addr %s304, 4
      %s306 = scalar_lea.vmem %s6, %s305
      %p307 = pneg %p222
      %p308 = pneg %p219
      %p309 = scmp.lt.s32.totalorder %s23, 1
      %s310 = scalar_select %p309, %s23, 1
      %p311 = scmp.lt.s32.totalorder %s24, 0
      %s312 = scalar_select %p311, %s24, 0
      %s313 = smul.addr %s310, 4
      %s314 = sadd.s32 %s312, %s313
      %s315 = smul.addr %s314, 4
      %s316 = scalar_lea.vmem %s7, %s315
      %p317 = scmp.lt.s32.totalorder %s23, 1
      %s318 = scalar_select %p317, %s23, 1
      %p319 = scmp.lt.s32.totalorder %s24, 0
      %s320 = scalar_select %p319, %s24, 0
      %s321 = sadd.s32 %s320, %s318
      %s322 = smul.addr %s321, 8
      %s323 = scalar_lea.vmem %s0, %s322
      %p324 = scmp.lt.s32.totalorder %s23, 1
      %s325 = scalar_select %p324, %s23, 1
      %p326 = scmp.lt.s32.totalorder %s24, 0
      %s327 = scalar_select %p326, %s24, 0
      %s328 = smul.addr %s325, 4
      %s329 = sadd.s32 %s327, %s328
      %s330 = smul.addr %s329, 4
      %s331 = scalar_lea.vmem %s5, %s330
      %p332 = scmp.lt.s32.totalorder %s23, 1
      %s333 = scalar_select %p332, %s23, 1
      %p334 = scmp.lt.s32.totalorder %s24, 0
      %s335 = scalar_select %p334, %s24, 0
      %s336 = smul.addr %s333, 4
      %s337 = sadd.s32 %s335, %s336
      %s338 = smul.addr %s337, 4
      %s339 = scalar_lea.vmem %s6, %s338
      %p340 = scmp.lt.s32.totalorder %s23, 1
      %s341 = scalar_select %p340, %s23, 1
      %p342 = scmp.lt.s32.totalorder %s24, 0
      %s343 = scalar_select %p342, %s24, 0
      %s344 = smul.addr %s341, 4
      %s345 = sadd.s32 %s343, %s344
      %s346 = smul.addr %s345, 4
      %s347 = scalar_lea.vmem %s7, %s346
      %v349 = vld [vmem:[%s323] sm:$0xff]
      %v350 = vld [vmem:[%s1] sm:$0x1]
      %v351 = vld [vmem:[%s2] sm:$0x1]
      %vm352 = vcmask 261120
      %v353 = vsel %vm352, %v349, 0.0
      %354 = vadd.xlane.f32.xlu0 %v353
      %v355 = vpop.xlane.xlu0 %354
      %v356 = vrcp.pop 32.0
      %v357 = vmul.f32 %v355, %v356
      %v358 = vsub.f32 %v349, %v357
      %v359 = vmul.f32 %v358, %v358
      %v360 = vsel %vm352, %v359, 0.0
      %361 = vadd.xlane.f32.xlu0 %v360
      %v362 = vpop.xlane.xlu0 %361
      %v363 = vmul.f32 %v362, %v356
      %v364 = vadd.f32 %v363, 1e-05
      %v365 = vrsqrt.pop %v364
      %v366 = vmul.f32 %v358, %v365
      %v368 = vlaneseq
      %v369 = vshrl.u32 %v368, 7
      %v370 = vsub.s32 0, %v369
      %v371 = vrot.slane %v350, %v370
      %v373 = vmul.f32 %v366, %v371
      %v375 = vlaneseq
      %v376 = vshrl.u32 %v375, 7
      %v377 = vsub.s32 0, %v376
      %v378 = vrot.slane %v351, %v377
      %v380 = vadd.f32 %v373, %v378
      %v381 = vpack.c.bf16 %v380, %v380
      %v382 = vld [vmem:[%s3] sm:$0xf]
      %v383 = vld [vmem:[%s3 + $0x4] sm:$0xf]
      %v384 = vld [vmem:[%s3 + $0x8] sm:$0xf]
      %v385 = vld [vmem:[%s3 + $0xc] sm:$0xf]
      %v386 = vld [vmem:[%s4] sm:$0x1]
      %v388 = vlaneseq
      %v389 = vshrl.u32 %v388, 7
      %v390 = vsub.s32 0, %v389
      %v391 = vrot.slane %v386, %v390
      %v397 = vunpack.c.l.b16 %v382
      %v398 = vunpack.c.l.b16 %v383
      %v399 = vunpack.c.l.b16 %v384
      %v400 = vunpack.c.l.b16 %v385
      %v401 = vpack.c.b16 %v398, %v397
      %v402 = vpack.c.b16 %v400, %v399
      %v406 = vsel %vm352, %v381, 0
      %408 = vmatprep.subr.bf16.mxu0 0
      %409 = vmatpush1.bf16.msra.mxu0 %v401
      %410 = vmatprep.subr.bf16.mxu0 0
      %411 = vmatpush1.bf16.msra.mxu0 %v402
      %412 = vmatprep.subr.bf16.mxu0 0
      %413 = vmatpush1.bf16.msra.mxu0 0
      %414 = vmatprep.subr.bf16.mxu0 0
      %415 = vmatpush1.bf16.msra.mxu0 0
      %416 = vmatprep.subr.bf16.mxu0 0
      %417 = vmatpush1.bf16.msra.mxu0 0
      %418 = vmatprep.subr.bf16.mxu0 0
      %419 = vmatpush1.bf16.msra.mxu0 0
      %420 = vmatprep.subr.bf16.mxu0 0
      %421 = vmatpush1.bf16.msra.mxu0 0
      %422 = vmatprep.subr.bf16.mxu0 0
      %423 = vmatpush1.bf16.msra.mxu0 0
      %424 = vmatprep.subr.bf16.mxu0 0
      %425 = vmatpush1.bf16.msra.mxu0 0
      %426 = vmatprep.subr.bf16.mxu0 0
      %427 = vmatpush1.bf16.msra.mxu0 0
      %428 = vmatprep.subr.bf16.mxu0 0
      %429 = vmatpush1.bf16.msra.mxu0 0
      %430 = vmatprep.subr.bf16.mxu0 0
      %431 = vmatpush1.bf16.msra.mxu0 0
      %432 = vmatprep.subr.bf16.mxu0 0
      %433 = vmatpush1.bf16.msra.mxu0 0
      %434 = vmatprep.subr.bf16.mxu0 0
      %435 = vmatpush1.bf16.msra.mxu0 0
      %436 = vmatprep.subr.bf16.mxu0 0
      %437 = vmatpush1.bf16.msra.mxu0 0
      %438 = vmatprep.subr.bf16.mxu0 0
      %439 = vmatpush1.bf16.msra.mxu0 0
      %440 = vmatprep.mubr.bf16.mxu0 0
      %441 = vmatmul.mubr.bf16.gmra.mrb[0].mxu0 %v406
      %v442 = vpop.f32.mrb[0].mxu0
      %v443 = vadd.f32 %v391, %v442
      %v444 = vpop.f32.mrb[0].mxu0
      %v445 = vpop.f32.mrb[0].mxu0
      %v446 = vpop.f32.mrb[0].mxu0
      %447 = vdwg.mxu0
      %449 = vrot.lane.b32.xlu0 %v443, 120
      %v450 = vpop.permute.xlu0 %449
      %452 = vrot.lane.b32.xlu0 %v443, 112
      %v453 = vpop.permute.xlu0 %452
      %455 = vrot.lane.b32.xlu0 %v443, 104
      %v456 = vpop.permute.xlu0 %455
      %v458 = vcombine.low %v443, %v453
      %v459 = vcombine.high %v443, %v453
      %v461 = vunpack.c.l.s4 1983009808
      %v462 = vunpack.c.0.s8 %v461
      %v463 = vlaneseq
      %v464 = vshrl.u32 %v463, 7
      %v465 = vsub.s32 %v462, %v464
      %v466 = vrot.slane %v458, %v465
      %v468 = vunpack.c.l.s4 1983009808
      %v469 = vunpack.c.0.s8 %v468
      %v470 = vlaneseq
      %v471 = vshrl.u32 %v470, 7
      %v472 = vsub.s32 %v469, %v471
      %v473 = vrot.slane %v459, %v472
      %v474 = vcombine.low %v450, %v456
      %v475 = vcombine.high %v450, %v456
      %v477 = vunpack.c.l.s4 1983009808
      %v478 = vunpack.c.0.s8 %v477
      %v479 = vlaneseq
      %v480 = vshrl.u32 %v479, 7
      %v481 = vsub.s32 %v478, %v480
      %v482 = vrot.slane %v474, %v481
      %v484 = vunpack.c.l.s4 1983009808
      %v485 = vunpack.c.0.s8 %v484
      %v486 = vlaneseq
      %v487 = vshrl.u32 %v486, 7
      %v488 = vsub.s32 %v485, %v487
      %v489 = vrot.slane %v475, %v488
      %v490 = vcombine.low %v466, %v482
      %v491 = vcombine.high %v466, %v482
      %v493 = vunpack.c.l.s4 1934713408
      %v494 = vunpack.c.0.s8 %v493
      %v495 = vlaneseq
      %v496 = vshrl.u32 %v495, 7
      %v497 = vsub.s32 %v494, %v496
      %v498 = vrot.slane %v490, %v497
      %v500 = vunpack.c.l.s4 1934713408
      %v501 = vunpack.c.0.s8 %v500
      %v502 = vlaneseq
      %v503 = vshrl.u32 %v502, 7
      %v504 = vsub.s32 %v501, %v503
      %v505 = vrot.slane %v491, %v504
      %v506 = vcombine.low %v473, %v489
      %v507 = vcombine.high %v473, %v489
      %v509 = vunpack.c.l.s4 1934713408
      %v510 = vunpack.c.0.s8 %v509
      %v511 = vlaneseq
      %v512 = vshrl.u32 %v511, 7
      %v513 = vsub.s32 %v510, %v512
      %v514 = vrot.slane %v506, %v513
      %v516 = vunpack.c.l.s4 1934713408
      %v517 = vunpack.c.0.s8 %v516
      %v518 = vlaneseq
      %v519 = vshrl.u32 %v518, 7
      %v520 = vsub.s32 %v517, %v519
      %v521 = vrot.slane %v507, %v520
      %v522 = vcombine.high %v498, 0.0
      %v523 = vcombine.high %v505, 0.0
      %v524 = vcombine.high %v514, 0.0
      %v525 = vcombine.high %v521, 0.0
      %v526 = vcombine.low %v498, %v505
      %v528 = vunpack.c.l.s4 1983009808
      %v529 = vunpack.c.0.s8 %v528
      %v530 = vlaneseq
      %v531 = vshrl.u32 %v530, 7
      %v532 = vsub.s32 %v529, %v531
      %v533 = vrot.slane %v526, %v532
      %v534 = vcombine.low %v522, %v523
      %v536 = vunpack.c.l.s4 1983009808
      %v537 = vunpack.c.0.s8 %v536
      %v538 = vlaneseq
      %v539 = vshrl.u32 %v538, 7
      %v540 = vsub.s32 %v537, %v539
      %v541 = vrot.slane %v534, %v540
      %v542 = vcombine.low %v514, %v521
      %v544 = vunpack.c.l.s4 1983009808
      %v545 = vunpack.c.0.s8 %v544
      %v546 = vlaneseq
      %v547 = vshrl.u32 %v546, 7
      %v548 = vsub.s32 %v545, %v547
      %v549 = vrot.slane %v542, %v548
      %v550 = vcombine.low %v524, %v525
      %v552 = vunpack.c.l.s4 1983009808
      %v553 = vunpack.c.0.s8 %v552
      %v554 = vlaneseq
      %v555 = vshrl.u32 %v554, 7
      %v556 = vsub.s32 %v553, %v555
      %v557 = vrot.slane %v550, %v556
      %v558 = vcombine.low %v533, %v541
      %v559 = vcombine.high %v533, %v541
      %v561 = vunpack.c.l.s4 1934713408
      %v562 = vunpack.c.0.s8 %v561
      %v563 = vlaneseq
      %v564 = vshrl.u32 %v563, 7
      %v565 = vsub.s32 %v562, %v564
      %v566 = vrot.slane %v558, %v565
      %v568 = vunpack.c.l.s4 1934713408
      %v569 = vunpack.c.0.s8 %v568
      %v570 = vlaneseq
      %v571 = vshrl.u32 %v570, 7
      %v572 = vsub.s32 %v569, %v571
      %v573 = vrot.slane %v559, %v572
      %v574 = vcombine.low %v549, %v557
      %v575 = vcombine.high %v549, %v557
      %v577 = vunpack.c.l.s4 1934713408
      %v578 = vunpack.c.0.s8 %v577
      %v579 = vlaneseq
      %v580 = vshrl.u32 %v579, 7
      %v581 = vsub.s32 %v578, %v580
      %v582 = vrot.slane %v574, %v581
      %v584 = vunpack.c.l.s4 1934713408
      %v585 = vunpack.c.0.s8 %v584
      %v586 = vlaneseq
      %v587 = vshrl.u32 %v586, 7
      %v588 = vsub.s32 %v585, %v587
      %v589 = vrot.slane %v575, %v588
      %v590 = vcombine.low %v566, %v582
      %v591 = vcombine.high %v566, %v582
      %v592 = vcombine.low %v573, %v589
      %v593 = vcombine.high %v573, %v589
      %v594 = vpack.c.bf16 %v590, %v590
      %v595 = vpack.c.bf16 %v591, %v591
      %v596 = vpack.c.bf16 %v592, %v592
      %v597 = vpack.c.bf16 %v593, %v593
      %598 = vrot.lane.b32.xlu0 %v443, 96
      %v599 = vpop.permute.xlu0 %598
      %600 = vrot.lane.b32.xlu0 %v450, 96
      %v601 = vpop.permute.xlu0 %600
      %602 = vrot.lane.b32.xlu0 %v453, 96
      %v603 = vpop.permute.xlu0 %602
      %604 = vrot.lane.b32.xlu0 %v456, 96
      %v605 = vpop.permute.xlu0 %604
      %v610 = vcombine.low %v599, %v603
      %v611 = vcombine.high %v599, %v603
      %v613 = vunpack.c.l.s4 1983009808
      %v614 = vunpack.c.0.s8 %v613
      %v615 = vlaneseq
      %v616 = vshrl.u32 %v615, 7
      %v617 = vsub.s32 %v614, %v616
      %v618 = vrot.slane %v610, %v617
      %v620 = vunpack.c.l.s4 1983009808
      %v621 = vunpack.c.0.s8 %v620
      %v622 = vlaneseq
      %v623 = vshrl.u32 %v622, 7
      %v624 = vsub.s32 %v621, %v623
      %v625 = vrot.slane %v611, %v624
      %v626 = vcombine.low %v601, %v605
      %v627 = vcombine.high %v601, %v605
      %v629 = vunpack.c.l.s4 1983009808
      %v630 = vunpack.c.0.s8 %v629
      %v631 = vlaneseq
      %v632 = vshrl.u32 %v631, 7
      %v633 = vsub.s32 %v630, %v632
      %v634 = vrot.slane %v626, %v633
      %v636 = vunpack.c.l.s4 1983009808
      %v637 = vunpack.c.0.s8 %v636
      %v638 = vlaneseq
      %v639 = vshrl.u32 %v638, 7
      %v640 = vsub.s32 %v637, %v639
      %v641 = vrot.slane %v627, %v640
      %v642 = vcombine.low %v618, %v634
      %v643 = vcombine.high %v618, %v634
      %v645 = vunpack.c.l.s4 1934713408
      %v646 = vunpack.c.0.s8 %v645
      %v647 = vlaneseq
      %v648 = vshrl.u32 %v647, 7
      %v649 = vsub.s32 %v646, %v648
      %v650 = vrot.slane %v642, %v649
      %v652 = vunpack.c.l.s4 1934713408
      %v653 = vunpack.c.0.s8 %v652
      %v654 = vlaneseq
      %v655 = vshrl.u32 %v654, 7
      %v656 = vsub.s32 %v653, %v655
      %v657 = vrot.slane %v643, %v656
      %v658 = vcombine.low %v625, %v641
      %v659 = vcombine.high %v625, %v641
      %v661 = vunpack.c.l.s4 1934713408
      %v662 = vunpack.c.0.s8 %v661
      %v663 = vlaneseq
      %v664 = vshrl.u32 %v663, 7
      %v665 = vsub.s32 %v662, %v664
      %v666 = vrot.slane %v658, %v665
      %v668 = vunpack.c.l.s4 1934713408
      %v669 = vunpack.c.0.s8 %v668
      %v670 = vlaneseq
      %v671 = vshrl.u32 %v670, 7
      %v672 = vsub.s32 %v669, %v671
      %v673 = vrot.slane %v659, %v672
      %v674 = vcombine.high %v650, 0.0
      %v675 = vcombine.high %v657, 0.0
      %v676 = vcombine.high %v666, 0.0
      %v677 = vcombine.high %v673, 0.0
      %v678 = vcombine.low %v650, %v657
      %v680 = vunpack.c.l.s4 1983009808
      %v681 = vunpack.c.0.s8 %v680
      %v682 = vlaneseq
      %v683 = vshrl.u32 %v682, 7
      %v684 = vsub.s32 %v681, %v683
      %v685 = vrot.slane %v678, %v684
      %v686 = vcombine.low %v674, %v675
      %v688 = vunpack.c.l.s4 1983009808
      %v689 = vunpack.c.0.s8 %v688
      %v690 = vlaneseq
      %v691 = vshrl.u32 %v690, 7
      %v692 = vsub.s32 %v689, %v691
      %v693 = vrot.slane %v686, %v692
      %v694 = vcombine.low %v666, %v673
      %v696 = vunpack.c.l.s4 1983009808
      %v697 = vunpack.c.0.s8 %v696
      %v698 = vlaneseq
      %v699 = vshrl.u32 %v698, 7
      %v700 = vsub.s32 %v697, %v699
      %v701 = vrot.slane %v694, %v700
      %v702 = vcombine.low %v676, %v677
      %v704 = vunpack.c.l.s4 1983009808
      %v705 = vunpack.c.0.s8 %v704
      %v706 = vlaneseq
      %v707 = vshrl.u32 %v706, 7
      %v708 = vsub.s32 %v705, %v707
      %v709 = vrot.slane %v702, %v708
      %v710 = vcombine.low %v685, %v693
      %v711 = vcombine.high %v685, %v693
      %v713 = vunpack.c.l.s4 1934713408
      %v714 = vunpack.c.0.s8 %v713
      %v715 = vlaneseq
      %v716 = vshrl.u32 %v715, 7
      %v717 = vsub.s32 %v714, %v716
      %v718 = vrot.slane %v710, %v717
      %v720 = vunpack.c.l.s4 1934713408
      %v721 = vunpack.c.0.s8 %v720
      %v722 = vlaneseq
      %v723 = vshrl.u32 %v722, 7
      %v724 = vsub.s32 %v721, %v723
      %v725 = vrot.slane %v711, %v724
      %v726 = vcombine.low %v701, %v709
      %v727 = vcombine.high %v701, %v709
      %v729 = vunpack.c.l.s4 1934713408
      %v730 = vunpack.c.0.s8 %v729
      %v731 = vlaneseq
      %v732 = vshrl.u32 %v731, 7
      %v733 = vsub.s32 %v730, %v732
      %v734 = vrot.slane %v726, %v733
      %v736 = vunpack.c.l.s4 1934713408
      %v737 = vunpack.c.0.s8 %v736
      %v738 = vlaneseq
      %v739 = vshrl.u32 %v738, 7
      %v740 = vsub.s32 %v737, %v739
      %v741 = vrot.slane %v727, %v740
      %v742 = vcombine.low %v718, %v734
      %v743 = vcombine.high %v718, %v734
      %v744 = vcombine.low %v725, %v741
      %v745 = vcombine.high %v725, %v741
      %v746 = vpack.c.bf16 %v742, %v742
      %v747 = vpack.c.bf16 %v743, %v743
      %v748 = vpack.c.bf16 %v744, %v744
      %v749 = vpack.c.bf16 %v745, %v745
      %750 = vrot.lane.b32.xlu0 %v443, 64
      %v751 = vpop.permute.xlu0 %750
      %752 = vrot.lane.b32.xlu0 %v450, 64
      %v753 = vpop.permute.xlu0 %752
      %754 = vrot.lane.b32.xlu0 %v453, 64
      %v755 = vpop.permute.xlu0 %754
      %756 = vrot.lane.b32.xlu0 %v456, 64
      %v757 = vpop.permute.xlu0 %756
      %v762 = vcombine.low %v751, %v755
      %v763 = vcombine.high %v751, %v755
      %v765 = vunpack.c.l.s4 1983009808
      %v766 = vunpack.c.0.s8 %v765
      %v767 = vlaneseq
      %v768 = vshrl.u32 %v767, 7
      %v769 = vsub.s32 %v766, %v768
      %v770 = vrot.slane %v762, %v769
      %v772 = vunpack.c.l.s4 1983009808
      %v773 = vunpack.c.0.s8 %v772
      %v774 = vlaneseq
      %v775 = vshrl.u32 %v774, 7
      %v776 = vsub.s32 %v773, %v775
      %v777 = vrot.slane %v763, %v776
      %v778 = vcombine.low %v753, %v757
      %v779 = vcombine.high %v753, %v757
      %v781 = vunpack.c.l.s4 1983009808
      %v782 = vunpack.c.0.s8 %v781
      %v783 = vlaneseq
      %v784 = vshrl.u32 %v783, 7
      %v785 = vsub.s32 %v782, %v784
      %v786 = vrot.slane %v778, %v785
      %v788 = vunpack.c.l.s4 1983009808
      %v789 = vunpack.c.0.s8 %v788
      %v790 = vlaneseq
      %v791 = vshrl.u32 %v790, 7
      %v792 = vsub.s32 %v789, %v791
      %v793 = vrot.slane %v779, %v792
      %v794 = vcombine.low %v770, %v786
      %v795 = vcombine.high %v770, %v786
      %v797 = vunpack.c.l.s4 1934713408
      %v798 = vunpack.c.0.s8 %v797
      %v799 = vlaneseq
      %v800 = vshrl.u32 %v799, 7
      %v801 = vsub.s32 %v798, %v800
      %v802 = vrot.slane %v794, %v801
      %v804 = vunpack.c.l.s4 1934713408
      %v805 = vunpack.c.0.s8 %v804
      %v806 = vlaneseq
      %v807 = vshrl.u32 %v806, 7
      %v808 = vsub.s32 %v805, %v807
      %v809 = vrot.slane %v795, %v808
      %v810 = vcombine.low %v777, %v793
      %v811 = vcombine.high %v777, %v793
      %v813 = vunpack.c.l.s4 1934713408
      %v814 = vunpack.c.0.s8 %v813
      %v815 = vlaneseq
      %v816 = vshrl.u32 %v815, 7
      %v817 = vsub.s32 %v814, %v816
      %v818 = vrot.slane %v810, %v817
      %v820 = vunpack.c.l.s4 1934713408
      %v821 = vunpack.c.0.s8 %v820
      %v822 = vlaneseq
      %v823 = vshrl.u32 %v822, 7
      %v824 = vsub.s32 %v821, %v823
      %v825 = vrot.slane %v811, %v824
      %v826 = vcombine.high %v802, 0.0
      %v827 = vcombine.high %v809, 0.0
      %v828 = vcombine.high %v818, 0.0
      %v829 = vcombine.high %v825, 0.0
      %v830 = vcombine.low %v802, %v809
      %v832 = vunpack.c.l.s4 1983009808
      %v833 = vunpack.c.0.s8 %v832
      %v834 = vlaneseq
      %v835 = vshrl.u32 %v834, 7
      %v836 = vsub.s32 %v833, %v835
      %v837 = vrot.slane %v830, %v836
      %v838 = vcombine.low %v826, %v827
      %v840 = vunpack.c.l.s4 1983009808
      %v841 = vunpack.c.0.s8 %v840
      %v842 = vlaneseq
      %v843 = vshrl.u32 %v842, 7
      %v844 = vsub.s32 %v841, %v843
      %v845 = vrot.slane %v838, %v844
      %v846 = vcombine.low %v818, %v825
      %v848 = vunpack.c.l.s4 1983009808
      %v849 = vunpack.c.0.s8 %v848
      %v850 = vlaneseq
      %v851 = vshrl.u32 %v850, 7
      %v852 = vsub.s32 %v849, %v851
      %v853 = vrot.slane %v846, %v852
      %v854 = vcombine.low %v828, %v829
      %v856 = vunpack.c.l.s4 1983009808
      %v857 = vunpack.c.0.s8 %v856
      %v858 = vlaneseq
      %v859 = vshrl.u32 %v858, 7
      %v860 = vsub.s32 %v857, %v859
      %v861 = vrot.slane %v854, %v860
      %v862 = vcombine.low %v837, %v845
      %v863 = vcombine.high %v837, %v845
      %v865 = vunpack.c.l.s4 1934713408
      %v866 = vunpack.c.0.s8 %v865
      %v867 = vlaneseq
      %v868 = vshrl.u32 %v867, 7
      %v869 = vsub.s32 %v866, %v868
      %v870 = vrot.slane %v862, %v869
      %v872 = vunpack.c.l.s4 1934713408
      %v873 = vunpack.c.0.s8 %v872
      %v874 = vlaneseq
      %v875 = vshrl.u32 %v874, 7
      %v876 = vsub.s32 %v873, %v875
      %v877 = vrot.slane %v863, %v876
      %v878 = vcombine.low %v853, %v861
      %v879 = vcombine.high %v853, %v861
      %v881 = vunpack.c.l.s4 1934713408
      %v882 = vunpack.c.0.s8 %v881
      %v883 = vlaneseq
      %v884 = vshrl.u32 %v883, 7
      %v885 = vsub.s32 %v882, %v884
      %v886 = vrot.slane %v878, %v885
      %v888 = vunpack.c.l.s4 1934713408
      %v889 = vunpack.c.0.s8 %v888
      %v890 = vlaneseq
      %v891 = vshrl.u32 %v890, 7
      %v892 = vsub.s32 %v889, %v891
      %v893 = vrot.slane %v879, %v892
      %v894 = vcombine.low %v870, %v886
      %v895 = vcombine.high %v870, %v886
      %v896 = vcombine.low %v877, %v893
      %v897 = vcombine.high %v877, %v893
      %v898 = vpack.c.bf16 %v894, %v894
      %v899 = vpack.c.bf16 %v895, %v895
      %v900 = vpack.c.bf16 %v896, %v896
      %v901 = vpack.c.bf16 %v897, %v897
      %vm902 = vcmask 60416
      %903 = vst.msk [vmem:[%s331] sm:$0xf] %vm902, %v594
      %904 = vst.msk [vmem:[%s331 + $0x4] sm:$0xf] %vm902, %v595
      %905 = vst.msk [vmem:[%s331 + $0x8] sm:$0xf] %vm902, %v596
      %906 = vst.msk [vmem:[%s331 + $0xc] sm:$0xf] %vm902, %v597
      %907 = vxpose.xlu0.c.b16.start [1/8] %v746, 128
      %908 = vxpose.xlu0.c.b16.cont [2/8] 0, 128
      %909 = vxpose.xlu0.c.b16.cont [3/8] 0, 128
      %910 = vxpose.xlu0.c.b16.cont [4/8] 0, 128
      %911 = vxpose.xlu0.c.b16.cont [5/8] 0, 128
      %912 = vxpose.xlu0.c.b16.cont [6/8] 0, 128
      %913 = vxpose.xlu0.c.b16.cont [7/8] 0, 128
      %914 = vxpose.xlu0.c.b16.end [8/8] 0, 128
      %v915 = vpop.trf.xlu0
      %v916 = vpop.trf.xlu0
      %v917 = vpop.trf.xlu0
      %v918 = vpop.trf.xlu0
      %v919 = vpop.trf.xlu0
      %v920 = vpop.trf.xlu0
      %v921 = vpop.trf.xlu0
      %v922 = vpop.trf.xlu0
      %923 = vxpose.xlu0.c.b16.start [1/8] %v747, 128
      %924 = vxpose.xlu0.c.b16.cont [2/8] 0, 128
      %925 = vxpose.xlu0.c.b16.cont [3/8] 0, 128
      %926 = vxpose.xlu0.c.b16.cont [4/8] 0, 128
      %927 = vxpose.xlu0.c.b16.cont [5/8] 0, 128
      %928 = vxpose.xlu0.c.b16.cont [6/8] 0, 128
      %929 = vxpose.xlu0.c.b16.cont [7/8] 0, 128
      %930 = vxpose.xlu0.c.b16.end [8/8] 0, 128
      %v931 = vpop.trf.xlu0
      %v932 = vpop.trf.xlu0
      %v933 = vpop.trf.xlu0
      %v934 = vpop.trf.xlu0
      %v935 = vpop.trf.xlu0
      %v936 = vpop.trf.xlu0
      %v937 = vpop.trf.xlu0
      %v938 = vpop.trf.xlu0
      %939 = vxpose.xlu0.c.b16.start [1/8] %v748, 128
      %940 = vxpose.xlu0.c.b16.cont [2/8] 0, 128
      %941 = vxpose.xlu0.c.b16.cont [3/8] 0, 128
      %942 = vxpose.xlu0.c.b16.cont [4/8] 0, 128
      %943 = vxpose.xlu0.c.b16.cont [5/8] 0, 128
      %944 = vxpose.xlu0.c.b16.cont [6/8] 0, 128
      %945 = vxpose.xlu0.c.b16.cont [7/8] 0, 128
      %946 = vxpose.xlu0.c.b16.end [8/8] 0, 128
      %v947 = vpop.trf.xlu0
      %v948 = vpop.trf.xlu0
      %v949 = vpop.trf.xlu0
      %v950 = vpop.trf.xlu0
      %v951 = vpop.trf.xlu0
      %v952 = vpop.trf.xlu0
      %v953 = vpop.trf.xlu0
      %v954 = vpop.trf.xlu0
      %955 = vxpose.xlu0.c.b16.start [1/8] %v749, 128
      %956 = vxpose.xlu0.c.b16.cont [2/8] 0, 128
      %957 = vxpose.xlu0.c.b16.cont [3/8] 0, 128
      %958 = vxpose.xlu0.c.b16.cont [4/8] 0, 128
      %959 = vxpose.xlu0.c.b16.cont [5/8] 0, 128
      %960 = vxpose.xlu0.c.b16.cont [6/8] 0, 128
      %961 = vxpose.xlu0.c.b16.cont [7/8] 0, 128
      %962 = vxpose.xlu0.c.b16.end [8/8] 0, 128
      %v963 = vpop.trf.xlu0
      %v964 = vpop.trf.xlu0
      %v965 = vpop.trf.xlu0
      %v966 = vpop.trf.xlu0
      %v967 = vpop.trf.xlu0
      %v968 = vpop.trf.xlu0
      %v969 = vpop.trf.xlu0
      %v970 = vpop.trf.xlu0
      %971 = vst.msk [vmem:[%s339] sm:$0xf] %vm902, %v915
      %972 = vst.msk [vmem:[%s339 + $0x4] sm:$0xf] %vm902, %v931
      %973 = vst.msk [vmem:[%s339 + $0x8] sm:$0xf] %vm902, %v947
      %974 = vst.msk [vmem:[%s339 + $0xc] sm:$0xf] %vm902, %v963
      %975 = vst.msk [vmem:[%s347] sm:$0xf] %vm902, %v898
      %976 = vst.msk [vmem:[%s347 + $0x4] sm:$0xf] %vm902, %v899
      %977 = vst.msk [vmem:[%s347 + $0x8] sm:$0xf] %vm902, %v900
      %978 = vst.msk [vmem:[%s347 + $0xc] sm:$0xf] %vm902, %v901
      %p979 = scmp.lt.s32.totalorder %s23, 1
      %s980 = scalar_select %p979, %s23, 1
      %p981 = scmp.lt.s32.totalorder %s24, 0
      %s982 = scalar_select %p981, %s24, 0
      %s983 = smul.addr %s980, 4
      %s984 = sadd.s32 %s982, %s983
      %s985 = smul.addr %s984, 4
      %s986 = scalar_lea.vmem %s5, %s985
      %p987 = scmp.lt.s32.totalorder %s23, 1
      %s988 = scalar_select %p987, %s23, 1
      %p989 = scmp.lt.s32.totalorder %s24, 0
      %s990 = scalar_select %p989, %s24, 0
      %s991 = smul.addr %s988, 4
      %s992 = sadd.s32 %s990, %s991
      %s993 = smul.addr %s992, 4
      %s994 = scalar_lea.vmem %s6, %s993
      %p995 = scmp.lt.s32.totalorder %s23, 1
      %s996 = scalar_select %p995, %s23, 1
      %p997 = scmp.lt.s32.totalorder %s24, 0
      %s998 = scalar_select %p997, %s24, 0
      %s999 = smul.addr %s996, 4
      %s1000 = sadd.s32 %s998, %s999
      %s1001 = smul.addr %s1000, 4
      %s1002 = scalar_lea.vmem %s7, %s1001
      // Predicated region
      $region41: #{transformer_forward.4} parent=39 // pred_check
        %p1003 = pneg %p163
      $region42: #{transformer_forward.4} parent=39 // pred_check_branch
        %1005 = sbr.rel (%p1003) target = $region44
      $region43: #{transformer_forward.4} parent=39 // pred_region
        _
      $region44: #{transformer_forward.4} parent=39 // pred_fallthru
        _
      // Predicated region
      $region45: #{transformer_forward.4} parent=39 // pred_check
        %p1006 = pneg %p191
      $region46: #{transformer_forward.4} parent=39 // pred_check_branch
        %1008 = sbr.rel (%p1006) target = $region48
      $region47: #{transformer_forward.4} parent=39 // pred_region
        _
      $region48: #{transformer_forward.4} parent=39 // pred_fallthru
        _
      // Predicated region
      $region49: #{transformer_forward.4} parent=39 // pred_check
        %p1009 = pneg %p219
      $region50: #{transformer_forward.4} parent=39 // pred_check_branch
        %1011 = sbr.rel (%p1009) target = $region52
      $region51: #{transformer_forward.4} parent=39 // pred_region
        _
      $region52: #{transformer_forward.4} parent=39 // pred_fallthru
        _
    $region40: #{transformer_forward.4} parent=5 // pred_fallthru
      _
    %p1012 = scmp.le.s32.totalorder 2, %s14
    // Predicated region
    $region53: #{transformer_forward.4} parent=5 // pred_check
      %p1013 = pneg %p1012
    $region54: #{transformer_forward.4} parent=5 // pred_check_branch
      %1015 = sbr.rel (%p1013) target = $region56
    $region55: #{transformer_forward.4} parent=5 // pred_region
      %s1016 = ssub.s32 %s14, 2
      // Predicated region
      $region57: #{transformer_forward.4} parent=55 // pred_check
        %p1017 = pneg %p169
      $region58: #{transformer_forward.4} parent=55 // pred_check_branch
        %1019 = sbr.rel (%p1017) target = $region60
      $region59: #{transformer_forward.4} parent=55 // pred_region
        %p1020 = scmp.lt.s32.totalorder %s25, 1
        %s1021 = scalar_select %p1020, %s25, 1
        %p1022 = scmp.lt.s32.totalorder %s26, 0
        %s1023 = scalar_select %p1022, %s26, 0
        %s1024 = smul.addr %s1021, 4
        %s1025 = sadd.s32 %s1023, %s1024
        %s1026 = smul.addr %s1025, 4
        %s1027 = scalar_lea.vmem %s5, %s1026
      $region60: #{transformer_forward.4} parent=55 // pred_fallthru
        _
      // Predicated region
      $region61: #{transformer_forward.4} parent=55 // pred_check
        %p1028 = pneg %p197
      $region62: #{transformer_forward.4} parent=55 // pred_check_branch
        %1030 = sbr.rel (%p1028) target = $region64
      $region63: #{transformer_forward.4} parent=55 // pred_region
        %p1031 = scmp.lt.s32.totalorder %s25, 1
        %s1032 = scalar_select %p1031, %s25, 1
        %p1033 = scmp.lt.s32.totalorder %s26, 0
        %s1034 = scalar_select %p1033, %s26, 0
        %s1035 = smul.addr %s1032, 4
        %s1036 = sadd.s32 %s1034, %s1035
        %s1037 = smul.addr %s1036, 4
        %s1038 = scalar_lea.vmem %s6, %s1037
      $region64: #{transformer_forward.4} parent=55 // pred_fallthru
        _
      // Predicated region
      $region65: #{transformer_forward.4} parent=55 // pred_check
        %p1039 = pneg %p225
      $region66: #{transformer_forward.4} parent=55 // pred_check_branch
        %1041 = sbr.rel (%p1039) target = $region68
      $region67: #{transformer_forward.4} parent=55 // pred_region
        %p1042 = scmp.lt.s32.totalorder %s25, 1
        %s1043 = scalar_select %p1042, %s25, 1
        %p1044 = scmp.lt.s32.totalorder %s26, 0
        %s1045 = scalar_select %p1044, %s26, 0
        %s1046 = smul.addr %s1043, 4
        %s1047 = sadd.s32 %s1045, %s1046
        %s1048 = smul.addr %s1047, 4
        %s1049 = scalar_lea.vmem %s7, %s1048
      $region68: #{transformer_forward.4} parent=55 // pred_fallthru
        _
    $region56: #{transformer_forward.4} parent=5 // pred_fallthru
      _
  $region6: #{transformer_forward.4} parent=0 // loop_footer
    %s18 = sadd.s32 1, %s14
  $region7: #{transformer_forward.4} parent=0 // loop_footer_branch
    %13 = sbr.rel target = $region3
  $region8: #{transformer_forward.4} parent=0 // loop_exit
    _

// kernel: transformer_forward.5
$region0: #{transformer_forward.5}
  #allocation0 [shape = 'u32[]', space=smem, size = 0x4, offset = 0x4, fixed_abs, tag = 'smem constant byte address 0x4 - core index']
  #allocation1 [shape = 'u32[144,128]{1,0:T(1,128)}', space=vmem, size = 0x12000, scoped, tag = 'internal scratch']
  %s0 = inlined_call_operand.vmem [shape: f32[2,8,32], index: 0, kind: input, shape index: {}]
  %s1 = inlined_call_operand.vmem [shape: bf16[2,4,8,8], index: 1, kind: input, shape index: {}]
  %s2 = inlined_call_operand.vmem [shape: bf16[2,4,8,8], index: 2, kind: input, shape index: {}]
  %s3 = inlined_call_operand.vmem [shape: bf16[2,4,8,8], index: 3, kind: input, shape index: {}]
  %s4 = inlined_call_operand.vmem [shape: bf16[32,32], index: 4, kind: input, shape index: {}]
  %s5 = inlined_call_operand.vmem [shape: f32[1,32], index: 5, kind: input, shape index: {}]
  %s6 = inlined_call_operand.vmem [shape: f32[1,32], index: 6, kind: input, shape index: {}]
  %s7 = inlined_call_operand.vmem [shape: f32[1,32], index: 7, kind: input, shape index: {}]
  %s8 = inlined_call_operand.vmem [shape: bf16[32,128], index: 8, kind: input, shape index: {}]
  %s9 = inlined_call_operand.vmem [shape: f32[1,128], index: 9, kind: input, shape index: {}]
  %s10 = inlined_call_operand.vmem [shape: bf16[128,32], index: 10, kind: input, shape index: {}]
  %s11 = inlined_call_operand.vmem [shape: f32[1,32], index: 11, kind: input, shape index: {}]
  %s12 = inlined_call_operand.vmem [shape: f32[2,8,32], index: 12, kind: output, shape index: {}]
  %s13 = sld [smem:[#allocation0]]
  $region81: #{transformer_forward.5} parent=0
    _
  %s15 = ssub.s32 1, %s13
  %s16 = scalar_select 0, %s15, %s13
  loop: start=0, step=1, limit=4
  $region2: #{transformer_forward.5} parent=0 // loop_pre_header
    _
  $region3: #{transformer_forward.5} parent=0 // loop_header
    %s18 = sphi 0, %s22
    %p19 = scmp.ge.s32.totalorder %s18, 4
    %s25 = sphi 0, %s37
    %s26 = sphi 0, %s33
    %s27 = sphi 0, %s25
    %s28 = sphi 0, %s26
    %s29 = sphi 0, %s27
    %s30 = sphi 0, %s28
    %s42 = sphi 0, %s44
    %s45 = sphi 0, %s42
    %s46 = sphi 0, %s45
    %s62 = sphi 0, %s46
    %s70 = sphi 0, %s72
    %s73 = sphi 0, %s70
    %s74 = sphi 0, %s73
    %s90 = sphi 0, %s74
    %s96 = sphi 0, %s98
    %s99 = sphi 0, %s96
    %s100 = sphi 0, %s99
    %s116 = sphi 0, %s100
    %s122 = sphi 0, %s124
    %s125 = sphi 0, %s122
    %s126 = sphi 0, %s125
    %s142 = sphi 0, %s126
    %s146 = sphi 0, %s146
    %s148 = sphi 0, %s146
    %s149 = sphi 0, %s148
    %s163 = sphi 0, %s149
    %s167 = sphi 0, %s167
    %s169 = sphi 0, %s167
    %s170 = sphi 0, %s169
    %s184 = sphi 0, %s170
    %s188 = sphi 0, %s188
    %s190 = sphi 0, %s188
    %s191 = sphi 0, %s190
    %s205 = sphi 0, %s191
    %s209 = sphi 0, %s209
    %s211 = sphi 0, %s209
    %s212 = sphi 0, %s211
    %s226 = sphi 0, %s212
    %s230 = sphi 0, %s230
    %s232 = sphi 0, %s230
    %s233 = sphi 0, %s232
    %s247 = sphi 0, %s233
    %s251 = sphi 0, %s251
    %s253 = sphi 0, %s251
    %s254 = sphi 0, %s253
    %s268 = sphi 0, %s254
    %s272 = sphi 0, %s272
    %s274 = sphi 0, %s272
    %s275 = sphi 0, %s274
    %s289 = sphi 0, %s275
    %s293 = sphi 0, %s293
    %s295 = sphi 0, %s293
    %s296 = sphi 0, %s295
    %s310 = sphi 0, %s296
    %s318 = sphi 0, %s320
    %s321 = sphi 0, %s318
    %s322 = sphi 0, %s321
    %s338 = sphi 0, %s322
  $region4: #{transformer_forward.5} parent=0 // loop_header_branch
    %21 = sbr.rel (%p19) target = $region8
  $region5: #{transformer_forward.5} parent=0 // loop_body
    %s23 = ssub.s32 %s18, 1
    %s24 = ssub.s32 %s18, 2
    %s31 = sadd.s32 1, %s26
    %p32 = scmp.ge.s32.totalorder %s31, 1
    %s33 = scalar_select %p32, 0, %s31
    %s34 = sadd.s32 1, %s25
    %s35 = scalar_select %p32, %s34, %s25
    %p36 = scmp.ge.s32.totalorder %s35, 2
    %s37 = scalar_select %p36, 0, %s35
    %s38 = ssub.s32 %s25, %s37
    %s39 = ssub.s32 %s26, %s33
    %s40 = sor.u32 %s38, %s39
    %p41 = scmp.eq.s32.totalorder %s40, 0
    %s43 = sadd.s32 %s42, 1
    %s44 = scalar_select %p41, %s42, %s43
    %p47 = pneg %p41
    %p48 = scmp.eq.s32.totalorder %s18, 1
    %p49 = por %p47, %p48
    %p50 = scmp.ne.s32.totalorder %s42, %s45
    %p51 = scmp.eq.s32.totalorder %s18, 0
    %p52 = por %p50, %p51
    %p53 = scmp.ne.s32.totalorder %s42, %s45
    %p54 = scmp.eq.s32.totalorder %s23, 1
    %p55 = por %p53, %p54
    %p56 = scmp.ne.s32.totalorder %s45, %s46
    %p57 = scmp.eq.s32.totalorder %s23, 0
    %p58 = por %p56, %p57
    %p59 = scmp.ne.s32.totalorder %s45, %s46
    %p60 = scmp.eq.s32.totalorder %s24, 1
    %p61 = por %p59, %p60
    %p63 = scmp.ne.s32.totalorder %s46, %s62
    %p64 = scmp.eq.s32.totalorder %s24, 0
    %p65 = por %p63, %p64
    %s66 = ssub.s32 %s25, %s37
    %s67 = ssub.s32 %s26, %s33
    %s68 = sor.u32 %s66, %s67
    %p69 = scmp.eq.s32.totalorder %s68, 0
    %s71 = sadd.s32 %s70, 1
    %s72 = scalar_select %p69, %s70, %s71
    %p75 = pneg %p69
    %p76 = scmp.eq.s32.totalorder %s18, 1
    %p77 = por %p75, %p76
    %p78 = scmp.ne.s32.totalorder %s70, %s73
    %p79 = scmp.eq.s32.totalorder %s18, 0
    %p80 = por %p78, %p79
    %p81 = scmp.ne.s32.totalorder %s70, %s73
    %p82 = scmp.eq.s32.totalorder %s23, 1
    %p83 = por %p81, %p82
    %p84 = scmp.ne.s32.totalorder %s73, %s74
    %p85 = scmp.eq.s32.totalorder %s23, 0
    %p86 = por %p84, %p85
    %p87 = scmp.ne.s32.totalorder %s73, %s74
    %p88 = scmp.eq.s32.totalorder %s24, 1
    %p89 = por %p87, %p88
    %p91 = scmp.ne.s32.totalorder %s74, %s90
    %p92 = scmp.eq.s32.totalorder %s24, 0
    %p93 = por %p91, %p92
    %s94 = ssub.s32 %s25, %s37
    %p95 = scmp.eq.s32.totalorder %s94, 0
    %s97 = sadd.s32 %s96, 1
    %s98 = scalar_select %p95, %s96, %s97
    %p101 = pneg %p95
    %p102 = scmp.eq.s32.totalorder %s18, 1
    %p103 = por %p101, %p102
    %p104 = scmp.ne.s32.totalorder %s96, %s99
    %p105 = scmp.eq.s32.totalorder %s18, 0
    %p106 = por %p104, %p105
    %p107 = scmp.ne.s32.totalorder %s96, %s99
    %p108 = scmp.eq.s32.totalorder %s23, 1
    %p109 = por %p107, %p108
    %p110 = scmp.ne.s32.totalorder %s99, %s100
    %p111 = scmp.eq.s32.totalorder %s23, 0
    %p112 = por %p110, %p111
    %p113 = scmp.ne.s32.totalorder %s99, %s100
    %p114 = scmp.eq.s32.totalorder %s24, 1
    %p115 = por %p113, %p114
    %p117 = scmp.ne.s32.totalorder %s100, %s116
    %p118 = scmp.eq.s32.totalorder %s24, 0
    %p119 = por %p117, %p118
    %s120 = ssub.s32 %s25, %s37
    %p121 = scmp.eq.s32.totalorder %s120, 0
    %s123 = sadd.s32 %s122, 1
    %s124 = scalar_select %p121, %s122, %s123
    %p127 = pneg %p121
    %p128 = scmp.eq.s32.totalorder %s18, 1
    %p129 = por %p127, %p128
    %p130 = scmp.ne.s32.totalorder %s122, %s125
    %p131 = scmp.eq.s32.totalorder %s18, 0
    %p132 = por %p130, %p131
    %p133 = scmp.ne.s32.totalorder %s122, %s125
    %p134 = scmp.eq.s32.totalorder %s23, 1
    %p135 = por %p133, %p134
    %p136 = scmp.ne.s32.totalorder %s125, %s126
    %p137 = scmp.eq.s32.totalorder %s23, 0
    %p138 = por %p136, %p137
    %p139 = scmp.ne.s32.totalorder %s125, %s126
    %p140 = scmp.eq.s32.totalorder %s24, 1
    %p141 = por %p139, %p140
    %p143 = scmp.ne.s32.totalorder %s126, %s142
    %p144 = scmp.eq.s32.totalorder %s24, 0
    %p145 = por %p143, %p144
    %s147 = sadd.s32 %s146, 1
    %p150 = scmp.eq.s32.totalorder %s18, 1
    %p151 = scmp.ne.s32.totalorder %s146, %s148
    %p152 = scmp.eq.s32.totalorder %s18, 0
    %p153 = por %p151, %p152
    %p154 = scmp.ne.s32.totalorder %s146, %s148
    %p155 = scmp.eq.s32.totalorder %s23, 1
    %p156 = por %p154, %p155
    %p157 = scmp.ne.s32.totalorder %s148, %s149
    %p158 = scmp.eq.s32.totalorder %s23, 0
    %p159 = por %p157, %p158
    %p160 = scmp.ne.s32.totalorder %s148, %s149
    %p161 = scmp.eq.s32.totalorder %s24, 1
    %p162 = por %p160, %p161
    %p164 = scmp.ne.s32.totalorder %s149, %s163
    %p165 = scmp.eq.s32.totalorder %s24, 0
    %p166 = por %p164, %p165
    %s168 = sadd.s32 %s167, 1
    %p171 = scmp.eq.s32.totalorder %s18, 1
    %p172 = scmp.ne.s32.totalorder %s167, %s169
    %p173 = scmp.eq.s32.totalorder %s18, 0
    %p174 = por %p172, %p173
    %p175 = scmp.ne.s32.totalorder %s167, %s169
    %p176 = scmp.eq.s32.totalorder %s23, 1
    %p177 = por %p175, %p176
    %p178 = scmp.ne.s32.totalorder %s169, %s170
    %p179 = scmp.eq.s32.totalorder %s23, 0
    %p180 = por %p178, %p179
    %p181 = scmp.ne.s32.totalorder %s169, %s170
    %p182 = scmp.eq.s32.totalorder %s24, 1
    %p183 = por %p181, %p182
    %p185 = scmp.ne.s32.totalorder %s170, %s184
    %p186 = scmp.eq.s32.totalorder %s24, 0
    %p187 = por %p185, %p186
    %s189 = sadd.s32 %s188, 1
    %p192 = scmp.eq.s32.totalorder %s18, 1
    %p193 = scmp.ne.s32.totalorder %s188, %s190
    %p194 = scmp.eq.s32.totalorder %s18, 0
    %p195 = por %p193, %p194
    %p196 = scmp.ne.s32.totalorder %s188, %s190
    %p197 = scmp.eq.s32.totalorder %s23, 1
    %p198 = por %p196, %p197
    %p199 = scmp.ne.s32.totalorder %s190, %s191
    %p200 = scmp.eq.s32.totalorder %s23, 0
    %p201 = por %p199, %p200
    %p202 = scmp.ne.s32.totalorder %s190, %s191
    %p203 = scmp.eq.s32.totalorder %s24, 1
    %p204 = por %p202, %p203
    %p206 = scmp.ne.s32.totalorder %s191, %s205
    %p207 = scmp.eq.s32.totalorder %s24, 0
    %p208 = por %p206, %p207
    %s210 = sadd.s32 %s209, 1
    %p213 = scmp.eq.s32.totalorder %s18, 1
    %p214 = scmp.ne.s32.totalorder %s209, %s211
    %p215 = scmp.eq.s32.totalorder %s18, 0
    %p216 = por %p214, %p215
    %p217 = scmp.ne.s32.totalorder %s209, %s211
    %p218 = scmp.eq.s32.totalorder %s23, 1
    %p219 = por %p217, %p218
    %p220 = scmp.ne.s32.totalorder %s211, %s212
    %p221 = scmp.eq.s32.totalorder %s23, 0
    %p222 = por %p220, %p221
    %p223 = scmp.ne.s32.totalorder %s211, %s212
    %p224 = scmp.eq.s32.totalorder %s24, 1
    %p225 = por %p223, %p224
    %p227 = scmp.ne.s32.totalorder %s212, %s226
    %p228 = scmp.eq.s32.totalorder %s24, 0
    %p229 = por %p227, %p228
    %s231 = sadd.s32 %s230, 1
    %p234 = scmp.eq.s32.totalorder %s18, 1
    %p235 = scmp.ne.s32.totalorder %s230, %s232
    %p236 = scmp.eq.s32.totalorder %s18, 0
    %p237 = por %p235, %p236
    %p238 = scmp.ne.s32.totalorder %s230, %s232
    %p239 = scmp.eq.s32.totalorder %s23, 1
    %p240 = por %p238, %p239
    %p241 = scmp.ne.s32.totalorder %s232, %s233
    %p242 = scmp.eq.s32.totalorder %s23, 0
    %p243 = por %p241, %p242
    %p244 = scmp.ne.s32.totalorder %s232, %s233
    %p245 = scmp.eq.s32.totalorder %s24, 1
    %p246 = por %p244, %p245
    %p248 = scmp.ne.s32.totalorder %s233, %s247
    %p249 = scmp.eq.s32.totalorder %s24, 0
    %p250 = por %p248, %p249
    %s252 = sadd.s32 %s251, 1
    %p255 = scmp.eq.s32.totalorder %s18, 1
    %p256 = scmp.ne.s32.totalorder %s251, %s253
    %p257 = scmp.eq.s32.totalorder %s18, 0
    %p258 = por %p256, %p257
    %p259 = scmp.ne.s32.totalorder %s251, %s253
    %p260 = scmp.eq.s32.totalorder %s23, 1
    %p261 = por %p259, %p260
    %p262 = scmp.ne.s32.totalorder %s253, %s254
    %p263 = scmp.eq.s32.totalorder %s23, 0
    %p264 = por %p262, %p263
    %p265 = scmp.ne.s32.totalorder %s253, %s254
    %p266 = scmp.eq.s32.totalorder %s24, 1
    %p267 = por %p265, %p266
    %p269 = scmp.ne.s32.totalorder %s254, %s268
    %p270 = scmp.eq.s32.totalorder %s24, 0
    %p271 = por %p269, %p270
    %s273 = sadd.s32 %s272, 1
    %p276 = scmp.eq.s32.totalorder %s18, 1
    %p277 = scmp.ne.s32.totalorder %s272, %s274
    %p278 = scmp.eq.s32.totalorder %s18, 0
    %p279 = por %p277, %p278
    %p280 = scmp.ne.s32.totalorder %s272, %s274
    %p281 = scmp.eq.s32.totalorder %s23, 1
    %p282 = por %p280, %p281
    %p283 = scmp.ne.s32.totalorder %s274, %s275
    %p284 = scmp.eq.s32.totalorder %s23, 0
    %p285 = por %p283, %p284
    %p286 = scmp.ne.s32.totalorder %s274, %s275
    %p287 = scmp.eq.s32.totalorder %s24, 1
    %p288 = por %p286, %p287
    %p290 = scmp.ne.s32.totalorder %s275, %s289
    %p291 = scmp.eq.s32.totalorder %s24, 0
    %p292 = por %p290, %p291
    %s294 = sadd.s32 %s293, 1
    %p297 = scmp.eq.s32.totalorder %s18, 1
    %p298 = scmp.ne.s32.totalorder %s293, %s295
    %p299 = scmp.eq.s32.totalorder %s18, 0
    %p300 = por %p298, %p299
    %p301 = scmp.ne.s32.totalorder %s293, %s295
    %p302 = scmp.eq.s32.totalorder %s23, 1
    %p303 = por %p301, %p302
    %p304 = scmp.ne.s32.totalorder %s295, %s296
    %p305 = scmp.eq.s32.totalorder %s23, 0
    %p306 = por %p304, %p305
    %p307 = scmp.ne.s32.totalorder %s295, %s296
    %p308 = scmp.eq.s32.totalorder %s24, 1
    %p309 = por %p307, %p308
    %p311 = scmp.ne.s32.totalorder %s296, %s310
    %p312 = scmp.eq.s32.totalorder %s24, 0
    %p313 = por %p311, %p312
    %s314 = ssub.s32 %s25, %s37
    %s315 = ssub.s32 %s26, %s33
    %s316 = sor.u32 %s314, %s315
    %p317 = scmp.eq.s32.totalorder %s316, 0
    %s319 = sadd.s32 %s318, 1
    %s320 = scalar_select %p317, %s318, %s319
    %p323 = pneg %p317
    %p324 = scmp.eq.s32.totalorder %s18, 1
    %p325 = por %p323, %p324
    %p326 = scmp.ne.s32.totalorder %s318, %s321
    %p327 = scmp.eq.s32.totalorder %s18, 0
    %p328 = por %p326, %p327
    %p329 = scmp.ne.s32.totalorder %s318, %s321
    %p330 = scmp.eq.s32.totalorder %s23, 1
    %p331 = por %p329, %p330
    %p332 = scmp.ne.s32.totalorder %s321, %s322
    %p333 = scmp.eq.s32.totalorder %s23, 0
    %p334 = por %p332, %p333
    %p335 = scmp.ne.s32.totalorder %s321, %s322
    %p336 = scmp.eq.s32.totalorder %s24, 1
    %p337 = por %p335, %p336
    %p339 = scmp.ne.s32.totalorder %s322, %s338
    %p340 = scmp.eq.s32.totalorder %s24, 0
    %p341 = por %p339, %p340
    %p342 = scmp.le.s32.totalorder 1, %s18
    %p343 = scmp.lt.s32.totalorder %s18, 3
    %p344 = pnand %p342, %p343
    %p345 = pneg %p344
    // Predicated region
    $region9: #{transformer_forward.5} parent=5 // pred_check
      _
    $region10: #{transformer_forward.5} parent=5 // pred_check_branch
      %347 = sbr.rel (%p344) target = $region12
    $region11: #{transformer_forward.5} parent=5 // pred_region
      %s348 = ssub.s32 %s18, 1
      // Predicated region
      $region13: #{transformer_forward.5} parent=11 // pred_check
        %p349 = pneg %p159
      $region14: #{transformer_forward.5} parent=11 // pred_check_branch
        %351 = sbr.rel (%p349) target = $region16
      $region15: #{transformer_forward.5} parent=11 // pred_region
        _
      $region16: #{transformer_forward.5} parent=11 // pred_fallthru
        _
      // Predicated region
      $region17: #{transformer_forward.5} parent=11 // pred_check
        %p352 = pneg %p180
      $region18: #{transformer_forward.5} parent=11 // pred_check_branch
        %354 = sbr.rel (%p352) target = $region20
      $region19: #{transformer_forward.5} parent=11 // pred_region
        _
      $region20: #{transformer_forward.5} parent=11 // pred_fallthru
        _
      // Predicated region
      $region21: #{transformer_forward.5} parent=11 // pred_check
        %p355 = pneg %p201
      $region22: #{transformer_forward.5} parent=11 // pred_check_branch
        %357 = sbr.rel (%p355) target = $region24
      $region23: #{transformer_forward.5} parent=11 // pred_region
        _
      $region24: #{transformer_forward.5} parent=11 // pred_fallthru
        _
      // Predicated region
      $region25: #{transformer_forward.5} parent=11 // pred_check
        %p358 = pneg %p222
      $region26: #{transformer_forward.5} parent=11 // pred_check_branch
        %360 = sbr.rel (%p358) target = $region28
      $region27: #{transformer_forward.5} parent=11 // pred_region
        _
      $region28: #{transformer_forward.5} parent=11 // pred_fallthru
        _
      // Predicated region
      $region29: #{transformer_forward.5} parent=11 // pred_check
        %p361 = pneg %p243
      $region30: #{transformer_forward.5} parent=11 // pred_check_branch
        %363 = sbr.rel (%p361) target = $region32
      $region31: #{transformer_forward.5} parent=11 // pred_region
        _
      $region32: #{transformer_forward.5} parent=11 // pred_fallthru
        _
      // Predicated region
      $region33: #{transformer_forward.5} parent=11 // pred_check
        %p364 = pneg %p264
      $region34: #{transformer_forward.5} parent=11 // pred_check_branch
        %366 = sbr.rel (%p364) target = $region36
      $region35: #{transformer_forward.5} parent=11 // pred_region
        _
      $region36: #{transformer_forward.5} parent=11 // pred_fallthru
        _
      // Predicated region
      $region37: #{transformer_forward.5} parent=11 // pred_check
        %p367 = pneg %p285
      $region38: #{transformer_forward.5} parent=11 // pred_check_branch
        %369 = sbr.rel (%p367) target = $region40
      $region39: #{transformer_forward.5} parent=11 // pred_region
        _
      $region40: #{transformer_forward.5} parent=11 // pred_fallthru
        _
      // Predicated region
      $region41: #{transformer_forward.5} parent=11 // pred_check
        %p370 = pneg %p306
      $region42: #{transformer_forward.5} parent=11 // pred_check_branch
        %372 = sbr.rel (%p370) target = $region44
      $region43: #{transformer_forward.5} parent=11 // pred_region
        _
      $region44: #{transformer_forward.5} parent=11 // pred_fallthru
        _
    $region12: #{transformer_forward.5} parent=5 // pred_fallthru
      _
    %p373 = scmp.lt.s32.totalorder %s18, 2
    // Predicated region
    $region45: #{transformer_forward.5} parent=5 // pred_check
      %p374 = pneg %p373
    $region46: #{transformer_forward.5} parent=5 // pred_check_branch
      %376 = sbr.rel (%p374) target = $region48
    $region47: #{transformer_forward.5} parent=5 // pred_region
      // Predicated region
      $region49: #{transformer_forward.5} parent=47 // pred_check
        %p377 = pneg %p52
      $region50: #{transformer_forward.5} parent=47 // pred_check_branch
        %379 = sbr.rel (%p377) target = $region52
      $region51: #{transformer_forward.5} parent=47 // pred_region
        %p380 = scmp.lt.s32.totalorder %s25, 1
        %s381 = scalar_select %p380, %s25, 1
        %p382 = scmp.lt.s32.totalorder %s26, 0
        %s383 = scalar_select %p382, %s26, 0
        %s384 = sadd.s32 %s383, %s381
        %s385 = smul.addr %s384, 8
        %s386 = scalar_lea.vmem %s0, %s385
      $region52: #{transformer_forward.5} parent=47 // pred_fallthru
        _
      // Predicated region
      $region53: #{transformer_forward.5} parent=47 // pred_check
        %p387 = pneg %p80
      $region54: #{transformer_forward.5} parent=47 // pred_check_branch
        %389 = sbr.rel (%p387) target = $region56
      $region55: #{transformer_forward.5} parent=47 // pred_region
        %p390 = scmp.lt.s32.totalorder %s25, 1
        %s391 = scalar_select %p390, %s25, 1
        %p392 = scmp.lt.s32.totalorder %s26, 0
        %s393 = scalar_select %p392, %s26, 0
        %s394 = smul.addr %s391, 4
        %s395 = sadd.s32 %s393, %s394
        %s396 = smul.addr %s395, 4
        %s397 = scalar_lea.vmem %s1, %s396
      $region56: #{transformer_forward.5} parent=47 // pred_fallthru
        _
      // Predicated region
      $region57: #{transformer_forward.5} parent=47 // pred_check
        %p398 = pneg %p106
      $region58: #{transformer_forward.5} parent=47 // pred_check_branch
        %400 = sbr.rel (%p398) target = $region60
      $region59: #{transformer_forward.5} parent=47 // pred_region
        %p401 = scmp.lt.s32.totalorder %s25, 1
        %s402 = scalar_select %p401, %s25, 1
        %s403 = smul.addr %s402, 4
        %s404 = smul.addr %s403, 4
        %s405 = scalar_lea.vmem %s2, %s404
      $region60: #{transformer_forward.5} parent=47 // pred_fallthru
        _
      // Predicated region
      $region61: #{transformer_forward.5} parent=47 // pred_check
        %p406 = pneg %p132
      $region62: #{transformer_forward.5} parent=47 // pred_check_branch
        %408 = sbr.rel (%p406) target = $region64
      $region63: #{transformer_forward.5} parent=47 // pred_region
        %p409 = scmp.lt.s32.totalorder %s25, 1
        %s410 = scalar_select %p409, %s25, 1
        %s411 = smul.addr %s410, 4
        %s412 = smul.addr %s411, 4
        %s413 = scalar_lea.vmem %s3, %s412
      $region64: #{transformer_forward.5} parent=47 // pred_fallthru
        _
    $region48: #{transformer_forward.5} parent=5 // pred_fallthru
      _
    %p414 = scmp.le.s32.totalorder 1, %s18
    %p415 = scmp.lt.s32.totalorder %s18, 3
    %p416 = pnand %p414, %p415
    %p417 = pneg %p416
    // Predicated region
    $region65: #{transformer_forward.5} parent=5 // pred_check
      _
    $region66: #{transformer_forward.5} parent=5 // pred_check_branch
      %419 = sbr.rel (%p416) target = $region68
    $region67: #{transformer_forward.5} parent=5 // pred_region
      %s420 = ssub.s32 %s18, 1
      %p421 = scmp.lt.s32.totalorder %s27, 1
      %s422 = scalar_select %p421, %s27, 1
      %p423 = scmp.lt.s32.totalorder %s28, 0
      %s424 = scalar_select %p423, %s28, 0
      %s425 = sadd.s32 %s424, %s422
      %s426 = smul.addr %s425, 8
      %s427 = scalar_lea.vmem %s0, %s426
      %p428 = pneg %p58
      %p429 = pneg %p55
      %p430 = scmp.lt.s32.totalorder %s27, 1
      %s431 = scalar_select %p430, %s27, 1
      %p432 = scmp.lt.s32.totalorder %s28, 0
      %s433 = scalar_select %p432, %s28, 0
      %s434 = smul.addr %s431, 4
      %s435 = sadd.s32 %s433, %s434
      %s436 = smul.addr %s435, 4
      %s437 = scalar_lea.vmem %s1, %s436
      %p438 = pneg %p86
      %p439 = pneg %p83
      %p440 = scmp.lt.s32.totalorder %s27, 1
      %s441 = scalar_select %p440, %s27, 1
      %s442 = smul.addr %s441, 4
      %s443 = smul.addr %s442, 4
      %s444 = scalar_lea.vmem %s2, %s443
      %p445 = pneg %p112
      %p446 = pneg %p109
      %p447 = scmp.lt.s32.totalorder %s27, 1
      %s448 = scalar_select %p447, %s27, 1
      %s449 = smul.addr %s448, 4
      %s450 = smul.addr %s449, 4
      %s451 = scalar_lea.vmem %s3, %s450
      %p452 = pneg %p138
      %p453 = pneg %p135
      %p454 = pneg %p159
      %p455 = pneg %p156
      %p456 = pneg %p180
      %p457 = pneg %p177
      %p458 = pneg %p201
      %p459 = pneg %p198
      %p460 = pneg %p222
      %p461 = pneg %p219
      %p462 = pneg %p243
      %p463 = pneg %p240
      %p464 = pneg %p264
      %p465 = pneg %p261
      %p466 = pneg %p285
      %p467 = pneg %p282
      %p468 = pneg %p306
      %p469 = pneg %p303
      %p470 = pneg %p334
      %p471 = pneg %p331
      %p472 = scmp.lt.s32.totalorder %s27, 1
      %s473 = scalar_select %p472, %s27, 1
      %p474 = scmp.lt.s32.totalorder %s28, 0
      %s475 = scalar_select %p474, %s28, 0
      %s476 = sadd.s32 %s475, %s473
      %s477 = smul.addr %s476, 8
      %s478 = scalar_lea.vmem %s12, %s477
      %p479 = scmp.lt.s32.totalorder %s27, 1
      %s480 = scalar_select %p479, %s27, 1
      %p481 = scmp.lt.s32.totalorder %s28, 0
      %s482 = scalar_select %p481, %s28, 0
      %s483 = sadd.s32 %s482, %s480
      %s484 = smul.addr %s483, 8
      %s485 = scalar_lea.vmem %s0, %s484
      %p486 = scmp.lt.s32.totalorder %s27, 1
      %s487 = scalar_select %p486, %s27, 1
      %p488 = scmp.lt.s32.totalorder %s28, 0
      %s489 = scalar_select %p488, %s28, 0
      %s490 = smul.addr %s487, 4
      %s491 = sadd.s32 %s489, %s490
      %s492 = smul.addr %s491, 4
      %s493 = scalar_lea.vmem %s1, %s492
      %p494 = scmp.lt.s32.totalorder %s27, 1
      %s495 = scalar_select %p494, %s27, 1
      %s496 = smul.addr %s495, 4
      %s497 = smul.addr %s496, 4
      %s498 = scalar_lea.vmem %s2, %s497
      %p499 = scmp.lt.s32.totalorder %s27, 1
      %s500 = scalar_select %p499, %s27, 1
      %s501 = smul.addr %s500, 4
      %s502 = smul.addr %s501, 4
      %s503 = scalar_lea.vmem %s3, %s502
      %p504 = scmp.lt.s32.totalorder %s27, 1
      %s505 = scalar_select %p504, %s27, 1
      %p506 = scmp.lt.s32.totalorder %s28, 0
      %s507 = scalar_select %p506, %s28, 0
      %s508 = sadd.s32 %s507, %s505
      %s509 = smul.addr %s508, 8
      %s510 = scalar_lea.vmem %s12, %s509
      %v512 = vld [vmem:[%s485] sm:$0xff]
      %v513 = vld [vmem:[%s493] sm:$0xf]
      %v514 = vld [vmem:[%s493 + $0x4] sm:$0xf]
      %v515 = vld [vmem:[%s493 + $0x8] sm:$0xf]
      %v516 = vld [vmem:[%s493 + $0xc] sm:$0xf]
      %v517 = vld [vmem:[%s498] sm:$0xf]
      %v518 = vld [vmem:[%s498 + $0x4] sm:$0xf]
      %v519 = vld [vmem:[%s498 + $0x8] sm:$0xf]
      %v520 = vld [vmem:[%s498 + $0xc] sm:$0xf]
      %v521 = vld [vmem:[%s503] sm:$0xf]
      %v522 = vld [vmem:[%s503 + $0x4] sm:$0xf]
      %v523 = vld [vmem:[%s503 + $0x8] sm:$0xf]
      %v524 = vld [vmem:[%s503 + $0xc] sm:$0xf]
      %vm525 = vcmask 64512
      %v527 = vsel %vm525, %v513, 0
      %vm529 = vcmask 1043456
      %v531 = vsel %vm529, %v517, 0
      %533 = vmatprep.subr.bf16.mxu0 0
      %534 = vmatpush1.bf16.msra.mxu0 %v531
      %535 = vmatprep.subr.bf16.mxu0 0
      %536 = vmatpush1.bf16.msra.mxu0 0
      %537 = vmatprep.subr.bf16.mxu0 0
      %538 = vmatpush1.bf16.msra.mxu0 0
      %539 = vmatprep.subr.bf16.mxu0 0
      %540 = vmatpush1.bf16.msra.mxu0 0
      %541 = vmatprep.subr.bf16.mxu0 0
      %542 = vmatpush1.bf16.msra.mxu0 0
      %543 = vmatprep.subr.bf16.mxu0 0
      %544 = vmatpush1.bf16.msra.mxu0 0
      %545 = vmatprep.subr.bf16.mxu0 0
      %546 = vmatpush1.bf16.msra.mxu0 0
      %547 = vmatprep.subr.bf16.mxu0 0
      %548 = vmatpush1.bf16.msra.mxu0 0
      %549 = vmatprep.subr.bf16.mxu0 0
      %550 = vmatpush1.bf16.msra.mxu0 0
      %551 = vmatprep.subr.bf16.mxu0 0
      %552 = vmatpush1.bf16.msra.mxu0 0
      %553 = vmatprep.subr.bf16.mxu0 0
      %554 = vmatpush1.bf16.msra.mxu0 0
      %555 = vmatprep.subr.bf16.mxu0 0
      %556 = vmatpush1.bf16.msra.mxu0 0
      %557 = vmatprep.subr.bf16.mxu0 0
      %558 = vmatpush1.bf16.msra.mxu0 0
      %559 = vmatprep.subr.bf16.mxu0 0
      %560 = vmatpush1.bf16.msra.mxu0 0
      %561 = vmatprep.subr.bf16.mxu0 0
      %562 = vmatpush1.bf16.msra.mxu0 0
      %563 = vmatprep.subr.bf16.mxu0 0
      %564 = vmatpush1.bf16.msra.mxu0 0
      %565 = vmatprep.mubr.bf16.mxu0 0
      %566 = vmatmul.mubr.bf16.gmra.mrb[0].mxu0 %v527
      %v567 = vpop.f32.mrb[0].mxu0
      %v568 = vadd.f32 0.0, %v567
      %v569 = vpop.f32.mrb[0].mxu0
      %v570 = vpop.f32.mrb[0].mxu0
      %v571 = vpop.f32.mrb[0].mxu0
      %572 = vdwg.mxu0
      %v574 = vsel %vm525, %v514, 0
      %v577 = vsel %vm529, %v518, 0
      %579 = vmatprep.subr.bf16.mxu0 0
      %580 = vmatpush1.bf16.msra.mxu0 %v577
      %581 = vmatprep.subr.bf16.mxu0 0
      %582 = vmatpush1.bf16.msra.mxu0 0
      %583 = vmatprep.subr.bf16.mxu0 0
      %584 = vmatpush1.bf16.msra.mxu0 0
      %585 = vmatprep.subr.bf16.mxu0 0
      %586 = vmatpush1.bf16.msra.mxu0 0
      %587 = vmatprep.subr.bf16.mxu0 0
      %588 = vmatpush1.bf16.msra.mxu0 0
      %589 = vmatprep.subr.bf16.mxu0 0
      %590 = vmatpush1.bf16.msra.mxu0 0
      %591 = vmatprep.subr.bf16.mxu0 0
      %592 = vmatpush1.bf16.msra.mxu0 0
      %593 = vmatprep.subr.bf16.mxu0 0
      %594 = vmatpush1.bf16.msra.mxu0 0
      %595 = vmatprep.subr.bf16.mxu0 0
      %596 = vmatpush1.bf16.msra.mxu0 0
      %597 = vmatprep.subr.bf16.mxu0 0
      %598 = vmatpush1.bf16.msra.mxu0 0
      %599 = vmatprep.subr.bf16.mxu0 0
      %600 = vmatpush1.bf16.msra.mxu0 0
      %601 = vmatprep.subr.bf16.mxu0 0
      %602 = vmatpush1.bf16.msra.mxu0 0
      %603 = vmatprep.subr.bf16.mxu0 0
      %604 = vmatpush1.bf16.msra.mxu0 0
      %605 = vmatprep.subr.bf16.mxu0 0
      %606 = vmatpush1.bf16.msra.mxu0 0
      %607 = vmatprep.subr.bf16.mxu0 0
      %608 = vmatpush1.bf16.msra.mxu0 0
      %609 = vmatprep.subr.bf16.mxu0 0
      %610 = vmatpush1.bf16.msra.mxu0 0
      %611 = vmatprep.mubr.bf16.mxu0 0
      %612 = vmatmul.mubr.bf16.gmra.mrb[0].mxu0 %v574
      %v613 = vpop.f32.mrb[0].mxu0
      %v614 = vadd.f32 0.0, %v613
      %v615 = vpop.f32.mrb[0].mxu0
      %v616 = vpop.f32.mrb[0].mxu0
      %v617 = vpop.f32.mrb[0].mxu0
      %618 = vdwg.mxu0
      %v620 = vsel %vm525, %v515, 0
      %v623 = vsel %vm529, %v519, 0
      %625 = vmatprep.subr.bf16.mxu0 0
      %626 = vmatpush1.bf16.msra.mxu0 %v623
      %627 = vmatprep.subr.bf16.mxu0 0
      %628 = vmatpush1.bf16.msra.mxu0 0
      %629 = vmatprep.subr.bf16.mxu0 0
      %630 = vmatpush1.bf16.msra.mxu0 0
      %631 = vmatprep.subr.bf16.mxu0 0
      %632 = vmatpush1.bf16.msra.mxu0 0
      %633 = vmatprep.subr.bf16.mxu0 0
      %634 = vmatpush1.bf16.msra.mxu0 0
      %635 = vmatprep.subr.bf16.mxu0 0
      %636 = vmatpush1.bf16.msra.mxu0 0
      %637 = vmatprep.subr.bf16.mxu0 0
      %638 = vmatpush1.bf16.msra.mxu0 0
      %639 = vmatprep.subr.bf16.mxu0 0
      %640 = vmatpush1.bf16.msra.mxu0 0
      %641 = vmatprep.subr.bf16.mxu0 0
      %642 = vmatpush1.bf16.msra.mxu0 0
      %643 = vmatprep.subr.bf16.mxu0 0
      %644 = vmatpush1.bf16.msra.mxu0 0
      %645 = vmatprep.subr.bf16.mxu0 0
      %646 = vmatpush1.bf16.msra.mxu0 0
      %647 = vmatprep.subr.bf16.mxu0 0
      %648 = vmatpush1.bf16.msra.mxu0 0
      %649 = vmatprep.subr.bf16.mxu0 0
      %650 = vmatpush1.bf16.msra.mxu0 0
      %651 = vmatprep.subr.bf16.mxu0 0
      %652 = vmatpush1.bf16.msra.mxu0 0
      %653 = vmatprep.subr.bf16.mxu0 0
      %654 = vmatpush1.bf16.msra.mxu0 0
      %655 = vmatprep.subr.bf16.mxu0 0
      %656 = vmatpush1.bf16.msra.mxu0 0
      %657 = vmatprep.mubr.bf16.mxu0 0
      %658 = vmatmul.mubr.bf16.gmra.mrb[0].mxu0 %v620
      %v659 = vpop.f32.mrb[0].mxu0
      %v660 = vadd.f32 0.0, %v659
      %v661 = vpop.f32.mrb[0].mxu0
      %v662 = vpop.f32.mrb[0].mxu0
      %v663 = vpop.f32.mrb[0].mxu0
      %664 = vdwg.mxu0
      %v666 = vsel %vm525, %v516, 0
      %v669 = vsel %vm529, %v520, 0
      %671 = vmatprep.subr.bf16.mxu0 0
      %672 = vmatpush1.bf16.msra.mxu0 %v669
      %673 = vmatprep.subr.bf16.mxu0 0
      %674 = vmatpush1.bf16.msra.mxu0 0
      %675 = vmatprep.subr.bf16.mxu0 0
      %676 = vmatpush1.bf16.msra.mxu0 0
      %677 = vmatprep.subr.bf16.mxu0 0
      %678 = vmatpush1.bf16.msra.mxu0 0
      %679 = vmatprep.subr.bf16.mxu0 0
      %680 = vmatpush1.bf16.msra.mxu0 0
      %681 = vmatprep.subr.bf16.mxu0 0
      %682 = vmatpush1.bf16.msra.mxu0 0
      %683 = vmatprep.subr.bf16.mxu0 0
      %684 = vmatpush1.bf16.msra.mxu0 0
      %685 = vmatprep.subr.bf16.mxu0 0
      %686 = vmatpush1.bf16.msra.mxu0 0
      %687 = vmatprep.subr.bf16.mxu0 0
      %688 = vmatpush1.bf16.msra.mxu0 0
      %689 = vmatprep.subr.bf16.mxu0 0
      %690 = vmatpush1.bf16.msra.mxu0 0
      %691 = vmatprep.subr.bf16.mxu0 0
      %692 = vmatpush1.bf16.msra.mxu0 0
      %693 = vmatprep.subr.bf16.mxu0 0
      %694 = vmatpush1.bf16.msra.mxu0 0
      %695 = vmatprep.subr.bf16.mxu0 0
      %696 = vmatpush1.bf16.msra.mxu0 0
      %697 = vmatprep.subr.bf16.mxu0 0
      %698 = vmatpush1.bf16.msra.mxu0 0
      %699 = vmatprep.subr.bf16.mxu0 0
      %700 = vmatpush1.bf16.msra.mxu0 0
      %701 = vmatprep.subr.bf16.mxu0 0
      %702 = vmatpush1.bf16.msra.mxu0 0
      %703 = vmatprep.mubr.bf16.mxu0 0
      %704 = vmatmul.mubr.bf16.gmra.mrb[0].mxu0 %v666
      %v705 = vpop.f32.mrb[0].mxu0
      %v706 = vadd.f32 0.0, %v705
      %v707 = vpop.f32.mrb[0].mxu0
      %v708 = vpop.f32.mrb[0].mxu0
      %v709 = vpop.f32.mrb[0].mxu0
      %710 = vdwg.mxu0
      %v711 = vsel %vm525, %v568, -inf
      %712 = vmax.xlane.f32.xlu0 %v711
      %v713 = vpop.xlane.xlu0 %712
      %v714 = vsel %vm525, %v614, -inf
      %715 = vmax.xlane.f32.xlu0 %v714
      %v716 = vpop.xlane.xlu0 %715
      %v717 = vsel %vm525, %v660, -inf
      %718 = vmax.xlane.f32.xlu0 %v717
      %v719 = vpop.xlane.xlu0 %718
      %v720 = vsel %vm525, %v706, -inf
      %721 = vmax.xlane.f32.xlu0 %v720
      %v722 = vpop.xlane.xlu0 %721
      %v723 = vsub.f32 %v568, %v713
      %v724 = vsub.f32 %v614, %v716
      %v725 = vsub.f32 %v660, %v719
      %v726 = vsub.f32 %v706, %v722
      %v727 = vmul.f32 %v723, 1.442695
      %v728 = vpow.pop %v727
      %v729 = vmul.f32 %v724, 1.442695
      %v730 = vpow.pop %v729
      %v731 = vmul.f32 %v725, 1.442695
      %v732 = vpow.pop %v731
      %v733 = vmul.f32 %v726, 1.442695
      %v734 = vpow.pop %v733
      %v735 = vsel %vm525, %v728, 0.0
      %736 = vadd.xlane.f32.xlu0 %v735
      %v737 = vpop.xlane.xlu0 %736
      %v738 = vsel %vm525, %v730, 0.0
      %739 = vadd.xlane.f32.xlu0 %v738
      %v740 = vpop.xlane.xlu0 %739
      %v741 = vsel %vm525, %v732, 0.0
      %742 = vadd.xlane.f32.xlu0 %v741
      %v743 = vpop.xlane.xlu0 %742
      %v744 = vsel %vm525, %v734, 0.0
      %745 = vadd.xlane.f32.xlu0 %v744
      %v746 = vpop.xlane.xlu0 %745
      %v747 = vpack.c.bf16 %v728, %v728
      %v748 = vpack.c.bf16 %v730, %v730
      %v749 = vpack.c.bf16 %v732, %v732
      %v750 = vpack.c.bf16 %v734, %v734
      %v752 = vsel %vm525, %v747, 0
      %v755 = vsel %vm529, %v521, 0
      %757 = vmatprep.subr.bf16.mxu0 0
      %758 = vmatpush1.bf16.msra.mxu0 %v755
      %759 = vmatprep.subr.bf16.mxu0 0
      %760 = vmatpush1.bf16.msra.mxu0 0
      %761 = vmatprep.subr.bf16.mxu0 0
      %762 = vmatpush1.bf16.msra.mxu0 0
      %763 = vmatprep.subr.bf16.mxu0 0
      %764 = vmatpush1.bf16.msra.mxu0 0
      %765 = vmatprep.subr.bf16.mxu0 0
      %766 = vmatpush1.bf16.msra.mxu0 0
      %767 = vmatprep.subr.bf16.mxu0 0
      %768 = vmatpush1.bf16.msra.mxu0 0
      %769 = vmatprep.subr.bf16.mxu0 0
      %770 = vmatpush1.bf16.msra.mxu0 0
      %771 = vmatprep.subr.bf16.mxu0 0
      %772 = vmatpush1.bf16.msra.mxu0 0
      %773 = vmatprep.subr.bf16.mxu0 0
      %774 = vmatpush1.bf16.msra.mxu0 0
      %775 = vmatprep.subr.bf16.mxu0 0
      %776 = vmatpush1.bf16.msra.mxu0 0
      %777 = vmatprep.subr.bf16.mxu0 0
      %778 = vmatpush1.bf16.msra.mxu0 0
      %779 = vmatprep.subr.bf16.mxu0 0
      %780 = vmatpush1.bf16.msra.mxu0 0
      %781 = vmatprep.subr.bf16.mxu0 0
      %782 = vmatpush1.bf16.msra.mxu0 0
      %783 = vmatprep.subr.bf16.mxu0 0
      %784 = vmatpush1.bf16.msra.mxu0 0
      %785 = vmatprep.subr.bf16.mxu0 0
      %786 = vmatpush1.bf16.msra.mxu0 0
      %787 = vmatprep.subr.bf16.mxu0 0
      %788 = vmatpush1.bf16.msra.mxu0 0
      %789 = vmatprep.mubr.bf16.mxu0 0
      %790 = vmatmul.mubr.bf16.gmra.mrb[0].mxu0 %v752
      %v791 = vpop.f32.mrb[0].mxu0
      %v792 = vadd.f32 0.0, %v791
      %v793 = vpop.f32.mrb[0].mxu0
      %v794 = vpop.f32.mrb[0].mxu0
      %v795 = vpop.f32.mrb[0].mxu0
      %796 = vdwg.mxu0
      %v798 = vsel %vm525, %v748, 0
      %v801 = vsel %vm529, %v522, 0
      %803 = vmatprep.subr.bf16.mxu0 0
      %804 = vmatpush1.bf16.msra.mxu0 %v801
      %805 = vmatprep.subr.bf16.mxu0 0
      %806 = vmatpush1.bf16.msra.mxu0 0
      %807 = vmatprep.subr.bf16.mxu0 0
      %808 = vmatpush1.bf16.msra.mxu0 0
      %809 = vmatprep.subr.bf16.mxu0 0
      %810 = vmatpush1.bf16.msra.mxu0 0
      %811 = vmatprep.subr.bf16.mxu0 0
      %812 = vmatpush1.bf16.msra.mxu0 0
      %813 = vmatprep.subr.bf16.mxu0 0
      %814 = vmatpush1.bf16.msra.mxu0 0
      %815 = vmatprep.subr.bf16.mxu0 0
      %816 = vmatpush1.bf16.msra.mxu0 0
      %817 = vmatprep.subr.bf16.mxu0 0
      %818 = vmatpush1.bf16.msra.mxu0 0
      %819 = vmatprep.subr.bf16.mxu0 0
      %820 = vmatpush1.bf16.msra.mxu0 0
      %821 = vmatprep.subr.bf16.mxu0 0
      %822 = vmatpush1.bf16.msra.mxu0 0
      %823 = vmatprep.subr.bf16.mxu0 0
      %824 = vmatpush1.bf16.msra.mxu0 0
      %825 = vmatprep.subr.bf16.mxu0 0
      %826 = vmatpush1.bf16.msra.mxu0 0
      %827 = vmatprep.subr.bf16.mxu0 0
      %828 = vmatpush1.bf16.msra.mxu0 0
      %829 = vmatprep.subr.bf16.mxu0 0
      %830 = vmatpush1.bf16.msra.mxu0 0
      %831 = vmatprep.subr.bf16.mxu0 0
      %832 = vmatpush1.bf16.msra.mxu0 0
      %833 = vmatprep.subr.bf16.mxu0 0
      %834 = vmatpush1.bf16.msra.mxu0 0
      %835 = vmatprep.mubr.bf16.mxu0 0
      %836 = vmatmul.mubr.bf16.gmra.mrb[0].mxu0 %v798
      %v837 = vpop.f32.mrb[0].mxu0
      %v838 = vadd.f32 0.0, %v837
      %v839 = vpop.f32.mrb[0].mxu0
      %v840 = vpop.f32.mrb[0].mxu0
      %v841 = vpop.f32.mrb[0].mxu0
      %842 = vdwg.mxu0
      %v844 = vsel %vm525, %v749, 0
      %v847 = vsel %vm529, %v523, 0
      %849 = vmatprep.subr.bf16.mxu0 0
      %850 = vmatpush1.bf16.msra.mxu0 %v847
      %851 = vmatprep.subr.bf16.mxu0 0
      %852 = vmatpush1.bf16.msra.mxu0 0
      %853 = vmatprep.subr.bf16.mxu0 0
      %854 = vmatpush1.bf16.msra.mxu0 0
      %855 = vmatprep.subr.bf16.mxu0 0
      %856 = vmatpush1.bf16.msra.mxu0 0
      %857 = vmatprep.subr.bf16.mxu0 0
      %858 = vmatpush1.bf16.msra.mxu0 0
      %859 = vmatprep.subr.bf16.mxu0 0
      %860 = vmatpush1.bf16.msra.mxu0 0
      %861 = vmatprep.subr.bf16.mxu0 0
      %862 = vmatpush1.bf16.msra.mxu0 0
      %863 = vmatprep.subr.bf16.mxu0 0
      %864 = vmatpush1.bf16.msra.mxu0 0
      %865 = vmatprep.subr.bf16.mxu0 0
      %866 = vmatpush1.bf16.msra.mxu0 0
      %867 = vmatprep.subr.bf16.mxu0 0
      %868 = vmatpush1.bf16.msra.mxu0 0
      %869 = vmatprep.subr.bf16.mxu0 0
      %870 = vmatpush1.bf16.msra.mxu0 0
      %871 = vmatprep.subr.bf16.mxu0 0
      %872 = vmatpush1.bf16.msra.mxu0 0
      %873 = vmatprep.subr.bf16.mxu0 0
      %874 = vmatpush1.bf16.msra.mxu0 0
      %875 = vmatprep.subr.bf16.mxu0 0
      %876 = vmatpush1.bf16.msra.mxu0 0
      %877 = vmatprep.subr.bf16.mxu0 0
      %878 = vmatpush1.bf16.msra.mxu0 0
      %879 = vmatprep.subr.bf16.mxu0 0
      %880 = vmatpush1.bf16.msra.mxu0 0
      %881 = vmatprep.mubr.bf16.mxu0 0
      %882 = vmatmul.mubr.bf16.gmra.mrb[0].mxu0 %v844
      %v883 = vpop.f32.mrb[0].mxu0
      %v884 = vadd.f32 0.0, %v883
      %v885 = vpop.f32.mrb[0].mxu0
      %v886 = vpop.f32.mrb[0].mxu0
      %v887 = vpop.f32.mrb[0].mxu0
      %888 = vdwg.mxu0
      %v890 = vsel %vm525, %v750, 0
      %v893 = vsel %vm529, %v524, 0
      %895 = vmatprep.subr.bf16.mxu0 0
      %896 = vmatpush1.bf16.msra.mxu0 %v893
      %897 = vmatprep.subr.bf16.mxu0 0
      %898 = vmatpush1.bf16.msra.mxu0 0
      %899 = vmatprep.subr.bf16.mxu0 0
      %900 = vmatpush1.bf16.msra.mxu0 0
      %901 = vmatprep.subr.bf16.mxu0 0
      %902 = vmatpush1.bf16.msra.mxu0 0
      %903 = vmatprep.subr.bf16.mxu0 0
      %904 = vmatpush1.bf16.msra.mxu0 0
      %905 = vmatprep.subr.bf16.mxu0 0
      %906 = vmatpush1.bf16.msra.mxu0 0
      %907 = vmatprep.subr.bf16.mxu0 0
      %908 = vmatpush1.bf16.msra.mxu0 0
      %909 = vmatprep.subr.bf16.mxu0 0
      %910 = vmatpush1.bf16.msra.mxu0 0
      %911 = vmatprep.subr.bf16.mxu0 0
      %912 = vmatpush1.bf16.msra.mxu0 0
      %913 = vmatprep.subr.bf16.mxu0 0
      %914 = vmatpush1.bf16.msra.mxu0 0
      %915 = vmatprep.subr.bf16.mxu0 0
      %916 = vmatpush1.bf16.msra.mxu0 0
      %917 = vmatprep.subr.bf16.mxu0 0
      %918 = vmatpush1.bf16.msra.mxu0 0
      %919 = vmatprep.subr.bf16.mxu0 0
      %920 = vmatpush1.bf16.msra.mxu0 0
      %921 = vmatprep.subr.bf16.mxu0 0
      %922 = vmatpush1.bf16.msra.mxu0 0
      %923 = vmatprep.subr.bf16.mxu0 0
      %924 = vmatpush1.bf16.msra.mxu0 0
      %925 = vmatprep.subr.bf16.mxu0 0
      %926 = vmatpush1.bf16.msra.mxu0 0
      %927 = vmatprep.mubr.bf16.mxu0 0
      %928 = vmatmul.mubr.bf16.gmra.mrb[0].mxu0 %v890
      %v929 = vpop.f32.mrb[0].mxu0
      %v930 = vadd.f32 0.0, %v929
      %v931 = vpop.f32.mrb[0].mxu0
      %v932 = vpop.f32.mrb[0].mxu0
      %v933 = vpop.f32.mrb[0].mxu0
      %934 = vdwg.mxu0
      %v935 = vrcp.pop %v737
      %v936 = vrcp.pop %v740
      %v937 = vrcp.pop %v743
      %v938 = vrcp.pop %v746
      %v939 = vmul.f32 %v792, %v935
      %v940 = vmul.f32 %v838, %v936
      %v941 = vmul.f32 %v884, %v937
      %v942 = vmul.f32 %v930, %v938
      %v943 = vcombine.low %v939, %v941
      %v944 = vcombine.high %v939, %v941
      %v946 = vunpack.c.l.s4 1983009808
      %v947 = vunpack.c.0.s8 %v946
      %v948 = vlaneseq
      %v949 = vshrl.u32 %v948, 7
      %v950 = vsub.s32 %v947, %v949
      %v951 = vrot.slane %v943, %v950
      %v953 = vunpack.c.l.s4 1983009808
      %v954 = vunpack.c.0.s8 %v953
      %v955 = vlaneseq
      %v956 = vshrl.u32 %v955, 7
      %v957 = vsub.s32 %v954, %v956
      %v958 = vrot.slane %v944, %v957
      %v959 = vcombine.low %v940, %v942
      %v960 = vcombine.high %v940, %v942
      %v962 = vunpack.c.l.s4 1983009808
      %v963 = vunpack.c.0.s8 %v962
      %v964 = vlaneseq
      %v965 = vshrl.u32 %v964, 7
      %v966 = vsub.s32 %v963, %v965
      %v967 = vrot.slane %v959, %v966
      %v969 = vunpack.c.l.s4 1983009808
      %v970 = vunpack.c.0.s8 %v969
      %v971 = vlaneseq
      %v972 = vshrl.u32 %v971, 7
      %v973 = vsub.s32 %v970, %v972
      %v974 = vrot.slane %v960, %v973
      %v975 = vcombine.low %v951, %v967
      %v976 = vcombine.high %v951, %v967
      %v978 = vunpack.c.l.s4 1934713408
      %v979 = vunpack.c.0.s8 %v978
      %v980 = vlaneseq
      %v981 = vshrl.u32 %v980, 7
      %v982 = vsub.s32 %v979, %v981
      %v983 = vrot.slane %v975, %v982
      %v985 = vunpack.c.l.s4 1934713408
      %v986 = vunpack.c.0.s8 %v985
      %v987 = vlaneseq
      %v988 = vshrl.u32 %v987, 7
      %v989 = vsub.s32 %v986, %v988
      %v990 = vrot.slane %v976, %v989
      %v991 = vcombine.low %v958, %v974
      %v992 = vcombine.high %v958, %v974
      %v994 = vunpack.c.l.s4 1934713408
      %v995 = vunpack.c.0.s8 %v994
      %v996 = vlaneseq
      %v997 = vshrl.u32 %v996, 7
      %v998 = vsub.s32 %v995, %v997
      %v999 = vrot.slane %v991, %v998
      %v1001 = vunpack.c.l.s4 1934713408
      %v1002 = vunpack.c.0.s8 %v1001
      %v1003 = vlaneseq
      %v1004 = vshrl.u32 %v1003, 7
      %v1005 = vsub.s32 %v1002, %v1004
      %v1006 = vrot.slane %v992, %v1005
      %v1007 = vcombine.high %v983, 0.0
      %v1008 = vcombine.high %v990, 0.0
      %v1009 = vcombine.high %v999, 0.0
      %v1010 = vcombine.high %v1006, 0.0
      %v1011 = vcombine.low %v983, %v990
      %v1013 = vunpack.c.l.s4 1983009808
      %v1014 = vunpack.c.0.s8 %v1013
      %v1015 = vlaneseq
      %v1016 = vshrl.u32 %v1015, 7
      %v1017 = vsub.s32 %v1014, %v1016
      %v1018 = vrot.slane %v1011, %v1017
      %v1019 = vcombine.low %v1007, %v1008
      %v1021 = vunpack.c.l.s4 1983009808
      %v1022 = vunpack.c.0.s8 %v1021
      %v1023 = vlaneseq
      %v1024 = vshrl.u32 %v1023, 7
      %v1025 = vsub.s32 %v1022, %v1024
      %v1026 = vrot.slane %v1019, %v1025
      %v1027 = vcombine.low %v999, %v1006
      %v1029 = vunpack.c.l.s4 1983009808
      %v1030 = vunpack.c.0.s8 %v1029
      %v1031 = vlaneseq
      %v1032 = vshrl.u32 %v1031, 7
      %v1033 = vsub.s32 %v1030, %v1032
      %v1034 = vrot.slane %v1027, %v1033
      %v1035 = vcombine.low %v1009, %v1010
      %v1037 = vunpack.c.l.s4 1983009808
      %v1038 = vunpack.c.0.s8 %v1037
      %v1039 = vlaneseq
      %v1040 = vshrl.u32 %v1039, 7
      %v1041 = vsub.s32 %v1038, %v1040
      %v1042 = vrot.slane %v1035, %v1041
      %v1043 = vcombine.low %v1018, %v1026
      %v1044 = vcombine.high %v1018, %v1026
      %v1046 = vunpack.c.l.s4 1934713408
      %v1047 = vunpack.c.0.s8 %v1046
      %v1048 = vlaneseq
      %v1049 = vshrl.u32 %v1048, 7
      %v1050 = vsub.s32 %v1047, %v1049
      %v1051 = vrot.slane %v1043, %v1050
      %v1053 = vunpack.c.l.s4 1934713408
      %v1054 = vunpack.c.0.s8 %v1053
      %v1055 = vlaneseq
      %v1056 = vshrl.u32 %v1055, 7
      %v1057 = vsub.s32 %v1054, %v1056
      %v1058 = vrot.slane %v1044, %v1057
      %v1059 = vcombine.low %v1034, %v1042
      %v1060 = vcombine.high %v1034, %v1042
      %v1062 = vunpack.c.l.s4 1934713408
      %v1063 = vunpack.c.0.s8 %v1062
      %v1064 = vlaneseq
      %v1065 = vshrl.u32 %v1064, 7
      %v1066 = vsub.s32 %v1063, %v1065
      %v1067 = vrot.slane %v1059, %v1066
      %v1069 = vunpack.c.l.s4 1934713408
      %v1070 = vunpack.c.0.s8 %v1069
      %v1071 = vlaneseq
      %v1072 = vshrl.u32 %v1071, 7
      %v1073 = vsub.s32 %v1070, %v1072
      %v1074 = vrot.slane %v1060, %v1073
      %v1075 = vcombine.low %v1051, %v1067
      %v1076 = vcombine.high %v1051, %v1067
      %v1077 = vcombine.low %v1058, %v1074
      %v1078 = vcombine.high %v1058, %v1074
      %1080 = vrot.lane.b32.xlu0 %v1076, 8
      %v1081 = vpop.permute.xlu0 %1080
      %1084 = vrot.lane.b32.xlu0 %v1077, 16
      %v1085 = vpop.permute.xlu0 %1084
      %1088 = vrot.lane.b32.xlu0 %v1078, 24
      %v1089 = vpop.permute.xlu0 %1088
      %v1091 = vsel %vm525, %v1075, %v1081
      %vm1092 = vcmask 130048
      %v1093 = vsel %vm1092, %v1091, %v1085
      %vm1094 = vcmask 195584
      %v1095 = vsel %vm1094, %v1093, %v1089
      %v1096 = vpack.c.bf16 %v1095, %v1095
      %v1097 = vld [vmem:[%s4] sm:$0xf]
      %v1098 = vld [vmem:[%s4 + $0x4] sm:$0xf]
      %v1099 = vld [vmem:[%s4 + $0x8] sm:$0xf]
      %v1100 = vld [vmem:[%s4 + $0xc] sm:$0xf]
      %v1101 = vld [vmem:[%s5] sm:$0x1]
      %v1103 = vlaneseq
      %v1104 = vshrl.u32 %v1103, 7
      %v1105 = vsub.s32 0, %v1104
      %v1106 = vrot.slane %v1101, %v1105
      %v1112 = vunpack.c.l.b16 %v1097
      %v1113 = vunpack.c.l.b16 %v1098
      %v1114 = vunpack.c.l.b16 %v1099
      %v1115 = vunpack.c.l.b16 %v1100
      %v1116 = vpack.c.b16 %v1113, %v1112
      %v1117 = vpack.c.b16 %v1115, %v1114
      %vm1120 = vcmask 261120
      %v1122 = vsel %vm1120, %v1096, 0
      %1124 = vmatprep.subr.bf16.mxu0 0
      %1125 = vmatpush1.bf16.msra.mxu0 %v1116
      %1126 = vmatprep.subr.bf16.mxu0 0
      %1127 = vmatpush1.bf16.msra.mxu0 %v1117
      %1128 = vmatprep.subr.bf16.mxu0 0
      %1129 = vmatpush1.bf16.msra.mxu0 0
      %1130 = vmatprep.subr.bf16.mxu0 0
      %1131 = vmatpush1.bf16.msra.mxu0 0
      %1132 = vmatprep.subr.bf16.mxu0 0
      %1133 = vmatpush1.bf16.msra.mxu0 0
      %1134 = vmatprep.subr.bf16.mxu0 0
      %1135 = vmatpush1.bf16.msra.mxu0 0
      %1136 = vmatprep.subr.bf16.mxu0 0
      %1137 = vmatpush1.bf16.msra.mxu0 0
      %1138 = vmatprep.subr.bf16.mxu0 0
      %1139 = vmatpush1.bf16.msra.mxu0 0
      %1140 = vmatprep.subr.bf16.mxu0 0
      %1141 = vmatpush1.bf16.msra.mxu0 0
      %1142 = vmatprep.subr.bf16.mxu0 0
      %1143 = vmatpush1.bf16.msra.mxu0 0
      %1144 = vmatprep.subr.bf16.mxu0 0
      %1145 = vmatpush1.bf16.msra.mxu0 0
      %1146 = vmatprep.subr.bf16.mxu0 0
      %1147 = vmatpush1.bf16.msra.mxu0 0
      %1148 = vmatprep.subr.bf16.mxu0 0
      %1149 = vmatpush1.bf16.msra.mxu0 0
      %1150 = vmatprep.subr.bf16.mxu0 0
      %1151 = vmatpush1.bf16.msra.mxu0 0
      %1152 = vmatprep.subr.bf16.mxu0 0
      %1153 = vmatpush1.bf16.msra.mxu0 0
      %1154 = vmatprep.subr.bf16.mxu0 0
      %1155 = vmatpush1.bf16.msra.mxu0 0
      %1156 = vmatprep.mubr.bf16.mxu0 0
      %1157 = vmatmul.mubr.bf16.gmra.mrb[0].mxu0 %v1122
      %v1158 = vpop.f32.mrb[0].mxu0
      %v1159 = vadd.f32 %v1106, %v1158
      %v1160 = vpop.f32.mrb[0].mxu0
      %v1161 = vpop.f32.mrb[0].mxu0
      %v1162 = vpop.f32.mrb[0].mxu0
      %1163 = vdwg.mxu0
      %v1164 = vadd.f32 %v512, %v1159
      %v1165 = vld [vmem:[%s6] sm:$0x1]
      %v1166 = vld [vmem:[%s7] sm:$0x1]
      %v1167 = vsel %vm1120, %v1164, 0.0
      %1168 = vadd.xlane.f32.xlu0 %v1167
      %v1169 = vpop.xlane.xlu0 %1168
      %v1170 = vrcp.pop 32.0
      %v1171 = vmul.f32 %v1169, %v1170
      %v1172 = vsub.f32 %v1164, %v1171
      %v1173 = vmul.f32 %v1172, %v1172
      %v1174 = vsel %vm1120, %v1173, 0.0
      %1175 = vadd.xlane.f32.xlu0 %v1174
      %v1176 = vpop.xlane.xlu0 %1175
      %v1177 = vmul.f32 %v1176, %v1170
      %v1178 = vadd.f32 %v1177, 1e-05
      %v1179 = vrsqrt.pop %v1178
      %v1180 = vmul.f32 %v1172, %v1179
      %v1182 = vlaneseq
      %v1183 = vshrl.u32 %v1182, 7
      %v1184 = vsub.s32 0, %v1183
      %v1185 = vrot.slane %v1165, %v1184
      %v1187 = vmul.f32 %v1180, %v1185
      %v1189 = vlaneseq
      %v1190 = vshrl.u32 %v1189, 7
      %v1191 = vsub.s32 0, %v1190
      %v1192 = vrot.slane %v1166, %v1191
      %v1194 = vadd.f32 %v1187, %v1192
      %v1195 = vpack.c.bf16 %v1194, %v1194
      %v1196 = vld [vmem:[%s8] sm:$0xf]
      %v1197 = vld [vmem:[%s8 + $0x4] sm:$0xf]
      %v1198 = vld [vmem:[%s8 + $0x8] sm:$0xf]
      %v1199 = vld [vmem:[%s8 + $0xc] sm:$0xf]
      %v1200 = vld [vmem:[%s9] sm:$0x1]
      %v1202 = vlaneseq
      %v1203 = vshrl.u32 %v1202, 7
      %v1204 = vsub.s32 0, %v1203
      %v1205 = vrot.slane %v1200, %v1204
      %v1211 = vunpack.c.l.b16 %v1196
      %v1212 = vunpack.c.l.b16 %v1197
      %v1213 = vunpack.c.l.b16 %v1198
      %v1214 = vunpack.c.l.b16 %v1199
      %v1215 = vpack.c.b16 %v1212, %v1211
      %v1216 = vpack.c.b16 %v1214, %v1213
      %v1220 = vsel %vm1120, %v1195, 0
      %1222 = vmatprep.subr.bf16.mxu0 0
      %1223 = vmatpush1.bf16.msra.mxu0 %v1215
      %1224 = vmatprep.subr.bf16.mxu0 0
      %1225 = vmatpush1.bf16.msra.mxu0 %v1216
      %1226 = vmatprep.subr.bf16.mxu0 0
      %1227 = vmatpush1.bf16.msra.mxu0 0
      %1228 = vmatprep.subr.bf16.mxu0 0
      %1229 = vmatpush1.bf16.msra.mxu0 0
      %1230 = vmatprep.subr.bf16.mxu0 0
      %1231 = vmatpush1.bf16.msra.mxu0 0
      %1232 = vmatprep.subr.bf16.mxu0 0
      %1233 = vmatpush1.bf16.msra.mxu0 0
      %1234 = vmatprep.subr.bf16.mxu0 0
      %1235 = vmatpush1.bf16.msra.mxu0 0
      %1236 = vmatprep.subr.bf16.mxu0 0
      %1237 = vmatpush1.bf16.msra.mxu0 0
      %1238 = vmatprep.subr.bf16.mxu0 0
      %1239 = vmatpush1.bf16.msra.mxu0 0
      %1240 = vmatprep.subr.bf16.mxu0 0
      %1241 = vmatpush1.bf16.msra.mxu0 0
      %1242 = vmatprep.subr.bf16.mxu0 0
      %1243 = vmatpush1.bf16.msra.mxu0 0
      %1244 = vmatprep.subr.bf16.mxu0 0
      %1245 = vmatpush1.bf16.msra.mxu0 0
      %1246 = vmatprep.subr.bf16.mxu0 0
      %1247 = vmatpush1.bf16.msra.mxu0 0
      %1248 = vmatprep.subr.bf16.mxu0 0
      %1249 = vmatpush1.bf16.msra.mxu0 0
      %1250 = vmatprep.subr.bf16.mxu0 0
      %1251 = vmatpush1.bf16.msra.mxu0 0
      %1252 = vmatprep.subr.bf16.mxu0 0
      %1253 = vmatpush1.bf16.msra.mxu0 0
      %1254 = vmatprep.mubr.bf16.mxu0 0
      %1255 = vmatmul.mubr.bf16.gmra.mrb[0].mxu0 %v1220
      %v1256 = vpop.f32.mrb[0].mxu0
      %v1257 = vadd.f32 %v1205, %v1256
      %v1258 = vpop.f32.mrb[0].mxu0
      %v1259 = vpop.f32.mrb[0].mxu0
      %v1260 = vpop.f32.mrb[0].mxu0
      %1261 = vdwg.mxu0
      %v1262 = vmul.f32 %v1257, 0.5
      %v1263 = vmul.f32 %v1257, 0.70710677
      %v1264 = verf.f32.pop %v1263
      %v1265 = vadd.f32 %v1264, 1.0
      %v1266 = vmul.f32 %v1262, %v1265
      %v1267 = vpack.c.bf16 %v1266, %v1266
      %v1268 = vld [vmem:[%s10] sm:$0xf]
      %v1269 = vld [vmem:[%s10 + $0x4] sm:$0xf]
      %v1270 = vld [vmem:[%s10 + $0x8] sm:$0xf]
      %v1271 = vld [vmem:[%s10 + $0xc] sm:$0xf]
      %v1272 = vld [vmem:[%s10 + $0x10] sm:$0xf]
      %v1273 = vld [vmem:[%s10 + $0x14] sm:$0xf]
      %v1274 = vld [vmem:[%s10 + $0x18] sm:$0xf]
      %v1275 = vld [vmem:[%s10 + $0x1c] sm:$0xf]
      %v1276 = vld [vmem:[%s10 + $0x20] sm:$0xf]
      %v1277 = vld [vmem:[%s10 + $0x24] sm:$0xf]
      %v1278 = vld [vmem:[%s10 + $0x28] sm:$0xf]
      %v1279 = vld [vmem:[%s10 + $0x2c] sm:$0xf]
      %v1280 = vld [vmem:[%s10 + $0x30] sm:$0xf]
      %v1281 = vld [vmem:[%s10 + $0x34] sm:$0xf]
      %v1282 = vld [vmem:[%s10 + $0x38] sm:$0xf]
      %v1283 = vld [vmem:[%s10 + $0x3c] sm:$0xf]
      %v1284 = vld [vmem:[%s11] sm:$0x1]
      %v1286 = vlaneseq
      %v1287 = vshrl.u32 %v1286, 7
      %v1288 = vsub.s32 0, %v1287
      %v1289 = vrot.slane %v1284, %v1288
      %v1307 = vunpack.c.l.b16 %v1268
      %v1308 = vunpack.c.l.b16 %v1269
      %v1309 = vunpack.c.l.b16 %v1270
      %v1310 = vunpack.c.l.b16 %v1271
      %v1311 = vunpack.c.l.b16 %v1272
      %v1312 = vunpack.c.l.b16 %v1273
      %v1313 = vunpack.c.l.b16 %v1274
      %v1314 = vunpack.c.l.b16 %v1275
      %v1315 = vunpack.c.l.b16 %v1276
      %v1316 = vunpack.c.l.b16 %v1277
      %v1317 = vunpack.c.l.b16 %v1278
      %v1318 = vunpack.c.l.b16 %v1279
      %v1319 = vunpack.c.l.b16 %v1280
      %v1320 = vunpack.c.l.b16 %v1281
      %v1321 = vunpack.c.l.b16 %v1282
      %v1322 = vunpack.c.l.b16 %v1283
      %v1323 = vpack.c.b16 %v1308, %v1307
      %v1324 = vpack.c.b16 %v1310, %v1309
      %v1325 = vpack.c.b16 %v1312, %v1311
      %v1326 = vpack.c.b16 %v1314, %v1313
      %v1327 = vpack.c.b16 %v1316, %v1315
      %v1328 = vpack.c.b16 %v1318, %v1317
      %v1329 = vpack.c.b16 %v1320, %v1319
      %v1330 = vpack.c.b16 %v1322, %v1321
      %1339 = vmatprep.subr.bf16.mxu0 0
      %1340 = vmatpush1.bf16.msra.mxu0 %v1323
      %1341 = vmatprep.subr.bf16.mxu0 0
      %1342 = vmatpush1.bf16.msra.mxu0 %v1324
      %1343 = vmatprep.subr.bf16.mxu0 0
      %1344 = vmatpush1.bf16.msra.mxu0 %v1325
      %1345 = vmatprep.subr.bf16.mxu0 0
      %1346 = vmatpush1.bf16.msra.mxu0 %v1326
      %1347 = vmatprep.subr.bf16.mxu0 0
      %1348 = vmatpush1.bf16.msra.mxu0 %v1327
      %1349 = vmatprep.subr.bf16.mxu0 0
      %1350 = vmatpush1.bf16.msra.mxu0 %v1328
      %1351 = vmatprep.subr.bf16.mxu0 0
      %1352 = vmatpush1.bf16.msra.mxu0 %v1329
      %1353 = vmatprep.subr.bf16.mxu0 0
      %1354 = vmatpush1.bf16.msra.mxu0 %v1330
      %1355 = vmatprep.subr.bf16.mxu0 0
      %1356 = vmatpush1.bf16.msra.mxu0 0
      %1357 = vmatprep.subr.bf16.mxu0 0
      %1358 = vmatpush1.bf16.msra.mxu0 0
      %1359 = vmatprep.subr.bf16.mxu0 0
      %1360 = vmatpush1.bf16.msra.mxu0 0
      %1361 = vmatprep.subr.bf16.mxu0 0
      %1362 = vmatpush1.bf16.msra.mxu0 0
      %1363 = vmatprep.subr.bf16.mxu0 0
      %1364 = vmatpush1.bf16.msra.mxu0 0
      %1365 = vmatprep.subr.bf16.mxu0 0
      %1366 = vmatpush1.bf16.msra.mxu0 0
      %1367 = vmatprep.subr.bf16.mxu0 0
      %1368 = vmatpush1.bf16.msra.mxu0 0
      %1369 = vmatprep.subr.bf16.mxu0 0
      %1370 = vmatpush1.bf16.msra.mxu0 0
      %1371 = vmatprep.mubr.bf16.mxu0 0
      %1372 = vmatmul.mubr.bf16.gmra.mrb[0].mxu0 %v1267
      %v1373 = vpop.f32.mrb[0].mxu0
      %v1374 = vadd.f32 %v1289, %v1373
      %v1375 = vpop.f32.mrb[0].mxu0
      %v1376 = vpop.f32.mrb[0].mxu0
      %v1377 = vpop.f32.mrb[0].mxu0
      %1378 = vdwg.mxu0
      %v1379 = vadd.f32 %v1164, %v1374
      %1380 = vst.msk [vmem:[%s510] sm:$0xff] %vm1120, %v1379
      %p1381 = scmp.lt.s32.totalorder %s27, 1
      %s1382 = scalar_select %p1381, %s27, 1
      %p1383 = scmp.lt.s32.totalorder %s28, 0
      %s1384 = scalar_select %p1383, %s28, 0
      %s1385 = sadd.s32 %s1384, %s1382
      %s1386 = smul.addr %s1385, 8
      %s1387 = scalar_lea.vmem %s12, %s1386
      // Predicated region
      $region69: #{transformer_forward.5} parent=67 // pred_check
        %p1388 = pneg %p331
      $region70: #{transformer_forward.5} parent=67 // pred_check_branch
        %1390 = sbr.rel (%p1388) target = $region72
      $region71: #{transformer_forward.5} parent=67 // pred_region
        _
      $region72: #{transformer_forward.5} parent=67 // pred_fallthru
        _
    $region68: #{transformer_forward.5} parent=5 // pred_fallthru
      _
    %p1391 = scmp.le.s32.totalorder 2, %s18
    // Predicated region
    $region73: #{transformer_forward.5} parent=5 // pred_check
      %p1392 = pneg %p1391
    $region74: #{transformer_forward.5} parent=5 // pred_check_branch
      %1394 = sbr.rel (%p1392) target = $region76
    $region75: #{transformer_forward.5} parent=5 // pred_region
      %s1395 = ssub.s32 %s18, 2
      // Predicated region
      $region77: #{transformer_forward.5} parent=75 // pred_check
        %p1396 = pneg %p337
      $region78: #{transformer_forward.5} parent=75 // pred_check_branch
        %1398 = sbr.rel (%p1396) target = $region80
      $region79: #{transformer_forward.5} parent=75 // pred_region
        %p1399 = scmp.lt.s32.totalorder %s29, 1
        %s1400 = scalar_select %p1399, %s29, 1
        %p1401 = scmp.lt.s32.totalorder %s30, 0
        %s1402 = scalar_select %p1401, %s30, 0
        %s1403 = sadd.s32 %s1402, %s1400
        %s1404 = smul.addr %s1403, 8
        %s1405 = scalar_lea.vmem %s12, %s1404
      $region80: #{transformer_forward.5} parent=75 // pred_fallthru
        _
    $region76: #{transformer_forward.5} parent=5 // pred_fallthru
      _
  $region6: #{transformer_forward.5} parent=0 // loop_footer
    %s22 = sadd.s32 1, %s18
  $region7: #{transformer_forward.5} parent=0 // loop_footer_branch
    %17 = sbr.rel target = $region3
  $region8: #{transformer_forward.5} parent=0 // loop_exit
    _

// kernel: transformer_forward.7
$region0: #{transformer_forward.7}
  #allocation0 [shape = 'u32[]', space=smem, size = 0x4, offset = 0x4, fixed_abs, tag = 'smem constant byte address 0x4 - core index']
  #allocation1 [shape = 'u32[144,128]{1,0:T(1,128)}', space=vmem, size = 0x12000, scoped, tag = 'internal scratch']
  %s0 = inlined_call_operand.vmem [shape: f32[2,8,32], index: 0, kind: input, shape index: {}]
  %s1 = inlined_call_operand.vmem [shape: bf16[2,4,8,8], index: 1, kind: input, shape index: {}]
  %s2 = inlined_call_operand.vmem [shape: bf16[2,4,8,8], index: 2, kind: input, shape index: {}]
  %s3 = inlined_call_operand.vmem [shape: bf16[2,4,8,8], index: 3, kind: input, shape index: {}]
  %s4 = inlined_call_operand.vmem [shape: bf16[32,32], index: 4, kind: input, shape index: {}]
  %s5 = inlined_call_operand.vmem [shape: f32[1,32], index: 5, kind: input, shape index: {}]
  %s6 = inlined_call_operand.vmem [shape: f32[1,32], index: 6, kind: input, shape index: {}]
  %s7 = inlined_call_operand.vmem [shape: f32[1,32], index: 7, kind: input, shape index: {}]
  %s8 = inlined_call_operand.vmem [shape: bf16[32,128], index: 8, kind: input, shape index: {}]
  %s9 = inlined_call_operand.vmem [shape: f32[1,128], index: 9, kind: input, shape index: {}]
  %s10 = inlined_call_operand.vmem [shape: bf16[128,32], index: 10, kind: input, shape index: {}]
  %s11 = inlined_call_operand.vmem [shape: f32[1,32], index: 11, kind: input, shape index: {}]
  %s12 = inlined_call_operand.hbm [shape: f32[2,8,32], index: 12, kind: output, shape index: {}]
  %s13 = sld [smem:[#allocation0]]
  $region81: #{transformer_forward.7} parent=0
    _
  %s15 = ssub.s32 1, %s13
  %s16 = scalar_select 0, %s15, %s13
  $region1: #{transformer_forward.7} parent=0
    #allocation2 [shape = 'u8[8192]{0}', space=vmem, size = 0x2000, scoped, tag = 'output window, operand 0']
    #allocation3 [shape = 's32[2]{0}', space=sflag, size = 0x8, scoped, tag = 'scoped memory for transformer_forward.7']
    %17 = vsyncpa [#allocation3], 0
    %s18 = scalar_lea.sflag [#allocation3], 1
    %19 = vsyncpa %s18, 0
    loop: start=0, step=1, limit=4
    $region2: #{transformer_forward.7} parent=1 // loop_pre_header
      _
    $region3: #{transformer_forward.7} parent=1 // loop_header
      %s21 = sphi 0, %s25
      %p22 = scmp.ge.s32.totalorder %s21, 4
      %s28 = sphi 0, %s40
      %s29 = sphi 0, %s36
      %s30 = sphi 0, %s28
      %s31 = sphi 0, %s29
      %s32 = sphi 0, %s30
      %s33 = sphi 0, %s31
      %s45 = sphi 0, %s47
      %s48 = sphi 0, %s45
      %s49 = sphi 0, %s48
      %s65 = sphi 0, %s49
      %s73 = sphi 0, %s75
      %s76 = sphi 0, %s73
      %s77 = sphi 0, %s76
      %s93 = sphi 0, %s77
      %s99 = sphi 0, %s101
      %s102 = sphi 0, %s99
      %s103 = sphi 0, %s102
      %s119 = sphi 0, %s103
      %s125 = sphi 0, %s127
      %s128 = sphi 0, %s125
      %s129 = sphi 0, %s128
      %s145 = sphi 0, %s129
      %s149 = sphi 0, %s149
      %s151 = sphi 0, %s149
      %s152 = sphi 0, %s151
      %s166 = sphi 0, %s152
      %s170 = sphi 0, %s170
      %s172 = sphi 0, %s170
      %s173 = sphi 0, %s172
      %s187 = sphi 0, %s173
      %s191 = sphi 0, %s191
      %s193 = sphi 0, %s191
      %s194 = sphi 0, %s193
      %s208 = sphi 0, %s194
      %s212 = sphi 0, %s212
      %s214 = sphi 0, %s212
      %s215 = sphi 0, %s214
      %s229 = sphi 0, %s215
      %s233 = sphi 0, %s233
      %s235 = sphi 0, %s233
      %s236 = sphi 0, %s235
      %s250 = sphi 0, %s236
      %s254 = sphi 0, %s254
      %s256 = sphi 0, %s254
      %s257 = sphi 0, %s256
      %s271 = sphi 0, %s257
      %s275 = sphi 0, %s275
      %s277 = sphi 0, %s275
      %s278 = sphi 0, %s277
      %s292 = sphi 0, %s278
      %s296 = sphi 0, %s296
      %s298 = sphi 0, %s296
      %s299 = sphi 0, %s298
      %s313 = sphi 0, %s299
      %s321 = sphi 0, %s323
      %s324 = sphi 0, %s321
      %s325 = sphi 0, %s324
      %s341 = sphi 0, %s325
    $region4: #{transformer_forward.7} parent=1 // loop_header_branch
      %24 = sbr.rel (%p22) target = $region8
    $region5: #{transformer_forward.7} parent=1 // loop_body
      %s26 = ssub.s32 %s21, 1
      %s27 = ssub.s32 %s21, 2
      %s34 = sadd.s32 1, %s29
      %p35 = scmp.ge.s32.totalorder %s34, 1
      %s36 = scalar_select %p35, 0, %s34
      %s37 = sadd.s32 1, %s28
      %s38 = scalar_select %p35, %s37, %s28
      %p39 = scmp.ge.s32.totalorder %s38, 2
      %s40 = scalar_select %p39, 0, %s38
      %s41 = ssub.s32 %s28, %s40
      %s42 = ssub.s32 %s29, %s36
      %s43 = sor.u32 %s41, %s42
      %p44 = scmp.eq.s32.totalorder %s43, 0
      %s46 = sadd.s32 %s45, 1
      %s47 = scalar_select %p44, %s45, %s46
      %p50 = pneg %p44
      %p51 = scmp.eq.s32.totalorder %s21, 1
      %p52 = por %p50, %p51
      %p53 = scmp.ne.s32.totalorder %s45, %s48
      %p54 = scmp.eq.s32.totalorder %s21, 0
      %p55 = por %p53, %p54
      %p56 = scmp.ne.s32.totalorder %s45, %s48
      %p57 = scmp.eq.s32.totalorder %s26, 1
      %p58 = por %p56, %p57
      %p59 = scmp.ne.s32.totalorder %s48, %s49
      %p60 = scmp.eq.s32.totalorder %s26, 0
      %p61 = por %p59, %p60
      %p62 = scmp.ne.s32.totalorder %s48, %s49
      %p63 = scmp.eq.s32.totalorder %s27, 1
      %p64 = por %p62, %p63
      %p66 = scmp.ne.s32.totalorder %s49, %s65
      %p67 = scmp.eq.s32.totalorder %s27, 0
      %p68 = por %p66, %p67
      %s69 = ssub.s32 %s28, %s40
      %s70 = ssub.s32 %s29, %s36
      %s71 = sor.u32 %s69, %s70
      %p72 = scmp.eq.s32.totalorder %s71, 0
      %s74 = sadd.s32 %s73, 1
      %s75 = scalar_select %p72, %s73, %s74
      %p78 = pneg %p72
      %p79 = scmp.eq.s32.totalorder %s21, 1
      %p80 = por %p78, %p79
      %p81 = scmp.ne.s32.totalorder %s73, %s76
      %p82 = scmp.eq.s32.totalorder %s21, 0
      %p83 = por %p81, %p82
      %p84 = scmp.ne.s32.totalorder %s73, %s76
      %p85 = scmp.eq.s32.totalorder %s26, 1
      %p86 = por %p84, %p85
      %p87 = scmp.ne.s32.totalorder %s76, %s77
      %p88 = scmp.eq.s32.totalorder %s26, 0
      %p89 = por %p87, %p88
      %p90 = scmp.ne.s32.totalorder %s76, %s77
      %p91 = scmp.eq.s32.totalorder %s27, 1
      %p92 = por %p90, %p91
      %p94 = scmp.ne.s32.totalorder %s77, %s93
      %p95 = scmp.eq.s32.totalorder %s27, 0
      %p96 = por %p94, %p95
      %s97 = ssub.s32 %s28, %s40
      %p98 = scmp.eq.s32.totalorder %s97, 0
      %s100 = sadd.s32 %s99, 1
      %s101 = scalar_select %p98, %s99, %s100
      %p104 = pneg %p98
      %p105 = scmp.eq.s32.totalorder %s21, 1
      %p106 = por %p104, %p105
      %p107 = scmp.ne.s32.totalorder %s99, %s102
      %p108 = scmp.eq.s32.totalorder %s21, 0
      %p109 = por %p107, %p108
      %p110 = scmp.ne.s32.totalorder %s99, %s102
      %p111 = scmp.eq.s32.totalorder %s26, 1
      %p112 = por %p110, %p111
      %p113 = scmp.ne.s32.totalorder %s102, %s103
      %p114 = scmp.eq.s32.totalorder %s26, 0
      %p115 = por %p113, %p114
      %p116 = scmp.ne.s32.totalorder %s102, %s103
      %p117 = scmp.eq.s32.totalorder %s27, 1
      %p118 = por %p116, %p117
      %p120 = scmp.ne.s32.totalorder %s103, %s119
      %p121 = scmp.eq.s32.totalorder %s27, 0
      %p122 = por %p120, %p121
      %s123 = ssub.s32 %s28, %s40
      %p124 = scmp.eq.s32.totalorder %s123, 0
      %s126 = sadd.s32 %s125, 1
      %s127 = scalar_select %p124, %s125, %s126
      %p130 = pneg %p124
      %p131 = scmp.eq.s32.totalorder %s21, 1
      %p132 = por %p130, %p131
      %p133 = scmp.ne.s32.totalorder %s125, %s128
      %p134 = scmp.eq.s32.totalorder %s21, 0
      %p135 = por %p133, %p134
      %p136 = scmp.ne.s32.totalorder %s125, %s128
      %p137 = scmp.eq.s32.totalorder %s26, 1
      %p138 = por %p136, %p137
      %p139 = scmp.ne.s32.totalorder %s128, %s129
      %p140 = scmp.eq.s32.totalorder %s26, 0
      %p141 = por %p139, %p140
      %p142 = scmp.ne.s32.totalorder %s128, %s129
      %p143 = scmp.eq.s32.totalorder %s27, 1
      %p144 = por %p142, %p143
      %p146 = scmp.ne.s32.totalorder %s129, %s145
      %p147 = scmp.eq.s32.totalorder %s27, 0
      %p148 = por %p146, %p147
      %s150 = sadd.s32 %s149, 1
      %p153 = scmp.eq.s32.totalorder %s21, 1
      %p154 = scmp.ne.s32.totalorder %s149, %s151
      %p155 = scmp.eq.s32.totalorder %s21, 0
      %p156 = por %p154, %p155
      %p157 = scmp.ne.s32.totalorder %s149, %s151
      %p158 = scmp.eq.s32.totalorder %s26, 1
      %p159 = por %p157, %p158
      %p160 = scmp.ne.s32.totalorder %s151, %s152
      %p161 = scmp.eq.s32.totalorder %s26, 0
      %p162 = por %p160, %p161
      %p163 = scmp.ne.s32.totalorder %s151, %s152
      %p164 = scmp.eq.s32.totalorder %s27, 1
      %p165 = por %p163, %p164
      %p167 = scmp.ne.s32.totalorder %s152, %s166
      %p168 = scmp.eq.s32.totalorder %s27, 0
      %p169 = por %p167, %p168
      %s171 = sadd.s32 %s170, 1
      %p174 = scmp.eq.s32.totalorder %s21, 1
      %p175 = scmp.ne.s32.totalorder %s170, %s172
      %p176 = scmp.eq.s32.totalorder %s21, 0
      %p177 = por %p175, %p176
      %p178 = scmp.ne.s32.totalorder %s170, %s172
      %p179 = scmp.eq.s32.totalorder %s26, 1
      %p180 = por %p178, %p179
      %p181 = scmp.ne.s32.totalorder %s172, %s173
      %p182 = scmp.eq.s32.totalorder %s26, 0
      %p183 = por %p181, %p182
      %p184 = scmp.ne.s32.totalorder %s172, %s173
      %p185 = scmp.eq.s32.totalorder %s27, 1
      %p186 = por %p184, %p185
      %p188 = scmp.ne.s32.totalorder %s173, %s187
      %p189 = scmp.eq.s32.totalorder %s27, 0
      %p190 = por %p188, %p189
      %s192 = sadd.s32 %s191, 1
      %p195 = scmp.eq.s32.totalorder %s21, 1
      %p196 = scmp.ne.s32.totalorder %s191, %s193
      %p197 = scmp.eq.s32.totalorder %s21, 0
      %p198 = por %p196, %p197
      %p199 = scmp.ne.s32.totalorder %s191, %s193
      %p200 = scmp.eq.s32.totalorder %s26, 1
      %p201 = por %p199, %p200
      %p202 = scmp.ne.s32.totalorder %s193, %s194
      %p203 = scmp.eq.s32.totalorder %s26, 0
      %p204 = por %p202, %p203
      %p205 = scmp.ne.s32.totalorder %s193, %s194
      %p206 = scmp.eq.s32.totalorder %s27, 1
      %p207 = por %p205, %p206
      %p209 = scmp.ne.s32.totalorder %s194, %s208
      %p210 = scmp.eq.s32.totalorder %s27, 0
      %p211 = por %p209, %p210
      %s213 = sadd.s32 %s212, 1
      %p216 = scmp.eq.s32.totalorder %s21, 1
      %p217 = scmp.ne.s32.totalorder %s212, %s214
      %p218 = scmp.eq.s32.totalorder %s21, 0
      %p219 = por %p217, %p218
      %p220 = scmp.ne.s32.totalorder %s212, %s214
      %p221 = scmp.eq.s32.totalorder %s26, 1
      %p222 = por %p220, %p221
      %p223 = scmp.ne.s32.totalorder %s214, %s215
      %p224 = scmp.eq.s32.totalorder %s26, 0
      %p225 = por %p223, %p224
      %p226 = scmp.ne.s32.totalorder %s214, %s215
      %p227 = scmp.eq.s32.totalorder %s27, 1
      %p228 = por %p226, %p227
      %p230 = scmp.ne.s32.totalorder %s215, %s229
      %p231 = scmp.eq.s32.totalorder %s27, 0
      %p232 = por %p230, %p231
      %s234 = sadd.s32 %s233, 1
      %p237 = scmp.eq.s32.totalorder %s21, 1
      %p238 = scmp.ne.s32.totalorder %s233, %s235
      %p239 = scmp.eq.s32.totalorder %s21, 0
      %p240 = por %p238, %p239
      %p241 = scmp.ne.s32.totalorder %s233, %s235
      %p242 = scmp.eq.s32.totalorder %s26, 1
      %p243 = por %p241, %p242
      %p244 = scmp.ne.s32.totalorder %s235, %s236
      %p245 = scmp.eq.s32.totalorder %s26, 0
      %p246 = por %p244, %p245
      %p247 = scmp.ne.s32.totalorder %s235, %s236
      %p248 = scmp.eq.s32.totalorder %s27, 1
      %p249 = por %p247, %p248
      %p251 = scmp.ne.s32.totalorder %s236, %s250
      %p252 = scmp.eq.s32.totalorder %s27, 0
      %p253 = por %p251, %p252
      %s255 = sadd.s32 %s254, 1
      %p258 = scmp.eq.s32.totalorder %s21, 1
      %p259 = scmp.ne.s32.totalorder %s254, %s256
      %p260 = scmp.eq.s32.totalorder %s21, 0
      %p261 = por %p259, %p260
      %p262 = scmp.ne.s32.totalorder %s254, %s256
      %p263 = scmp.eq.s32.totalorder %s26, 1
      %p264 = por %p262, %p263
      %p265 = scmp.ne.s32.totalorder %s256, %s257
      %p266 = scmp.eq.s32.totalorder %s26, 0
      %p267 = por %p265, %p266
      %p268 = scmp.ne.s32.totalorder %s256, %s257
      %p269 = scmp.eq.s32.totalorder %s27, 1
      %p270 = por %p268, %p269
      %p272 = scmp.ne.s32.totalorder %s257, %s271
      %p273 = scmp.eq.s32.totalorder %s27, 0
      %p274 = por %p272, %p273
      %s276 = sadd.s32 %s275, 1
      %p279 = scmp.eq.s32.totalorder %s21, 1
      %p280 = scmp.ne.s32.totalorder %s275, %s277
      %p281 = scmp.eq.s32.totalorder %s21, 0
      %p282 = por %p280, %p281
      %p283 = scmp.ne.s32.totalorder %s275, %s277
      %p284 = scmp.eq.s32.totalorder %s26, 1
      %p285 = por %p283, %p284
      %p286 = scmp.ne.s32.totalorder %s277, %s278
      %p287 = scmp.eq.s32.totalorder %s26, 0
      %p288 = por %p286, %p287
      %p289 = scmp.ne.s32.totalorder %s277, %s278
      %p290 = scmp.eq.s32.totalorder %s27, 1
      %p291 = por %p289, %p290
      %p293 = scmp.ne.s32.totalorder %s278, %s292
      %p294 = scmp.eq.s32.totalorder %s27, 0
      %p295 = por %p293, %p294
      %s297 = sadd.s32 %s296, 1
      %p300 = scmp.eq.s32.totalorder %s21, 1
      %p301 = scmp.ne.s32.totalorder %s296, %s298
      %p302 = scmp.eq.s32.totalorder %s21, 0
      %p303 = por %p301, %p302
      %p304 = scmp.ne.s32.totalorder %s296, %s298
      %p305 = scmp.eq.s32.totalorder %s26, 1
      %p306 = por %p304, %p305
      %p307 = scmp.ne.s32.totalorder %s298, %s299
      %p308 = scmp.eq.s32.totalorder %s26, 0
      %p309 = por %p307, %p308
      %p310 = scmp.ne.s32.totalorder %s298, %s299
      %p311 = scmp.eq.s32.totalorder %s27, 1
      %p312 = por %p310, %p311
      %p314 = scmp.ne.s32.totalorder %s299, %s313
      %p315 = scmp.eq.s32.totalorder %s27, 0
      %p316 = por %p314, %p315
      %s317 = ssub.s32 %s28, %s40
      %s318 = ssub.s32 %s29, %s36
      %s319 = sor.u32 %s317, %s318
      %p320 = scmp.eq.s32.totalorder %s319, 0
      %s322 = sadd.s32 %s321, 1
      %s323 = scalar_select %p320, %s321, %s322
      %p326 = pneg %p320
      %p327 = scmp.eq.s32.totalorder %s21, 1
      %p328 = por %p326, %p327
      %p329 = scmp.ne.s32.totalorder %s321, %s324
      %p330 = scmp.eq.s32.totalorder %s21, 0
      %p331 = por %p329, %p330
      %p332 = scmp.ne.s32.totalorder %s321, %s324
      %p333 = scmp.eq.s32.totalorder %s26, 1
      %p334 = por %p332, %p333
      %p335 = scmp.ne.s32.totalorder %s324, %s325
      %p336 = scmp.eq.s32.totalorder %s26, 0
      %p337 = por %p335, %p336
      %p338 = scmp.ne.s32.totalorder %s324, %s325
      %p339 = scmp.eq.s32.totalorder %s27, 1
      %p340 = por %p338, %p339
      %p342 = scmp.ne.s32.totalorder %s325, %s341
      %p343 = scmp.eq.s32.totalorder %s27, 0
      %p344 = por %p342, %p343
      %p345 = scmp.le.s32.totalorder 1, %s21
      %p346 = scmp.lt.s32.totalorder %s21, 3
      %p347 = pnand %p345, %p346
      %p348 = pneg %p347
      // Predicated region
      $region9: #{transformer_forward.7} parent=5 // pred_check
        _
      $region10: #{transformer_forward.7} parent=5 // pred_check_branch
        %350 = sbr.rel (%p347) target = $region12
      $region11: #{transformer_forward.7} parent=5 // pred_region
        %s351 = ssub.s32 %s21, 1
        // Predicated region
        $region13: #{transformer_forward.7} parent=11 // pred_check
          %p352 = pneg %p162
        $region14: #{transformer_forward.7} parent=11 // pred_check_branch
          %354 = sbr.rel (%p352) target = $region16
        $region15: #{transformer_forward.7} parent=11 // pred_region
          _
        $region16: #{transformer_forward.7} parent=11 // pred_fallthru
          _
        // Predicated region
        $region17: #{transformer_forward.7} parent=11 // pred_check
          %p355 = pneg %p183
        $region18: #{transformer_forward.7} parent=11 // pred_check_branch
          %357 = sbr.rel (%p355) target = $region20
        $region19: #{transformer_forward.7} parent=11 // pred_region
          _
        $region20: #{transformer_forward.7} parent=11 // pred_fallthru
          _
        // Predicated region
        $region21: #{transformer_forward.7} parent=11 // pred_check
          %p358 = pneg %p204
        $region22: #{transformer_forward.7} parent=11 // pred_check_branch
          %360 = sbr.rel (%p358) target = $region24
        $region23: #{transformer_forward.7} parent=11 // pred_region
          _
        $region24: #{transformer_forward.7} parent=11 // pred_fallthru
          _
        // Predicated region
        $region25: #{transformer_forward.7} parent=11 // pred_check
          %p361 = pneg %p225
        $region26: #{transformer_forward.7} parent=11 // pred_check_branch
          %363 = sbr.rel (%p361) target = $region28
        $region27: #{transformer_forward.7} parent=11 // pred_region
          _
        $region28: #{transformer_forward.7} parent=11 // pred_fallthru
          _
        // Predicated region
        $region29: #{transformer_forward.7} parent=11 // pred_check
          %p364 = pneg %p246
        $region30: #{transformer_forward.7} parent=11 // pred_check_branch
          %366 = sbr.rel (%p364) target = $region32
        $region31: #{transformer_forward.7} parent=11 // pred_region
          _
        $region32: #{transformer_forward.7} parent=11 // pred_fallthru
          _
        // Predicated region
        $region33: #{transformer_forward.7} parent=11 // pred_check
          %p367 = pneg %p267
        $region34: #{transformer_forward.7} parent=11 // pred_check_branch
          %369 = sbr.rel (%p367) target = $region36
        $region35: #{transformer_forward.7} parent=11 // pred_region
          _
        $region36: #{transformer_forward.7} parent=11 // pred_fallthru
          _
        // Predicated region
        $region37: #{transformer_forward.7} parent=11 // pred_check
          %p370 = pneg %p288
        $region38: #{transformer_forward.7} parent=11 // pred_check_branch
          %372 = sbr.rel (%p370) target = $region40
        $region39: #{transformer_forward.7} parent=11 // pred_region
          _
        $region40: #{transformer_forward.7} parent=11 // pred_fallthru
          _
        // Predicated region
        $region41: #{transformer_forward.7} parent=11 // pred_check
          %p373 = pneg %p309
        $region42: #{transformer_forward.7} parent=11 // pred_check_branch
          %375 = sbr.rel (%p373) target = $region44
        $region43: #{transformer_forward.7} parent=11 // pred_region
          _
        $region44: #{transformer_forward.7} parent=11 // pred_fallthru
          _
      $region12: #{transformer_forward.7} parent=5 // pred_fallthru
        _
      %p376 = scmp.lt.s32.totalorder %s21, 2
      // Predicated region
      $region45: #{transformer_forward.7} parent=5 // pred_check
        %p377 = pneg %p376
      $region46: #{transformer_forward.7} parent=5 // pred_check_branch
        %379 = sbr.rel (%p377) target = $region48
      $region47: #{transformer_forward.7} parent=5 // pred_region
        // Predicated region
        $region49: #{transformer_forward.7} parent=47 // pred_check
          %p380 = pneg %p55
        $region50: #{transformer_forward.7} parent=47 // pred_check_branch
          %382 = sbr.rel (%p380) target = $region52
        $region51: #{transformer_forward.7} parent=47 // pred_region
          %p383 = scmp.lt.s32.totalorder %s28, 1
          %s384 = scalar_select %p383, %s28, 1
          %p385 = scmp.lt.s32.totalorder %s29, 0
          %s386 = scalar_select %p385, %s29, 0
          %s387 = sadd.s32 %s386, %s384
          %s388 = smul.addr %s387, 8
          %s389 = scalar_lea.vmem %s0, %s388
        $region52: #{transformer_forward.7} parent=47 // pred_fallthru
          _
        // Predicated region
        $region53: #{transformer_forward.7} parent=47 // pred_check
          %p390 = pneg %p83
        $region54: #{transformer_forward.7} parent=47 // pred_check_branch
          %392 = sbr.rel (%p390) target = $region56
        $region55: #{transformer_forward.7} parent=47 // pred_region
          %p393 = scmp.lt.s32.totalorder %s28, 1
          %s394 = scalar_select %p393, %s28, 1
          %p395 = scmp.lt.s32.totalorder %s29, 0
          %s396 = scalar_select %p395, %s29, 0
          %s397 = smul.addr %s394, 4
          %s398 = sadd.s32 %s396, %s397
          %s399 = smul.addr %s398, 4
          %s400 = scalar_lea.vmem %s1, %s399
        $region56: #{transformer_forward.7} parent=47 // pred_fallthru
          _
        // Predicated region
        $region57: #{transformer_forward.7} parent=47 // pred_check
          %p401 = pneg %p109
        $region58: #{transformer_forward.7} parent=47 // pred_check_branch
          %403 = sbr.rel (%p401) target = $region60
        $region59: #{transformer_forward.7} parent=47 // pred_region
          %p404 = scmp.lt.s32.totalorder %s28, 1
          %s405 = scalar_select %p404, %s28, 1
          %s406 = smul.addr %s405, 4
          %s407 = smul.addr %s406, 4
          %s408 = scalar_lea.vmem %s2, %s407
        $region60: #{transformer_forward.7} parent=47 // pred_fallthru
          _
        // Predicated region
        $region61: #{transformer_forward.7} parent=47 // pred_check
          %p409 = pneg %p135
        $region62: #{transformer_forward.7} parent=47 // pred_check_branch
          %411 = sbr.rel (%p409) target = $region64
        $region63: #{transformer_forward.7} parent=47 // pred_region
          %p412 = scmp.lt.s32.totalorder %s28, 1
          %s413 = scalar_select %p412, %s28, 1
          %s414 = smul.addr %s413, 4
          %s415 = smul.addr %s414, 4
          %s416 = scalar_lea.vmem %s3, %s415
        $region64: #{transformer_forward.7} parent=47 // pred_fallthru
          _
      $region48: #{transformer_forward.7} parent=5 // pred_fallthru
        _
      %p417 = scmp.le.s32.totalorder 1, %s21
      %p418 = scmp.lt.s32.totalorder %s21, 3
      %p419 = pnand %p417, %p418
      %p420 = pneg %p419
      // Predicated region
      $region65: #{transformer_forward.7} parent=5 // pred_check
        _
      $region66: #{transformer_forward.7} parent=5 // pred_check_branch
        %422 = sbr.rel (%p419) target = $region68
      $region67: #{transformer_forward.7} parent=5 // pred_region
        %s423 = ssub.s32 %s21, 1
        %p424 = scmp.lt.s32.totalorder %s30, 1
        %s425 = scalar_select %p424, %s30, 1
        %p426 = scmp.lt.s32.totalorder %s31, 0
        %s427 = scalar_select %p426, %s31, 0
        %s428 = sadd.s32 %s427, %s425
        %s429 = smul.addr %s428, 8
        %s430 = scalar_lea.vmem %s0, %s429
        %p431 = pneg %p61
        %p432 = pneg %p58
        %p433 = scmp.lt.s32.totalorder %s30, 1
        %s434 = scalar_select %p433, %s30, 1
        %p435 = scmp.lt.s32.totalorder %s31, 0
        %s436 = scalar_select %p435, %s31, 0
        %s437 = smul.addr %s434, 4
        %s438 = sadd.s32 %s436, %s437
        %s439 = smul.addr %s438, 4
        %s440 = scalar_lea.vmem %s1, %s439
        %p441 = pneg %p89
        %p442 = pneg %p86
        %p443 = scmp.lt.s32.totalorder %s30, 1
        %s444 = scalar_select %p443, %s30, 1
        %s445 = smul.addr %s444, 4
        %s446 = smul.addr %s445, 4
        %s447 = scalar_lea.vmem %s2, %s446
        %p448 = pneg %p115
        %p449 = pneg %p112
        %p450 = scmp.lt.s32.totalorder %s30, 1
        %s451 = scalar_select %p450, %s30, 1
        %s452 = smul.addr %s451, 4
        %s453 = smul.addr %s452, 4
        %s454 = scalar_lea.vmem %s3, %s453
        %p455 = pneg %p141
        %p456 = pneg %p138
        %p457 = pneg %p162
        %p458 = pneg %p159
        %p459 = pneg %p183
        %p460 = pneg %p180
        %p461 = pneg %p204
        %p462 = pneg %p201
        %p463 = pneg %p225
        %p464 = pneg %p222
        %p465 = pneg %p246
        %p466 = pneg %p243
        %p467 = pneg %p267
        %p468 = pneg %p264
        %p469 = pneg %p288
        %p470 = pneg %p285
        %p471 = pneg %p309
        %p472 = pneg %p306
        %p473 = pneg %p337
        %p474 = pneg %p334
        %s475 = sand.u32 %s324, 1
        %s476 = scalar_lea.sflag [#allocation3], %s475
        %s477 = sand.u32 %s324, 1
        %s478 = smul.addr %s477, 8
        %s479 = scalar_lea.vmem [#allocation2], %s478
        %p480 = scmp.lt.s32.totalorder %s30, 1
        %s481 = scalar_select %p480, %s30, 1
        %p482 = scmp.lt.s32.totalorder %s31, 0
        %s483 = scalar_select %p482, %s31, 0
        %s484 = sadd.s32 %s483, %s481
        %s485 = smul.addr %s484, 8
        %s486 = scalar_lea.vmem %s0, %s485
        %p487 = scmp.lt.s32.totalorder %s30, 1
        %s488 = scalar_select %p487, %s30, 1
        %p489 = scmp.lt.s32.totalorder %s31, 0
        %s490 = scalar_select %p489, %s31, 0
        %s491 = smul.addr %s488, 4
        %s492 = sadd.s32 %s490, %s491
        %s493 = smul.addr %s492, 4
        %s494 = scalar_lea.vmem %s1, %s493
        %p495 = scmp.lt.s32.totalorder %s30, 1
        %s496 = scalar_select %p495, %s30, 1
        %s497 = smul.addr %s496, 4
        %s498 = smul.addr %s497, 4
        %s499 = scalar_lea.vmem %s2, %s498
        %p500 = scmp.lt.s32.totalorder %s30, 1
        %s501 = scalar_select %p500, %s30, 1
        %s502 = smul.addr %s501, 4
        %s503 = smul.addr %s502, 4
        %s504 = scalar_lea.vmem %s3, %s503
        %v506 = vld [vmem:[%s486] sm:$0xff]
        %v507 = vld [vmem:[%s494] sm:$0xf]
        %v508 = vld [vmem:[%s494 + $0x4] sm:$0xf]
        %v509 = vld [vmem:[%s494 + $0x8] sm:$0xf]
        %v510 = vld [vmem:[%s494 + $0xc] sm:$0xf]
        %v511 = vld [vmem:[%s499] sm:$0xf]
        %v512 = vld [vmem:[%s499 + $0x4] sm:$0xf]
        %v513 = vld [vmem:[%s499 + $0x8] sm:$0xf]
        %v514 = vld [vmem:[%s499 + $0xc] sm:$0xf]
        %v515 = vld [vmem:[%s504] sm:$0xf]
        %v516 = vld [vmem:[%s504 + $0x4] sm:$0xf]
        %v517 = vld [vmem:[%s504 + $0x8] sm:$0xf]
        %v518 = vld [vmem:[%s504 + $0xc] sm:$0xf]
        %vm519 = vcmask 64512
        %v521 = vsel %vm519, %v507, 0
        %vm523 = vcmask 1043456
        %v525 = vsel %vm523, %v511, 0
        %527 = vmatprep.subr.bf16.mxu0 0
        %528 = vmatpush1.bf16.msra.mxu0 %v525
        %529 = vmatprep.subr.bf16.mxu0 0
        %530 = vmatpush1.bf16.msra.mxu0 0
        %531 = vmatprep.subr.bf16.mxu0 0
        %532 = vmatpush1.bf16.msra.mxu0 0
        %533 = vmatprep.subr.bf16.mxu0 0
        %534 = vmatpush1.bf16.msra.mxu0 0
        %535 = vmatprep.subr.bf16.mxu0 0
        %536 = vmatpush1.bf16.msra.mxu0 0
        %537 = vmatprep.subr.bf16.mxu0 0
        %538 = vmatpush1.bf16.msra.mxu0 0
        %539 = vmatprep.subr.bf16.mxu0 0
        %540 = vmatpush1.bf16.msra.mxu0 0
        %541 = vmatprep.subr.bf16.mxu0 0
        %542 = vmatpush1.bf16.msra.mxu0 0
        %543 = vmatprep.subr.bf16.mxu0 0
        %544 = vmatpush1.bf16.msra.mxu0 0
        %545 = vmatprep.subr.bf16.mxu0 0
        %546 = vmatpush1.bf16.msra.mxu0 0
        %547 = vmatprep.subr.bf16.mxu0 0
        %548 = vmatpush1.bf16.msra.mxu0 0
        %549 = vmatprep.subr.bf16.mxu0 0
        %550 = vmatpush1.bf16.msra.mxu0 0
        %551 = vmatprep.subr.bf16.mxu0 0
        %552 = vmatpush1.bf16.msra.mxu0 0
        %553 = vmatprep.subr.bf16.mxu0 0
        %554 = vmatpush1.bf16.msra.mxu0 0
        %555 = vmatprep.subr.bf16.mxu0 0
        %556 = vmatpush1.bf16.msra.mxu0 0
        %557 = vmatprep.subr.bf16.mxu0 0
        %558 = vmatpush1.bf16.msra.mxu0 0
        %559 = vmatprep.mubr.bf16.mxu0 0
        %560 = vmatmul.mubr.bf16.gmra.mrb[0].mxu0 %v521
        %v561 = vpop.f32.mrb[0].mxu0
        %v562 = vadd.f32 0.0, %v561
        %v563 = vpop.f32.mrb[0].mxu0
        %v564 = vpop.f32.mrb[0].mxu0
        %v565 = vpop.f32.mrb[0].mxu0
        %566 = vdwg.mxu0
        %v568 = vsel %vm519, %v508, 0
        %v571 = vsel %vm523, %v512, 0
        %573 = vmatprep.subr.bf16.mxu0 0
        %574 = vmatpush1.bf16.msra.mxu0 %v571
        %575 = vmatprep.subr.bf16.mxu0 0
        %576 = vmatpush1.bf16.msra.mxu0 0
        %577 = vmatprep.subr.bf16.mxu0 0
        %578 = vmatpush1.bf16.msra.mxu0 0
        %579 = vmatprep.subr.bf16.mxu0 0
        %580 = vmatpush1.bf16.msra.mxu0 0
        %581 = vmatprep.subr.bf16.mxu0 0
        %582 = vmatpush1.bf16.msra.mxu0 0
        %583 = vmatprep.subr.bf16.mxu0 0
        %584 = vmatpush1.bf16.msra.mxu0 0
        %585 = vmatprep.subr.bf16.mxu0 0
        %586 = vmatpush1.bf16.msra.mxu0 0
        %587 = vmatprep.subr.bf16.mxu0 0
        %588 = vmatpush1.bf16.msra.mxu0 0
        %589 = vmatprep.subr.bf16.mxu0 0
        %590 = vmatpush1.bf16.msra.mxu0 0
        %591 = vmatprep.subr.bf16.mxu0 0
        %592 = vmatpush1.bf16.msra.mxu0 0
        %593 = vmatprep.subr.bf16.mxu0 0
        %594 = vmatpush1.bf16.msra.mxu0 0
        %595 = vmatprep.subr.bf16.mxu0 0
        %596 = vmatpush1.bf16.msra.mxu0 0
        %597 = vmatprep.subr.bf16.mxu0 0
        %598 = vmatpush1.bf16.msra.mxu0 0
        %599 = vmatprep.subr.bf16.mxu0 0
        %600 = vmatpush1.bf16.msra.mxu0 0
        %601 = vmatprep.subr.bf16.mxu0 0
        %602 = vmatpush1.bf16.msra.mxu0 0
        %603 = vmatprep.subr.bf16.mxu0 0
        %604 = vmatpush1.bf16.msra.mxu0 0
        %605 = vmatprep.mubr.bf16.mxu0 0
        %606 = vmatmul.mubr.bf16.gmra.mrb[0].mxu0 %v568
        %v607 = vpop.f32.mrb[0].mxu0
        %v608 = vadd.f32 0.0, %v607
        %v609 = vpop.f32.mrb[0].mxu0
        %v610 = vpop.f32.mrb[0].mxu0
        %v611 = vpop.f32.mrb[0].mxu0
        %612 = vdwg.mxu0
        %v614 = vsel %vm519, %v509, 0
        %v617 = vsel %vm523, %v513, 0
        %619 = vmatprep.subr.bf16.mxu0 0
        %620 = vmatpush1.bf16.msra.mxu0 %v617
        %621 = vmatprep.subr.bf16.mxu0 0
        %622 = vmatpush1.bf16.msra.mxu0 0
        %623 = vmatprep.subr.bf16.mxu0 0
        %624 = vmatpush1.bf16.msra.mxu0 0
        %625 = vmatprep.subr.bf16.mxu0 0
        %626 = vmatpush1.bf16.msra.mxu0 0
        %627 = vmatprep.subr.bf16.mxu0 0
        %628 = vmatpush1.bf16.msra.mxu0 0
        %629 = vmatprep.subr.bf16.mxu0 0
        %630 = vmatpush1.bf16.msra.mxu0 0
        %631 = vmatprep.subr.bf16.mxu0 0
        %632 = vmatpush1.bf16.msra.mxu0 0
        %633 = vmatprep.subr.bf16.mxu0 0
        %634 = vmatpush1.bf16.msra.mxu0 0
        %635 = vmatprep.subr.bf16.mxu0 0
        %636 = vmatpush1.bf16.msra.mxu0 0
        %637 = vmatprep.subr.bf16.mxu0 0
        %638 = vmatpush1.bf16.msra.mxu0 0
        %639 = vmatprep.subr.bf16.mxu0 0
        %640 = vmatpush1.bf16.msra.mxu0 0
        %641 = vmatprep.subr.bf16.mxu0 0
        %642 = vmatpush1.bf16.msra.mxu0 0
        %643 = vmatprep.subr.bf16.mxu0 0
        %644 = vmatpush1.bf16.msra.mxu0 0
        %645 = vmatprep.subr.bf16.mxu0 0
        %646 = vmatpush1.bf16.msra.mxu0 0
        %647 = vmatprep.subr.bf16.mxu0 0
        %648 = vmatpush1.bf16.msra.mxu0 0
        %649 = vmatprep.subr.bf16.mxu0 0
        %650 = vmatpush1.bf16.msra.mxu0 0
        %651 = vmatprep.mubr.bf16.mxu0 0
        %652 = vmatmul.mubr.bf16.gmra.mrb[0].mxu0 %v614
        %v653 = vpop.f32.mrb[0].mxu0
        %v654 = vadd.f32 0.0, %v653
        %v655 = vpop.f32.mrb[0].mxu0
        %v656 = vpop.f32.mrb[0].mxu0
        %v657 = vpop.f32.mrb[0].mxu0
        %658 = vdwg.mxu0
        %v660 = vsel %vm519, %v510, 0
        %v663 = vsel %vm523, %v514, 0
        %665 = vmatprep.subr.bf16.mxu0 0
        %666 = vmatpush1.bf16.msra.mxu0 %v663
        %667 = vmatprep.subr.bf16.mxu0 0
        %668 = vmatpush1.bf16.msra.mxu0 0
        %669 = vmatprep.subr.bf16.mxu0 0
        %670 = vmatpush1.bf16.msra.mxu0 0
        %671 = vmatprep.subr.bf16.mxu0 0
        %672 = vmatpush1.bf16.msra.mxu0 0
        %673 = vmatprep.subr.bf16.mxu0 0
        %674 = vmatpush1.bf16.msra.mxu0 0
        %675 = vmatprep.subr.bf16.mxu0 0
        %676 = vmatpush1.bf16.msra.mxu0 0
        %677 = vmatprep.subr.bf16.mxu0 0
        %678 = vmatpush1.bf16.msra.mxu0 0
        %679 = vmatprep.subr.bf16.mxu0 0
        %680 = vmatpush1.bf16.msra.mxu0 0
        %681 = vmatprep.subr.bf16.mxu0 0
        %682 = vmatpush1.bf16.msra.mxu0 0
        %683 = vmatprep.subr.bf16.mxu0 0
        %684 = vmatpush1.bf16.msra.mxu0 0
        %685 = vmatprep.subr.bf16.mxu0 0
        %686 = vmatpush1.bf16.msra.mxu0 0
        %687 = vmatprep.subr.bf16.mxu0 0
        %688 = vmatpush1.bf16.msra.mxu0 0
        %689 = vmatprep.subr.bf16.mxu0 0
        %690 = vmatpush1.bf16.msra.mxu0 0
        %691 = vmatprep.subr.bf16.mxu0 0
        %692 = vmatpush1.bf16.msra.mxu0 0
        %693 = vmatprep.subr.bf16.mxu0 0
        %694 = vmatpush1.bf16.msra.mxu0 0
        %695 = vmatprep.subr.bf16.mxu0 0
        %696 = vmatpush1.bf16.msra.mxu0 0
        %697 = vmatprep.mubr.bf16.mxu0 0
        %698 = vmatmul.mubr.bf16.gmra.mrb[0].mxu0 %v660
        %v699 = vpop.f32.mrb[0].mxu0
        %v700 = vadd.f32 0.0, %v699
        %v701 = vpop.f32.mrb[0].mxu0
        %v702 = vpop.f32.mrb[0].mxu0
        %v703 = vpop.f32.mrb[0].mxu0
        %704 = vdwg.mxu0
        %v705 = vsel %vm519, %v562, -inf
        %706 = vmax.xlane.f32.xlu0 %v705
        %v707 = vpop.xlane.xlu0 %706
        %v708 = vsel %vm519, %v608, -inf
        %709 = vmax.xlane.f32.xlu0 %v708
        %v710 = vpop.xlane.xlu0 %709
        %v711 = vsel %vm519, %v654, -inf
        %712 = vmax.xlane.f32.xlu0 %v711
        %v713 = vpop.xlane.xlu0 %712
        %v714 = vsel %vm519, %v700, -inf
        %715 = vmax.xlane.f32.xlu0 %v714
        %v716 = vpop.xlane.xlu0 %715
        %v717 = vsub.f32 %v562, %v707
        %v718 = vsub.f32 %v608, %v710
        %v719 = vsub.f32 %v654, %v713
        %v720 = vsub.f32 %v700, %v716
        %v721 = vmul.f32 %v717, 1.442695
        %v722 = vpow.pop %v721
        %v723 = vmul.f32 %v718, 1.442695
        %v724 = vpow.pop %v723
        %v725 = vmul.f32 %v719, 1.442695
        %v726 = vpow.pop %v725
        %v727 = vmul.f32 %v720, 1.442695
        %v728 = vpow.pop %v727
        %v729 = vsel %vm519, %v722, 0.0
        %730 = vadd.xlane.f32.xlu0 %v729
        %v731 = vpop.xlane.xlu0 %730
        %v732 = vsel %vm519, %v724, 0.0
        %733 = vadd.xlane.f32.xlu0 %v732
        %v734 = vpop.xlane.xlu0 %733
        %v735 = vsel %vm519, %v726, 0.0
        %736 = vadd.xlane.f32.xlu0 %v735
        %v737 = vpop.xlane.xlu0 %736
        %v738 = vsel %vm519, %v728, 0.0
        %739 = vadd.xlane.f32.xlu0 %v738
        %v740 = vpop.xlane.xlu0 %739
        %v741 = vpack.c.bf16 %v722, %v722
        %v742 = vpack.c.bf16 %v724, %v724
        %v743 = vpack.c.bf16 %v726, %v726
        %v744 = vpack.c.bf16 %v728, %v728
        %v746 = vsel %vm519, %v741, 0
        %v749 = vsel %vm523, %v515, 0
        %751 = vmatprep.subr.bf16.mxu0 0
        %752 = vmatpush1.bf16.msra.mxu0 %v749
        %753 = vmatprep.subr.bf16.mxu0 0
        %754 = vmatpush1.bf16.msra.mxu0 0
        %755 = vmatprep.subr.bf16.mxu0 0
        %756 = vmatpush1.bf16.msra.mxu0 0
        %757 = vmatprep.subr.bf16.mxu0 0
        %758 = vmatpush1.bf16.msra.mxu0 0
        %759 = vmatprep.subr.bf16.mxu0 0
        %760 = vmatpush1.bf16.msra.mxu0 0
        %761 = vmatprep.subr.bf16.mxu0 0
        %762 = vmatpush1.bf16.msra.mxu0 0
        %763 = vmatprep.subr.bf16.mxu0 0
        %764 = vmatpush1.bf16.msra.mxu0 0
        %765 = vmatprep.subr.bf16.mxu0 0
        %766 = vmatpush1.bf16.msra.mxu0 0
        %767 = vmatprep.subr.bf16.mxu0 0
        %768 = vmatpush1.bf16.msra.mxu0 0
        %769 = vmatprep.subr.bf16.mxu0 0
        %770 = vmatpush1.bf16.msra.mxu0 0
        %771 = vmatprep.subr.bf16.mxu0 0
        %772 = vmatpush1.bf16.msra.mxu0 0
        %773 = vmatprep.subr.bf16.mxu0 0
        %774 = vmatpush1.bf16.msra.mxu0 0
        %775 = vmatprep.subr.bf16.mxu0 0
        %776 = vmatpush1.bf16.msra.mxu0 0
        %777 = vmatprep.subr.bf16.mxu0 0
        %778 = vmatpush1.bf16.msra.mxu0 0
        %779 = vmatprep.subr.bf16.mxu0 0
        %780 = vmatpush1.bf16.msra.mxu0 0
        %781 = vmatprep.subr.bf16.mxu0 0
        %782 = vmatpush1.bf16.msra.mxu0 0
        %783 = vmatprep.mubr.bf16.mxu0 0
        %784 = vmatmul.mubr.bf16.gmra.mrb[0].mxu0 %v746
        %v785 = vpop.f32.mrb[0].mxu0
        %v786 = vadd.f32 0.0, %v785
        %v787 = vpop.f32.mrb[0].mxu0
        %v788 = vpop.f32.mrb[0].mxu0
        %v789 = vpop.f32.mrb[0].mxu0
        %790 = vdwg.mxu0
        %v792 = vsel %vm519, %v742, 0
        %v795 = vsel %vm523, %v516, 0
        %797 = vmatprep.subr.bf16.mxu0 0
        %798 = vmatpush1.bf16.msra.mxu0 %v795
        %799 = vmatprep.subr.bf16.mxu0 0
        %800 = vmatpush1.bf16.msra.mxu0 0
        %801 = vmatprep.subr.bf16.mxu0 0
        %802 = vmatpush1.bf16.msra.mxu0 0
        %803 = vmatprep.subr.bf16.mxu0 0
        %804 = vmatpush1.bf16.msra.mxu0 0
        %805 = vmatprep.subr.bf16.mxu0 0
        %806 = vmatpush1.bf16.msra.mxu0 0
        %807 = vmatprep.subr.bf16.mxu0 0
        %808 = vmatpush1.bf16.msra.mxu0 0
        %809 = vmatprep.subr.bf16.mxu0 0
        %810 = vmatpush1.bf16.msra.mxu0 0
        %811 = vmatprep.subr.bf16.mxu0 0
        %812 = vmatpush1.bf16.msra.mxu0 0
        %813 = vmatprep.subr.bf16.mxu0 0
        %814 = vmatpush1.bf16.msra.mxu0 0
        %815 = vmatprep.subr.bf16.mxu0 0
        %816 = vmatpush1.bf16.msra.mxu0 0
        %817 = vmatprep.subr.bf16.mxu0 0
        %818 = vmatpush1.bf16.msra.mxu0 0
        %819 = vmatprep.subr.bf16.mxu0 0
        %820 = vmatpush1.bf16.msra.mxu0 0
        %821 = vmatprep.subr.bf16.mxu0 0
        %822 = vmatpush1.bf16.msra.mxu0 0
        %823 = vmatprep.subr.bf16.mxu0 0
        %824 = vmatpush1.bf16.msra.mxu0 0
        %825 = vmatprep.subr.bf16.mxu0 0
        %826 = vmatpush1.bf16.msra.mxu0 0
        %827 = vmatprep.subr.bf16.mxu0 0
        %828 = vmatpush1.bf16.msra.mxu0 0
        %829 = vmatprep.mubr.bf16.mxu0 0
        %830 = vmatmul.mubr.bf16.gmra.mrb[0].mxu0 %v792
        %v831 = vpop.f32.mrb[0].mxu0
        %v832 = vadd.f32 0.0, %v831
        %v833 = vpop.f32.mrb[0].mxu0
        %v834 = vpop.f32.mrb[0].mxu0
        %v835 = vpop.f32.mrb[0].mxu0
        %836 = vdwg.mxu0
        %v838 = vsel %vm519, %v743, 0
        %v841 = vsel %vm523, %v517, 0
        %843 = vmatprep.subr.bf16.mxu0 0
        %844 = vmatpush1.bf16.msra.mxu0 %v841
        %845 = vmatprep.subr.bf16.mxu0 0
        %846 = vmatpush1.bf16.msra.mxu0 0
        %847 = vmatprep.subr.bf16.mxu0 0
        %848 = vmatpush1.bf16.msra.mxu0 0
        %849 = vmatprep.subr.bf16.mxu0 0
        %850 = vmatpush1.bf16.msra.mxu0 0
        %851 = vmatprep.subr.bf16.mxu0 0
        %852 = vmatpush1.bf16.msra.mxu0 0
        %853 = vmatprep.subr.bf16.mxu0 0
        %854 = vmatpush1.bf16.msra.mxu0 0
        %855 = vmatprep.subr.bf16.mxu0 0
        %856 = vmatpush1.bf16.msra.mxu0 0
        %857 = vmatprep.subr.bf16.mxu0 0
        %858 = vmatpush1.bf16.msra.mxu0 0
        %859 = vmatprep.subr.bf16.mxu0 0
        %860 = vmatpush1.bf16.msra.mxu0 0
        %861 = vmatprep.subr.bf16.mxu0 0
        %862 = vmatpush1.bf16.msra.mxu0 0
        %863 = vmatprep.subr.bf16.mxu0 0
        %864 = vmatpush1.bf16.msra.mxu0 0
        %865 = vmatprep.subr.bf16.mxu0 0
        %866 = vmatpush1.bf16.msra.mxu0 0
        %867 = vmatprep.subr.bf16.mxu0 0
        %868 = vmatpush1.bf16.msra.mxu0 0
        %869 = vmatprep.subr.bf16.mxu0 0
        %870 = vmatpush1.bf16.msra.mxu0 0
        %871 = vmatprep.subr.bf16.mxu0 0
        %872 = vmatpush1.bf16.msra.mxu0 0
        %873 = vmatprep.subr.bf16.mxu0 0
        %874 = vmatpush1.bf16.msra.mxu0 0
        %875 = vmatprep.mubr.bf16.mxu0 0
        %876 = vmatmul.mubr.bf16.gmra.mrb[0].mxu0 %v838
        %v877 = vpop.f32.mrb[0].mxu0
        %v878 = vadd.f32 0.0, %v877
        %v879 = vpop.f32.mrb[0].mxu0
        %v880 = vpop.f32.mrb[0].mxu0
        %v881 = vpop.f32.mrb[0].mxu0
        %882 = vdwg.mxu0
        %v884 = vsel %vm519, %v744, 0
        %v887 = vsel %vm523, %v518, 0
        %889 = vmatprep.subr.bf16.mxu0 0
        %890 = vmatpush1.bf16.msra.mxu0 %v887
        %891 = vmatprep.subr.bf16.mxu0 0
        %892 = vmatpush1.bf16.msra.mxu0 0
        %893 = vmatprep.subr.bf16.mxu0 0
        %894 = vmatpush1.bf16.msra.mxu0 0
        %895 = vmatprep.subr.bf16.mxu0 0
        %896 = vmatpush1.bf16.msra.mxu0 0
        %897 = vmatprep.subr.bf16.mxu0 0
        %898 = vmatpush1.bf16.msra.mxu0 0
        %899 = vmatprep.subr.bf16.mxu0 0
        %900 = vmatpush1.bf16.msra.mxu0 0
        %901 = vmatprep.subr.bf16.mxu0 0
        %902 = vmatpush1.bf16.msra.mxu0 0
        %903 = vmatprep.subr.bf16.mxu0 0
        %904 = vmatpush1.bf16.msra.mxu0 0
        %905 = vmatprep.subr.bf16.mxu0 0
        %906 = vmatpush1.bf16.msra.mxu0 0
        %907 = vmatprep.subr.bf16.mxu0 0
        %908 = vmatpush1.bf16.msra.mxu0 0
        %909 = vmatprep.subr.bf16.mxu0 0
        %910 = vmatpush1.bf16.msra.mxu0 0
        %911 = vmatprep.subr.bf16.mxu0 0
        %912 = vmatpush1.bf16.msra.mxu0 0
        %913 = vmatprep.subr.bf16.mxu0 0
        %914 = vmatpush1.bf16.msra.mxu0 0
        %915 = vmatprep.subr.bf16.mxu0 0
        %916 = vmatpush1.bf16.msra.mxu0 0
        %917 = vmatprep.subr.bf16.mxu0 0
        %918 = vmatpush1.bf16.msra.mxu0 0
        %919 = vmatprep.subr.bf16.mxu0 0
        %920 = vmatpush1.bf16.msra.mxu0 0
        %921 = vmatprep.mubr.bf16.mxu0 0
        %922 = vmatmul.mubr.bf16.gmra.mrb[0].mxu0 %v884
        %v923 = vpop.f32.mrb[0].mxu0
        %v924 = vadd.f32 0.0, %v923
        %v925 = vpop.f32.mrb[0].mxu0
        %v926 = vpop.f32.mrb[0].mxu0
        %v927 = vpop.f32.mrb[0].mxu0
        %928 = vdwg.mxu0
        %v929 = vrcp.pop %v731
        %v930 = vrcp.pop %v734
        %v931 = vrcp.pop %v737
        %v932 = vrcp.pop %v740
        %v933 = vmul.f32 %v786, %v929
        %v934 = vmul.f32 %v832, %v930
        %v935 = vmul.f32 %v878, %v931
        %v936 = vmul.f32 %v924, %v932
        %v937 = vcombine.low %v933, %v935
        %v938 = vcombine.high %v933, %v935
        %v940 = vunpack.c.l.s4 1983009808
        %v941 = vunpack.c.0.s8 %v940
        %v942 = vlaneseq
        %v943 = vshrl.u32 %v942, 7
        %v944 = vsub.s32 %v941, %v943
        %v945 = vrot.slane %v937, %v944
        %v947 = vunpack.c.l.s4 1983009808
        %v948 = vunpack.c.0.s8 %v947
        %v949 = vlaneseq
        %v950 = vshrl.u32 %v949, 7
        %v951 = vsub.s32 %v948, %v950
        %v952 = vrot.slane %v938, %v951
        %v953 = vcombine.low %v934, %v936
        %v954 = vcombine.high %v934, %v936
        %v956 = vunpack.c.l.s4 1983009808
        %v957 = vunpack.c.0.s8 %v956
        %v958 = vlaneseq
        %v959 = vshrl.u32 %v958, 7
        %v960 = vsub.s32 %v957, %v959
        %v961 = vrot.slane %v953, %v960
        %v963 = vunpack.c.l.s4 1983009808
        %v964 = vunpack.c.0.s8 %v963
        %v965 = vlaneseq
        %v966 = vshrl.u32 %v965, 7
        %v967 = vsub.s32 %v964, %v966
        %v968 = vrot.slane %v954, %v967
        %v969 = vcombine.low %v945, %v961
        %v970 = vcombine.high %v945, %v961
        %v972 = vunpack.c.l.s4 1934713408
        %v973 = vunpack.c.0.s8 %v972
        %v974 = vlaneseq
        %v975 = vshrl.u32 %v974, 7
        %v976 = vsub.s32 %v973, %v975
        %v977 = vrot.slane %v969, %v976
        %v979 = vunpack.c.l.s4 1934713408
        %v980 = vunpack.c.0.s8 %v979
        %v981 = vlaneseq
        %v982 = vshrl.u32 %v981, 7
        %v983 = vsub.s32 %v980, %v982
        %v984 = vrot.slane %v970, %v983
        %v985 = vcombine.low %v952, %v968
        %v986 = vcombine.high %v952, %v968
        %v988 = vunpack.c.l.s4 1934713408
        %v989 = vunpack.c.0.s8 %v988
        %v990 = vlaneseq
        %v991 = vshrl.u32 %v990, 7
        %v992 = vsub.s32 %v989, %v991
        %v993 = vrot.slane %v985, %v992
        %v995 = vunpack.c.l.s4 1934713408
        %v996 = vunpack.c.0.s8 %v995
        %v997 = vlaneseq
        %v998 = vshrl.u32 %v997, 7
        %v999 = vsub.s32 %v996, %v998
        %v1000 = vrot.slane %v986, %v999
        %v1001 = vcombine.high %v977, 0.0
        %v1002 = vcombine.high %v984, 0.0
        %v1003 = vcombine.high %v993, 0.0
        %v1004 = vcombine.high %v1000, 0.0
        %v1005 = vcombine.low %v977, %v984
        %v1007 = vunpack.c.l.s4 1983009808
        %v1008 = vunpack.c.0.s8 %v1007
        %v1009 = vlaneseq
        %v1010 = vshrl.u32 %v1009, 7
        %v1011 = vsub.s32 %v1008, %v1010
        %v1012 = vrot.slane %v1005, %v1011
        %v1013 = vcombine.low %v1001, %v1002
        %v1015 = vunpack.c.l.s4 1983009808
        %v1016 = vunpack.c.0.s8 %v1015
        %v1017 = vlaneseq
        %v1018 = vshrl.u32 %v1017, 7
        %v1019 = vsub.s32 %v1016, %v1018
        %v1020 = vrot.slane %v1013, %v1019
        %v1021 = vcombine.low %v993, %v1000
        %v1023 = vunpack.c.l.s4 1983009808
        %v1024 = vunpack.c.0.s8 %v1023
        %v1025 = vlaneseq
        %v1026 = vshrl.u32 %v1025, 7
        %v1027 = vsub.s32 %v1024, %v1026
        %v1028 = vrot.slane %v1021, %v1027
        %v1029 = vcombine.low %v1003, %v1004
        %v1031 = vunpack.c.l.s4 1983009808
        %v1032 = vunpack.c.0.s8 %v1031
        %v1033 = vlaneseq
        %v1034 = vshrl.u32 %v1033, 7
        %v1035 = vsub.s32 %v1032, %v1034
        %v1036 = vrot.slane %v1029, %v1035
        %v1037 = vcombine.low %v1012, %v1020
        %v1038 = vcombine.high %v1012, %v1020
        %v1040 = vunpack.c.l.s4 1934713408
        %v1041 = vunpack.c.0.s8 %v1040
        %v1042 = vlaneseq
        %v1043 = vshrl.u32 %v1042, 7
        %v1044 = vsub.s32 %v1041, %v1043
        %v1045 = vrot.slane %v1037, %v1044
        %v1047 = vunpack.c.l.s4 1934713408
        %v1048 = vunpack.c.0.s8 %v1047
        %v1049 = vlaneseq
        %v1050 = vshrl.u32 %v1049, 7
        %v1051 = vsub.s32 %v1048, %v1050
        %v1052 = vrot.slane %v1038, %v1051
        %v1053 = vcombine.low %v1028, %v1036
        %v1054 = vcombine.high %v1028, %v1036
        %v1056 = vunpack.c.l.s4 1934713408
        %v1057 = vunpack.c.0.s8 %v1056
        %v1058 = vlaneseq
        %v1059 = vshrl.u32 %v1058, 7
        %v1060 = vsub.s32 %v1057, %v1059
        %v1061 = vrot.slane %v1053, %v1060
        %v1063 = vunpack.c.l.s4 1934713408
        %v1064 = vunpack.c.0.s8 %v1063
        %v1065 = vlaneseq
        %v1066 = vshrl.u32 %v1065, 7
        %v1067 = vsub.s32 %v1064, %v1066
        %v1068 = vrot.slane %v1054, %v1067
        %v1069 = vcombine.low %v1045, %v1061
        %v1070 = vcombine.high %v1045, %v1061
        %v1071 = vcombine.low %v1052, %v1068
        %v1072 = vcombine.high %v1052, %v1068
        %1074 = vrot.lane.b32.xlu0 %v1070, 8
        %v1075 = vpop.permute.xlu0 %1074
        %1078 = vrot.lane.b32.xlu0 %v1071, 16
        %v1079 = vpop.permute.xlu0 %1078
        %1082 = vrot.lane.b32.xlu0 %v1072, 24
        %v1083 = vpop.permute.xlu0 %1082
        %v1085 = vsel %vm519, %v1069, %v1075
        %vm1086 = vcmask 130048
        %v1087 = vsel %vm1086, %v1085, %v1079
        %vm1088 = vcmask 195584
        %v1089 = vsel %vm1088, %v1087, %v1083
        %v1090 = vpack.c.bf16 %v1089, %v1089
        %v1091 = vld [vmem:[%s4] sm:$0xf]
        %v1092 = vld [vmem:[%s4 + $0x4] sm:$0xf]
        %v1093 = vld [vmem:[%s4 + $0x8] sm:$0xf]
        %v1094 = vld [vmem:[%s4 + $0xc] sm:$0xf]
        %v1095 = vld [vmem:[%s5] sm:$0x1]
        %v1097 = vlaneseq
        %v1098 = vshrl.u32 %v1097, 7
        %v1099 = vsub.s32 0, %v1098
        %v1100 = vrot.slane %v1095, %v1099
        %v1106 = vunpack.c.l.b16 %v1091
        %v1107 = vunpack.c.l.b16 %v1092
        %v1108 = vunpack.c.l.b16 %v1093
        %v1109 = vunpack.c.l.b16 %v1094
        %v1110 = vpack.c.b16 %v1107, %v1106
        %v1111 = vpack.c.b16 %v1109, %v1108
        %vm1114 = vcmask 261120
        %v1116 = vsel %vm1114, %v1090, 0
        %1118 = vmatprep.subr.bf16.mxu0 0
        %1119 = vmatpush1.bf16.msra.mxu0 %v1110
        %1120 = vmatprep.subr.bf16.mxu0 0
        %1121 = vmatpush1.bf16.msra.mxu0 %v1111
        %1122 = vmatprep.subr.bf16.mxu0 0
        %1123 = vmatpush1.bf16.msra.mxu0 0
        %1124 = vmatprep.subr.bf16.mxu0 0
        %1125 = vmatpush1.bf16.msra.mxu0 0
        %1126 = vmatprep.subr.bf16.mxu0 0
        %1127 = vmatpush1.bf16.msra.mxu0 0
        %1128 = vmatprep.subr.bf16.mxu0 0
        %1129 = vmatpush1.bf16.msra.mxu0 0
        %1130 = vmatprep.subr.bf16.mxu0 0
        %1131 = vmatpush1.bf16.msra.mxu0 0
        %1132 = vmatprep.subr.bf16.mxu0 0
        %1133 = vmatpush1.bf16.msra.mxu0 0
        %1134 = vmatprep.subr.bf16.mxu0 0
        %1135 = vmatpush1.bf16.msra.mxu0 0
        %1136 = vmatprep.subr.bf16.mxu0 0
        %1137 = vmatpush1.bf16.msra.mxu0 0
        %1138 = vmatprep.subr.bf16.mxu0 0
        %1139 = vmatpush1.bf16.msra.mxu0 0
        %1140 = vmatprep.subr.bf16.mxu0 0
        %1141 = vmatpush1.bf16.msra.mxu0 0
        %1142 = vmatprep.subr.bf16.mxu0 0
        %1143 = vmatpush1.bf16.msra.mxu0 0
        %1144 = vmatprep.subr.bf16.mxu0 0
        %1145 = vmatpush1.bf16.msra.mxu0 0
        %1146 = vmatprep.subr.bf16.mxu0 0
        %1147 = vmatpush1.bf16.msra.mxu0 0
        %1148 = vmatprep.subr.bf16.mxu0 0
        %1149 = vmatpush1.bf16.msra.mxu0 0
        %1150 = vmatprep.mubr.bf16.mxu0 0
        %1151 = vmatmul.mubr.bf16.gmra.mrb[0].mxu0 %v1116
        %v1152 = vpop.f32.mrb[0].mxu0
        %v1153 = vadd.f32 %v1100, %v1152
        %v1154 = vpop.f32.mrb[0].mxu0
        %v1155 = vpop.f32.mrb[0].mxu0
        %v1156 = vpop.f32.mrb[0].mxu0
        %1157 = vdwg.mxu0
        %v1158 = vadd.f32 %v506, %v1153
        %v1159 = vld [vmem:[%s6] sm:$0x1]
        %v1160 = vld [vmem:[%s7] sm:$0x1]
        %v1161 = vsel %vm1114, %v1158, 0.0
        %1162 = vadd.xlane.f32.xlu0 %v1161
        %v1163 = vpop.xlane.xlu0 %1162
        %v1164 = vrcp.pop 32.0
        %v1165 = vmul.f32 %v1163, %v1164
        %v1166 = vsub.f32 %v1158, %v1165
        %v1167 = vmul.f32 %v1166, %v1166
        %v1168 = vsel %vm1114, %v1167, 0.0
        %1169 = vadd.xlane.f32.xlu0 %v1168
        %v1170 = vpop.xlane.xlu0 %1169
        %v1171 = vmul.f32 %v1170, %v1164
        %v1172 = vadd.f32 %v1171, 1e-05
        %v1173 = vrsqrt.pop %v1172
        %v1174 = vmul.f32 %v1166, %v1173
        %v1176 = vlaneseq
        %v1177 = vshrl.u32 %v1176, 7
        %v1178 = vsub.s32 0, %v1177
        %v1179 = vrot.slane %v1159, %v1178
        %v1181 = vmul.f32 %v1174, %v1179
        %v1183 = vlaneseq
        %v1184 = vshrl.u32 %v1183, 7
        %v1185 = vsub.s32 0, %v1184
        %v1186 = vrot.slane %v1160, %v1185
        %v1188 = vadd.f32 %v1181, %v1186
        %v1189 = vpack.c.bf16 %v1188, %v1188
        %v1190 = vld [vmem:[%s8] sm:$0xf]
        %v1191 = vld [vmem:[%s8 + $0x4] sm:$0xf]
        %v1192 = vld [vmem:[%s8 + $0x8] sm:$0xf]
        %v1193 = vld [vmem:[%s8 + $0xc] sm:$0xf]
        %v1194 = vld [vmem:[%s9] sm:$0x1]
        %v1196 = vlaneseq
        %v1197 = vshrl.u32 %v1196, 7
        %v1198 = vsub.s32 0, %v1197
        %v1199 = vrot.slane %v1194, %v1198
        %v1205 = vunpack.c.l.b16 %v1190
        %v1206 = vunpack.c.l.b16 %v1191
        %v1207 = vunpack.c.l.b16 %v1192
        %v1208 = vunpack.c.l.b16 %v1193
        %v1209 = vpack.c.b16 %v1206, %v1205
        %v1210 = vpack.c.b16 %v1208, %v1207
        %v1214 = vsel %vm1114, %v1189, 0
        %1216 = vmatprep.subr.bf16.mxu0 0
        %1217 = vmatpush1.bf16.msra.mxu0 %v1209
        %1218 = vmatprep.subr.bf16.mxu0 0
        %1219 = vmatpush1.bf16.msra.mxu0 %v1210
        %1220 = vmatprep.subr.bf16.mxu0 0
        %1221 = vmatpush1.bf16.msra.mxu0 0
        %1222 = vmatprep.subr.bf16.mxu0 0
        %1223 = vmatpush1.bf16.msra.mxu0 0
        %1224 = vmatprep.subr.bf16.mxu0 0
        %1225 = vmatpush1.bf16.msra.mxu0 0
        %1226 = vmatprep.subr.bf16.mxu0 0
        %1227 = vmatpush1.bf16.msra.mxu0 0
        %1228 = vmatprep.subr.bf16.mxu0 0
        %1229 = vmatpush1.bf16.msra.mxu0 0
        %1230 = vmatprep.subr.bf16.mxu0 0
        %1231 = vmatpush1.bf16.msra.mxu0 0
        %1232 = vmatprep.subr.bf16.mxu0 0
        %1233 = vmatpush1.bf16.msra.mxu0 0
        %1234 = vmatprep.subr.bf16.mxu0 0
        %1235 = vmatpush1.bf16.msra.mxu0 0
        %1236 = vmatprep.subr.bf16.mxu0 0
        %1237 = vmatpush1.bf16.msra.mxu0 0
        %1238 = vmatprep.subr.bf16.mxu0 0
        %1239 = vmatpush1.bf16.msra.mxu0 0
        %1240 = vmatprep.subr.bf16.mxu0 0
        %1241 = vmatpush1.bf16.msra.mxu0 0
        %1242 = vmatprep.subr.bf16.mxu0 0
        %1243 = vmatpush1.bf16.msra.mxu0 0
        %1244 = vmatprep.subr.bf16.mxu0 0
        %1245 = vmatpush1.bf16.msra.mxu0 0
        %1246 = vmatprep.subr.bf16.mxu0 0
        %1247 = vmatpush1.bf16.msra.mxu0 0
        %1248 = vmatprep.mubr.bf16.mxu0 0
        %1249 = vmatmul.mubr.bf16.gmra.mrb[0].mxu0 %v1214
        %v1250 = vpop.f32.mrb[0].mxu0
        %v1251 = vadd.f32 %v1199, %v1250
        %v1252 = vpop.f32.mrb[0].mxu0
        %v1253 = vpop.f32.mrb[0].mxu0
        %v1254 = vpop.f32.mrb[0].mxu0
        %1255 = vdwg.mxu0
        %v1256 = vmul.f32 %v1251, 0.5
        %v1257 = vmul.f32 %v1251, 0.70710677
        %v1258 = verf.f32.pop %v1257
        %v1259 = vadd.f32 %v1258, 1.0
        %v1260 = vmul.f32 %v1256, %v1259
        %v1261 = vpack.c.bf16 %v1260, %v1260
        %v1262 = vld [vmem:[%s10] sm:$0xf]
        %v1263 = vld [vmem:[%s10 + $0x4] sm:$0xf]
        %v1264 = vld [vmem:[%s10 + $0x8] sm:$0xf]
        %v1265 = vld [vmem:[%s10 + $0xc] sm:$0xf]
        %v1266 = vld [vmem:[%s10 + $0x10] sm:$0xf]
        %v1267 = vld [vmem:[%s10 + $0x14] sm:$0xf]
        %v1268 = vld [vmem:[%s10 + $0x18] sm:$0xf]
        %v1269 = vld [vmem:[%s10 + $0x1c] sm:$0xf]
        %v1270 = vld [vmem:[%s10 + $0x20] sm:$0xf]
        %v1271 = vld [vmem:[%s10 + $0x24] sm:$0xf]
        %v1272 = vld [vmem:[%s10 + $0x28] sm:$0xf]
        %v1273 = vld [vmem:[%s10 + $0x2c] sm:$0xf]
        %v1274 = vld [vmem:[%s10 + $0x30] sm:$0xf]
        %v1275 = vld [vmem:[%s10 + $0x34] sm:$0xf]
        %v1276 = vld [vmem:[%s10 + $0x38] sm:$0xf]
        %v1277 = vld [vmem:[%s10 + $0x3c] sm:$0xf]
        %v1278 = vld [vmem:[%s11] sm:$0x1]
        %v1280 = vlaneseq
        %v1281 = vshrl.u32 %v1280, 7
        %v1282 = vsub.s32 0, %v1281
        %v1283 = vrot.slane %v1278, %v1282
        %v1301 = vunpack.c.l.b16 %v1262
        %v1302 = vunpack.c.l.b16 %v1263
        %v1303 = vunpack.c.l.b16 %v1264
        %v1304 = vunpack.c.l.b16 %v1265
        %v1305 = vunpack.c.l.b16 %v1266
        %v1306 = vunpack.c.l.b16 %v1267
        %v1307 = vunpack.c.l.b16 %v1268
        %v1308 = vunpack.c.l.b16 %v1269
        %v1309 = vunpack.c.l.b16 %v1270
        %v1310 = vunpack.c.l.b16 %v1271
        %v1311 = vunpack.c.l.b16 %v1272
        %v1312 = vunpack.c.l.b16 %v1273
        %v1313 = vunpack.c.l.b16 %v1274
        %v1314 = vunpack.c.l.b16 %v1275
        %v1315 = vunpack.c.l.b16 %v1276
        %v1316 = vunpack.c.l.b16 %v1277
        %v1317 = vpack.c.b16 %v1302, %v1301
        %v1318 = vpack.c.b16 %v1304, %v1303
        %v1319 = vpack.c.b16 %v1306, %v1305
        %v1320 = vpack.c.b16 %v1308, %v1307
        %v1321 = vpack.c.b16 %v1310, %v1309
        %v1322 = vpack.c.b16 %v1312, %v1311
        %v1323 = vpack.c.b16 %v1314, %v1313
        %v1324 = vpack.c.b16 %v1316, %v1315
        %1333 = vmatprep.subr.bf16.mxu0 0
        %1334 = vmatpush1.bf16.msra.mxu0 %v1317
        %1335 = vmatprep.subr.bf16.mxu0 0
        %1336 = vmatpush1.bf16.msra.mxu0 %v1318
        %1337 = vmatprep.subr.bf16.mxu0 0
        %1338 = vmatpush1.bf16.msra.mxu0 %v1319
        %1339 = vmatprep.subr.bf16.mxu0 0
        %1340 = vmatpush1.bf16.msra.mxu0 %v1320
        %1341 = vmatprep.subr.bf16.mxu0 0
        %1342 = vmatpush1.bf16.msra.mxu0 %v1321
        %1343 = vmatprep.subr.bf16.mxu0 0
        %1344 = vmatpush1.bf16.msra.mxu0 %v1322
        %1345 = vmatprep.subr.bf16.mxu0 0
        %1346 = vmatpush1.bf16.msra.mxu0 %v1323
        %1347 = vmatprep.subr.bf16.mxu0 0
        %1348 = vmatpush1.bf16.msra.mxu0 %v1324
        %1349 = vmatprep.subr.bf16.mxu0 0
        %1350 = vmatpush1.bf16.msra.mxu0 0
        %1351 = vmatprep.subr.bf16.mxu0 0
        %1352 = vmatpush1.bf16.msra.mxu0 0
        %1353 = vmatprep.subr.bf16.mxu0 0
        %1354 = vmatpush1.bf16.msra.mxu0 0
        %1355 = vmatprep.subr.bf16.mxu0 0
        %1356 = vmatpush1.bf16.msra.mxu0 0
        %1357 = vmatprep.subr.bf16.mxu0 0
        %1358 = vmatpush1.bf16.msra.mxu0 0
        %1359 = vmatprep.subr.bf16.mxu0 0
        %1360 = vmatpush1.bf16.msra.mxu0 0
        %1361 = vmatprep.subr.bf16.mxu0 0
        %1362 = vmatpush1.bf16.msra.mxu0 0
        %1363 = vmatprep.subr.bf16.mxu0 0
        %1364 = vmatpush1.bf16.msra.mxu0 0
        %1365 = vmatprep.mubr.bf16.mxu0 0
        %1366 = vmatmul.mubr.bf16.gmra.mrb[0].mxu0 %v1261
        %v1367 = vpop.f32.mrb[0].mxu0
        %v1368 = vadd.f32 %v1283, %v1367
        %v1369 = vpop.f32.mrb[0].mxu0
        %v1370 = vpop.f32.mrb[0].mxu0
        %v1371 = vpop.f32.mrb[0].mxu0
        %1372 = vdwg.mxu0
        %v1373 = vadd.f32 %v1158, %v1368
        %1374 = vst.msk [vmem:[%s479] sm:$0xff] %vm1114, %v1373
        %s1375 = sand.u32 %s324, 1
        %s1376 = scalar_lea.sflag [#allocation3], %s1375
        %s1377 = sand.u32 %s324, 1
        %s1378 = smul.addr %s1377, 8
        %s1379 = scalar_lea.vmem [#allocation2], %s1378
        // Predicated region
        $region69: #{transformer_forward.7} parent=67 // pred_check
          %p1380 = pneg %p334
        $region70: #{transformer_forward.7} parent=67 // pred_check_branch
          %1382 = sbr.rel (%p1380) target = $region72
        $region71: #{transformer_forward.7} parent=67 // pred_region
          %s1384 = ssub.s32 128, 128
          %1385 = vsyncadd %s1376, %s1384
          %s1386 = sadd.s32 %s31, %s30
          %s1387 = smul.addr %s1386, 128
          %s1388 = scalar_lea.hbm %s12, %s1387
          %s1390 = sshll.u32 %s1379, 4
          %s1391 = int_to_ptr.vmem [resolvable:$true] %s1390
          %1393 = dma.vmem_to_hbm [thread:$0]  %s1391, 128, %s1388, %s1376
        $region72: #{transformer_forward.7} parent=67 // pred_fallthru
          _
      $region68: #{transformer_forward.7} parent=5 // pred_fallthru
        _
      %p1394 = scmp.le.s32.totalorder 2, %s21
      // Predicated region
      $region73: #{transformer_forward.7} parent=5 // pred_check
        %p1395 = pneg %p1394
      $region74: #{transformer_forward.7} parent=5 // pred_check_branch
        %1397 = sbr.rel (%p1395) target = $region76
      $region75: #{transformer_forward.7} parent=5 // pred_region
        %s1398 = ssub.s32 %s21, 2
        // Predicated region
        $region77: #{transformer_forward.7} parent=75 // pred_check
          %p1399 = pneg %p340
        $region78: #{transformer_forward.7} parent=75 // pred_check_branch
          %1401 = sbr.rel (%p1399) target = $region80
        $region79: #{transformer_forward.7} parent=75 // pred_region
          %s1402 = sand.u32 %s325, 1
          %s1403 = scalar_lea.sflag [#allocation3], %s1402
          %s1404 = sand.u32 %s325, 1
          %s1405 = smul.addr %s1404, 8
          %s1406 = scalar_lea.vmem [#allocation2], %s1405
          %1407 = dma.done %s1403, 128
        $region80: #{transformer_forward.7} parent=75 // pred_fallthru
          _
      $region76: #{transformer_forward.7} parent=5 // pred_fallthru
        _
    $region6: #{transformer_forward.7} parent=1 // loop_footer
      %s25 = sadd.s32 1, %s21
    $region7: #{transformer_forward.7} parent=1 // loop_footer_branch
      %20 = sbr.rel target = $region3
    $region8: #{transformer_forward.7} parent=1 // loop_exit
      _
    %1408 = vsyncpa [#allocation3], 1
    %s1409 = scalar_lea.sflag [#allocation3], 1
    %1410 = vsyncpa %s1409, 1

</llo_original>
